<compile_context>
chip_gen: v7x
topology: tpu7x:2x2x1
jax: 0.10.0
libtpu: 0.0.40
codegen_flags: <defaults>
</compile_context>

<pallas_src>
import functools

import jax
import jax.numpy as jnp
from jax import lax
from jax.experimental import pallas as pl
from jax.experimental.pallas import tpu as pltpu

LANE = 128


def _full_spec(shape):
    """Whole-array BlockSpec (no grid: everything fits comfortably in VMEM)."""
    return pl.BlockSpec(shape, lambda: (0,) * len(shape))


# ---------------------------------------------------------------------------
# Kernel 1: conv1 (im2col matmul) + bias + ReLU + fused 2x2 max-pool
# ---------------------------------------------------------------------------
def conv1_pool_kernel(p1_ref, w1_ref, b1_ref, o_ref):
    # p1_ref: (4*M, 128) bf16 -- 4 pool positions stacked on rows; M = B*14*14;
    #          cols = (kh, kw, cin) im2col features, zero-padded 75 -> 128.
    # w1_ref: (128, 128) bf16 -- (kh,kw,cin) x cout (6 valid output columns).
    # b1_ref: (1, 128) f32
    # o_ref : (M, 128) bf16   -- pooled conv1 activations, rows ordered (b, py, px).
    m = o_ref.shape[0]
    w = w1_ref[...]
    b = b1_ref[...]                      # bias loaded/broadcast once (hoisted)
    acc = None
    for g in range(4):                   # static unroll over the 2x2 pool positions
        y = jnp.dot(p1_ref[g * m:(g + 1) * m, :], w,
                    preferred_element_type=jnp.float32)
        y = jnp.maximum(y + b, 0.0)      # conv bias + ReLU
        acc = y if acc is None else jnp.maximum(acc, y)   # 2x2 max-pool
    o_ref[...] = acc.astype(o_ref.dtype)


# ---------------------------------------------------------------------------
# Kernel 2: conv2 + ReLU + pool + flatten + fc1 + fc2 + fc3 + log-softmax
# ---------------------------------------------------------------------------
def conv2_fc_kernel(p2_ref, w2_ref, b2_ref, w1r_ref, b1f_ref, w2f_ref, b2f_ref,
                    w3f_ref, b3f_ref, o_ref, pool_sc):
    # p2_ref : (4*GM, 256) bf16 -- conv2 im2col patches, 4 pool positions stacked on
    #          rows; each group has GM rows (B*25 valid, ordered (qy, qx, b)).
    # w2_ref : (256, 128) bf16 ; b2_ref: (1,128) f32
    # w1r_ref: (25*128, 128) bf16 -- fc1 weight, rows follow the in-kernel flatten
    #          order (pixel-block major, channel-lane minor); 16/120 valid.
    # w2f/w3f: (128,128) bf16 ; b*f: (1,128) f32 (b3f pads with -1e30 for softmax).
    # o_ref  : (B, 128) f32 log-probabilities (first num_classes lanes valid).
    # pool_sc: (GM, 128) f32 VMEM scratch for the pooled conv2 activations.
    batch = o_ref.shape[0]
    gm = pool_sc.shape[0]
    n_pix = w1r_ref.shape[0] // LANE     # 25 pooled conv2 pixels (5x5)

    # conv2 as one matmul over all pool positions, then bias + ReLU + max-pool.
    z = jnp.dot(p2_ref[...], w2_ref[...], preferred_element_type=jnp.float32)
    z = jnp.maximum(z + b2_ref[...], 0.0)
    pooled = jnp.maximum(jnp.maximum(z[0:gm], z[gm:2 * gm]),
                         jnp.maximum(z[2 * gm:3 * gm], z[3 * gm:4 * gm]))
    pool_sc[...] = pooled                                   # (GM, 128)

    # Flatten (PyTorch x.view(-1, 16*5*5)): lay the B-row block of every pooled
    # pixel out along lanes; the (co, qy, qx) permutation is folded into w1r.
    pieces = [pool_sc[batch * p:batch * (p + 1), :] for p in range(n_pix)]
    flat = jnp.concatenate(pieces, axis=1).astype(jnp.bfloat16)     # (B, 25*128)

    # fc1 + ReLU
    h1 = jnp.dot(flat, w1r_ref[...], preferred_element_type=jnp.float32)
    h1 = jnp.maximum(h1 + b1f_ref[...], 0.0)
    # TODO(synk): training-mode dropout (random masking) intentionally omitted (eval semantics).

    # fc2 + ReLU
    h2 = jnp.dot(h1.astype(jnp.bfloat16), w2f_ref[...],
                 preferred_element_type=jnp.float32)
    h2 = jnp.maximum(h2 + b2f_ref[...], 0.0)

    # fc3 + LogSoftmax (padded logit lanes carry a -1e30 bias -> exp() == 0).
    y = jnp.dot(h2.astype(jnp.bfloat16), w3f_ref[...],
                preferred_element_type=jnp.float32) + b3f_ref[...]
    mx = jnp.max(y, axis=-1, keepdims=True)
    s = y - mx
    lse = jnp.log(jnp.sum(jnp.exp(s), axis=-1, keepdims=True))
    o_ref[...] = s - lse


# ---------------------------------------------------------------------------
# JAX wrapper: im2col / pool-group stacking and the two pallas_calls
# ---------------------------------------------------------------------------
def _im2col_valid(x_nhwc, k):
    """'valid' k x k im2col. Returns (B, OH, OW, k*k*C), cols ordered (kh, kw, cin)."""
    B, H, W, C = x_nhwc.shape
    oh, ow = H - k + 1, W - k + 1
    cols = [x_nhwc[:, kh:kh + oh, kw:kw + ow, :]
            for kh in range(k) for kw in range(k)]
    return jnp.concatenate(cols, axis=-1)


def _stack_pool_groups(patches, batch_major):
    """Group conv-output rows by their 2x2 max-pool window position.

    (B, OH, OW, K) -> (4, B*PH*PW, K) rows (b, py, px)  if batch_major
                   -> (4, PH*PW*B, K) rows (py, px, b)  otherwise
    """
    B, OH, OW, K = patches.shape
    ph, pw = OH // 2, OW // 2
    t = patches.reshape(B, ph, 2, pw, 2, K)
    t = t.transpose(2, 4, 0, 1, 3, 5) if batch_major else t.transpose(2, 4, 1, 3, 0, 5)
    return t.reshape(4, B * ph * pw, K)


def _pad_axis(a, axis, new):
    pad = [(0, 0)] * a.ndim
    pad[axis] = (0, new - a.shape[axis])
    return jnp.pad(a, pad)


@functools.partial(jax.jit, static_argnums=(2,))
def cnn_cifar_forward(x_nchw, prep, num_classes=10):
    batch = x_nchw.shape[0]
    x = jnp.transpose(x_nchw, (0, 2, 3, 1)).astype(jnp.float32)       # NCHW -> NHWC

    # -------- conv1 + ReLU + pool : 32x32x3 -> 28x28x6 -> 14x14x6 --------
    g1 = _stack_pool_groups(_im2col_valid(x, 5), batch_major=True)    # (4, B*196, 75)
    m1 = g1.shape[1]
    p1 = _pad_axis(g1, 2, LANE).reshape(4 * m1, LANE).astype(jnp.bfloat16)

    y1 = pl.pallas_call(
        conv1_pool_kernel,
        out_shape=jax.ShapeDtypeStruct((m1, LANE), jnp.bfloat16),
        in_specs=[_full_spec((4 * m1, LANE)), _full_spec((LANE, LANE)),
                  _full_spec((1, LANE))],
        out_specs=_full_spec((m1, LANE)),
        cost_estimate=pl.CostEstimate(
            flops=2 * 4 * m1 * LANE * LANE, transcendentals=0,
            bytes_accessed=(4 * m1 * LANE + LANE * LANE + m1 * LANE) * 2 + LANE * 4),
    )(p1, prep["w1"], prep["b1"])                    # (B*196, 128) bf16, rows (b,py,px)

    # -------- conv2 + ReLU + pool + flatten + fc1/fc2/fc3 + log-softmax --------
    y1 = y1.reshape(batch, 14, 14, LANE)[..., :6]                     # real 6 channels
    g2 = _stack_pool_groups(_im2col_valid(y1, 5), batch_major=False)  # (4, 25*B, 150)
    rows = g2.shape[1]
    gm = -(-rows // 8) * 8                                            # sublane-align rows
    p2 = _pad_axis(_pad_axis(g2, 1, gm), 2, 2 * LANE).reshape(4 * gm, 2 * LANE)

    out_pad = pl.pallas_call(
        conv2_fc_kernel,
        out_shape=jax.ShapeDtypeStruct((batch, LANE), jnp.float32),
        in_specs=[_full_spec((4 * gm, 2 * LANE)), _full_spec((2 * LANE, LANE)),
                  _full_spec((1, LANE)), _full_spec((25 * LANE, LANE)),
                  _full_spec((1, LANE)), _full_spec((LANE, LANE)),
                  _full_spec((1, LANE)), _full_spec((LANE, LANE)),
                  _full_spec((1, LANE))],
        out_specs=_full_spec((batch, LANE)),
        scratch_shapes=[pltpu.VMEM((gm, LANE), jnp.float32)],
        cost_estimate=pl.CostEstimate(
            flops=2 * (4 * gm * 2 * LANE * LANE + batch * 25 * LANE * LANE
                       + 2 * batch * LANE * LANE),
            transcendentals=batch * LANE,
            bytes_accessed=(4 * gm * 2 * LANE + 2 * LANE * LANE + 25 * LANE * LANE
                            + 2 * LANE * LANE) * 2 + (5 * LANE + batch * LANE) * 4),
    )(p2, prep["w2"], prep["b2"], prep["w1r"], prep["b1f"],
      prep["w2f"], prep["b2f"], prep["w3f"], prep["b3f"])

    return out_pad[:, :num_classes]


# ---------------------------------------------------------------------------
# Parameters: PyTorch-layout init + one-time (outside jit) kernel-layout prep
# ---------------------------------------------------------------------------
def init_params(key, num_classes=10):
    ks = jax.random.split(key, 10)
    return {
        "conv1_w": jax.random.normal(ks[0], (6, 3, 5, 5), jnp.float32) * 0.1,
        "conv1_b": jax.random.normal(ks[1], (6,), jnp.float32) * 0.1,
        "conv2_w": jax.random.normal(ks[2], (16, 6, 5, 5), jnp.float32) * 0.1,
        "conv2_b": jax.random.normal(ks[3], (16,), jnp.float32) * 0.1,
        "fc1_w": jax.random.normal(ks[4], (120, 400), jnp.float32) * 0.05,
        "fc1_b": jax.random.normal(ks[5], (120,), jnp.float32) * 0.05,
        "fc2_w": jax.random.normal(ks[6], (84, 120), jnp.float32) * 0.05,
        "fc2_b": jax.random.normal(ks[7], (84,), jnp.float32) * 0.05,
        "fc3_w": jax.random.normal(ks[8], (num_classes, 84), jnp.float32) * 0.05,
        "fc3_b": jax.random.normal(ks[9], (num_classes,), jnp.float32) * 0.05,
    }


def prepare_params(params, num_classes=10):
    """One-time weight prep: matmul (K, N) layouts, lane-dense zero padding to
    128/256-wide slabs, bf16 casts for the MXU. Removes per-forward .T/reshape ops."""
    f32, bf16 = jnp.float32, jnp.bfloat16

    def pad_to(a, shape):
        out = jnp.zeros(shape, a.dtype)
        return out.at[tuple(slice(0, s) for s in a.shape)].set(a)

    # conv weights (O, Cin, kh, kw) -> (kh*kw*Cin, O), matching the im2col column order
    w1 = jnp.transpose(params["conv1_w"], (2, 3, 1, 0)).reshape(75, 6)
    w2 = jnp.transpose(params["conv2_w"], (2, 3, 1, 0)).reshape(150, 16)

    # fc1 weight: PyTorch flatten order is (co, qy, qx); the kernel builds the flat
    # vector as (pixel-block of 128 lanes, channel lane) -> fold the permutation here.
    w1r = params["fc1_w"].reshape(120, 16, 25).transpose(2, 1, 0)     # (p, co, j)
    w1r = jnp.zeros((25, LANE, LANE), f32).at[:, :16, :120].set(w1r)
    w1r = w1r.reshape(25 * LANE, LANE)

    b3 = jnp.full((1, LANE), -1e30, f32).at[0, :num_classes].set(
        params["fc3_b"].astype(f32))

    return {
        "w1": pad_to(w1, (LANE, LANE)).astype(bf16),
        "b1": pad_to(params["conv1_b"].reshape(1, 6), (1, LANE)).astype(f32),
        "w2": pad_to(w2, (2 * LANE, LANE)).astype(bf16),
        "b2": pad_to(params["conv2_b"].reshape(1, 16), (1, LANE)).astype(f32),
        "w1r": w1r.astype(bf16),
        "b1f": pad_to(params["fc1_b"].reshape(1, 120), (1, LANE)).astype(f32),
        "w2f": pad_to(params["fc2_w"].T, (LANE, LANE)).astype(bf16),
        "b2f": pad_to(params["fc2_b"].reshape(1, 84), (1, LANE)).astype(f32),
        "w3f": pad_to(params["fc3_w"].T, (LANE, LANE)).astype(bf16),
        "b3f": b3,
    }


# ---------------------------------------------------------------------------
# Pure-JAX f32 reference (PyTorch eval-mode semantics) for validation
# ---------------------------------------------------------------------------
def reference_forward(x_nchw, params):
    def conv(x, w, b):
        y = lax.conv_general_dilated(x, w, (1, 1), "VALID",
                                     dimension_numbers=("NCHW", "OIHW", "NCHW"))
        return y + b.reshape(1, -1, 1, 1)

    def pool2(x):
        b, c, h, w = x.shape
        return x.reshape(b, c, h // 2, 2, w // 2, 2).max(axis=(3, 5))

    h = pool2(jax.nn.relu(conv(x_nchw, params["conv1_w"], params["conv1_b"])))
    h = pool2(jax.nn.relu(conv(h, params["conv2_w"], params["conv2_b"])))
    h = h.reshape(h.shape[0], -1)
    h = jax.nn.relu(h @ params["fc1_w"].T + params["fc1_b"])
    h = jax.nn.relu(h @ params["fc2_w"].T + params["fc2_b"])
    h = h @ params["fc3_w"].T + params["fc3_b"]
    return jax.nn.log_softmax(h, axis=-1)


if __name__ == "__main__":
    key = jax.random.PRNGKey(0)
    k_x, k_p = jax.random.split(key)
    # CIFAR geometry is required by the module arithmetic (fc1 expects 16*5*5): (B, 3, 32, 32)
    x = jax.random.normal(k_x, (2, 3, 32, 32), jnp.float32)
    params = init_params(k_p, num_classes=10)
    prep = prepare_params(params, num_classes=10)

    out = cnn_cifar_forward(x, prep, 10)
    out = jax.block_until_ready(out)

    assert out.shape == (2, 10), out.shape
    assert bool(jnp.all(jnp.isfinite(out)))
    # log-softmax rows must exponentiate-sum to ~1
    assert jnp.allclose(jnp.sum(jnp.exp(out), axis=-1), 1.0, atol=1e-3)
    # matches the f32 reference up to bf16 matmul drift
    ref = reference_forward(x, params)
    assert float(jnp.max(jnp.abs(out - ref))) < 0.25, float(jnp.max(jnp.abs(out - ref)))
    print("KERNEL_OK")
</pallas_src>

<mosaic_0001>
module attributes {stable_mosaic.version = 11 : i64} {
  func.func @conv1_pool_kernel(%arg0: memref<1568x128xbf16, #tpu.memory_space<vmem>>, %arg1: memref<128x128xbf16, #tpu.memory_space<vmem>>, %arg2: memref<1x128xf32, #tpu.memory_space<vmem>>, %arg3: memref<392x128xbf16, #tpu.memory_space<vmem>>) attributes {dimension_semantics = [], scalar_prefetch = 0 : i64, scratch_operands = 0 : i64, tpu.core_type = #tpu.core_type<tc>} {
    %c0 = arith.constant 0 : index
    %c0_0 = arith.constant 0 : index
    %0 = vector.load %arg1[%c0, %c0_0] : memref<128x128xbf16, #tpu.memory_space<vmem>>, vector<128x128xbf16>
    %c0_1 = arith.constant 0 : index
    %c0_2 = arith.constant 0 : index
    %1 = vector.load %arg2[%c0_1, %c0_2] : memref<1x128xf32, #tpu.memory_space<vmem>>, vector<1x128xf32>
    %c0_3 = arith.constant 0 : index
    %c0_4 = arith.constant 0 : index
    %2 = vector.load %arg0[%c0_3, %c0_4] : memref<1568x128xbf16, #tpu.memory_space<vmem>>, vector<392x128xbf16>
    %cst = arith.constant dense<0.000000e+00> : vector<392x128xf32>
    %3 = tpu.matmul %2, %0, %cst {dimension_numbers = #tpu.dot_dimension_numbers<[1], [0], [0], [1], [0, 0, 1, 1], [], []>} : vector<392x128xbf16>, vector<128x128xbf16>, vector<392x128xf32> -> vector<392x128xf32>
    %4 = vector.broadcast %1 : vector<1x128xf32> to vector<392x128xf32>
    %5 = arith.addf %3, %4 : vector<392x128xf32>
    %cst_5 = arith.constant 0.000000e+00 : f32
    %6 = vector.broadcast %cst_5 : f32 to vector<392x128xf32>
    %7 = arith.maximumf %5, %6 : vector<392x128xf32>
    %c392 = arith.constant 392 : index
    %c0_6 = arith.constant 0 : index
    %8 = vector.load %arg0[%c392, %c0_6] : memref<1568x128xbf16, #tpu.memory_space<vmem>>, vector<392x128xbf16>
    %cst_7 = arith.constant dense<0.000000e+00> : vector<392x128xf32>
    %9 = tpu.matmul %8, %0, %cst_7 {dimension_numbers = #tpu.dot_dimension_numbers<[1], [0], [0], [1], [0, 0, 1, 1], [], []>} : vector<392x128xbf16>, vector<128x128xbf16>, vector<392x128xf32> -> vector<392x128xf32>
    %10 = vector.broadcast %1 : vector<1x128xf32> to vector<392x128xf32>
    %11 = arith.addf %9, %10 : vector<392x128xf32>
    %cst_8 = arith.constant 0.000000e+00 : f32
    %12 = vector.broadcast %cst_8 : f32 to vector<392x128xf32>
    %13 = arith.maximumf %11, %12 : vector<392x128xf32>
    %14 = arith.maximumf %7, %13 : vector<392x128xf32>
    %c784 = arith.constant 784 : index
    %c0_9 = arith.constant 0 : index
    %15 = vector.load %arg0[%c784, %c0_9] : memref<1568x128xbf16, #tpu.memory_space<vmem>>, vector<392x128xbf16>
    %cst_10 = arith.constant dense<0.000000e+00> : vector<392x128xf32>
    %16 = tpu.matmul %15, %0, %cst_10 {dimension_numbers = #tpu.dot_dimension_numbers<[1], [0], [0], [1], [0, 0, 1, 1], [], []>} : vector<392x128xbf16>, vector<128x128xbf16>, vector<392x128xf32> -> vector<392x128xf32>
    %17 = vector.broadcast %1 : vector<1x128xf32> to vector<392x128xf32>
    %18 = arith.addf %16, %17 : vector<392x128xf32>
    %cst_11 = arith.constant 0.000000e+00 : f32
    %19 = vector.broadcast %cst_11 : f32 to vector<392x128xf32>
    %20 = arith.maximumf %18, %19 : vector<392x128xf32>
    %21 = arith.maximumf %14, %20 : vector<392x128xf32>
    %c1176 = arith.constant 1176 : index
    %c0_12 = arith.constant 0 : index
    %22 = vector.load %arg0[%c1176, %c0_12] : memref<1568x128xbf16, #tpu.memory_space<vmem>>, vector<392x128xbf16>
    %cst_13 = arith.constant dense<0.000000e+00> : vector<392x128xf32>
    %23 = tpu.matmul %22, %0, %cst_13 {dimension_numbers = #tpu.dot_dimension_numbers<[1], [0], [0], [1], [0, 0, 1, 1], [], []>} : vector<392x128xbf16>, vector<128x128xbf16>, vector<392x128xf32> -> vector<392x128xf32>
    %24 = vector.broadcast %1 : vector<1x128xf32> to vector<392x128xf32>
    %25 = arith.addf %23, %24 : vector<392x128xf32>
    %cst_14 = arith.constant 0.000000e+00 : f32
    %26 = vector.broadcast %cst_14 : f32 to vector<392x128xf32>
    %27 = arith.maximumf %25, %26 : vector<392x128xf32>
    %28 = arith.maximumf %21, %27 : vector<392x128xf32>
    %29 = arith.truncf %28 : vector<392x128xf32> to vector<392x128xbf16>
    %c0_15 = arith.constant 0 : index
    %c0_16 = arith.constant 0 : index
    %30 = vector.load %arg3[%c0_15, %c0_16] : memref<392x128xbf16, #tpu.memory_space<vmem>>, vector<392x128xbf16>
    tpu.vector_store %arg3[%c0_15, %c0_16], %29 {strides = array<i32>} : memref<392x128xbf16, #tpu.memory_space<vmem>>, vector<392x128xbf16>,
    return
  }
}

module attributes {stable_mosaic.version = 11 : i64} {
  func.func @conv2_fc_kernel(%arg0: memref<224x256xbf16, #tpu.memory_space<vmem>>, %arg1: memref<256x128xbf16, #tpu.memory_space<vmem>>, %arg2: memref<1x128xf32, #tpu.memory_space<vmem>>, %arg3: memref<3200x128xbf16, #tpu.memory_space<vmem>>, %arg4: memref<1x128xf32, #tpu.memory_space<vmem>>, %arg5: memref<128x128xbf16, #tpu.memory_space<vmem>>, %arg6: memref<1x128xf32, #tpu.memory_space<vmem>>, %arg7: memref<128x128xbf16, #tpu.memory_space<vmem>>, %arg8: memref<1x128xf32, #tpu.memory_space<vmem>>, %arg9: memref<2x128xf32, #tpu.memory_space<vmem>>, %arg10: memref<56x128xf32, #tpu.memory_space<vmem>>) attributes {dimension_semantics = [], scalar_prefetch = 0 : i64, scratch_operands = 1 : i64, tpu.core_type = #tpu.core_type<tc>} {
    %c0 = arith.constant 0 : index
    %c0_0 = arith.constant 0 : index
    %0 = vector.load %arg0[%c0, %c0_0] : memref<224x256xbf16, #tpu.memory_space<vmem>>, vector<224x256xbf16>
    %c0_1 = arith.constant 0 : index
    %c0_2 = arith.constant 0 : index
    %1 = vector.load %arg1[%c0_1, %c0_2] : memref<256x128xbf16, #tpu.memory_space<vmem>>, vector<256x128xbf16>
    %cst = arith.constant dense<0.000000e+00> : vector<224x128xf32>
    %2 = tpu.matmul %0, %1, %cst {dimension_numbers = #tpu.dot_dimension_numbers<[1], [0], [0], [1], [0, 0, 1, 1], [], []>} : vector<224x256xbf16>, vector<256x128xbf16>, vector<224x128xf32> -> vector<224x128xf32>
    %c0_3 = arith.constant 0 : index
    %c0_4 = arith.constant 0 : index
    %3 = vector.load %arg2[%c0_3, %c0_4] : memref<1x128xf32, #tpu.memory_space<vmem>>, vector<1x128xf32>
    %4 = vector.broadcast %3 : vector<1x128xf32> to vector<224x128xf32>
    %5 = arith.addf %2, %4 : vector<224x128xf32>
    %cst_5 = arith.constant 0.000000e+00 : f32
    %6 = vector.broadcast %cst_5 : f32 to vector<224x128xf32>
    %7 = arith.maximumf %5, %6 : vector<224x128xf32>
    %8 = vector.extract_strided_slice %7 {offsets = [0, 0], sizes = [56, 128], strides = [1, 1]} : vector<224x128xf32> to vector<56x128xf32>
    %9 = vector.extract_strided_slice %7 {offsets = [56, 0], sizes = [56, 128], strides = [1, 1]} : vector<224x128xf32> to vector<56x128xf32>
    %10 = arith.maximumf %8, %9 : vector<56x128xf32>
    %11 = vector.extract_strided_slice %7 {offsets = [112, 0], sizes = [56, 128], strides = [1, 1]} : vector<224x128xf32> to vector<56x128xf32>
    %12 = vector.extract_strided_slice %7 {offsets = [168, 0], sizes = [56, 128], strides = [1, 1]} : vector<224x128xf32> to vector<56x128xf32>
    %13 = arith.maximumf %11, %12 : vector<56x128xf32>
    %14 = arith.maximumf %10, %13 : vector<56x128xf32>
    %c0_6 = arith.constant 0 : index
    %c0_7 = arith.constant 0 : index
    %15 = vector.load %arg10[%c0_6, %c0_7] : memref<56x128xf32, #tpu.memory_space<vmem>>, vector<56x128xf32>
    tpu.vector_store %arg10[%c0_6, %c0_7], %14 {strides = array<i32>} : memref<56x128xf32, #tpu.memory_space<vmem>>, vector<56x128xf32>,
    %c0_8 = arith.constant 0 : index
    %c0_9 = arith.constant 0 : index
    %16 = vector.load %arg10[%c0_8, %c0_9] : memref<56x128xf32, #tpu.memory_space<vmem>>, vector<2x128xf32>
    %c2 = arith.constant 2 : index
    %c0_10 = arith.constant 0 : index
    %17 = vector.load %arg10[%c2, %c0_10] : memref<56x128xf32, #tpu.memory_space<vmem>>, vector<2x128xf32>
    %c4 = arith.constant 4 : index
    %c0_11 = arith.constant 0 : index
    %18 = vector.load %arg10[%c4, %c0_11] : memref<56x128xf32, #tpu.memory_space<vmem>>, vector<2x128xf32>
    %c6 = arith.constant 6 : index
    %c0_12 = arith.constant 0 : index
    %19 = vector.load %arg10[%c6, %c0_12] : memref<56x128xf32, #tpu.memory_space<vmem>>, vector<2x128xf32>
    %c8 = arith.constant 8 : index
    %c0_13 = arith.constant 0 : index
    %20 = vector.load %arg10[%c8, %c0_13] : memref<56x128xf32, #tpu.memory_space<vmem>>, vector<2x128xf32>
    %c10 = arith.constant 10 : index
    %c0_14 = arith.constant 0 : index
    %21 = vector.load %arg10[%c10, %c0_14] : memref<56x128xf32, #tpu.memory_space<vmem>>, vector<2x128xf32>
    %c12 = arith.constant 12 : index
    %c0_15 = arith.constant 0 : index
    %22 = vector.load %arg10[%c12, %c0_15] : memref<56x128xf32, #tpu.memory_space<vmem>>, vector<2x128xf32>
    %c14 = arith.constant 14 : index
    %c0_16 = arith.constant 0 : index
    %23 = vector.load %arg10[%c14, %c0_16] : memref<56x128xf32, #tpu.memory_space<vmem>>, vector<2x128xf32>
    %c16 = arith.constant 16 : index
    %c0_17 = arith.constant 0 : index
    %24 = vector.load %arg10[%c16, %c0_17] : memref<56x128xf32, #tpu.memory_space<vmem>>, vector<2x128xf32>
    %c18 = arith.constant 18 : index
    %c0_18 = arith.constant 0 : index
    %25 = vector.load %arg10[%c18, %c0_18] : memref<56x128xf32, #tpu.memory_space<vmem>>, vector<2x128xf32>
    %c20 = arith.constant 20 : index
    %c0_19 = arith.constant 0 : index
    %26 = vector.load %arg10[%c20, %c0_19] : memref<56x128xf32, #tpu.memory_space<vmem>>, vector<2x128xf32>
    %c22 = arith.constant 22 : index
    %c0_20 = arith.constant 0 : index
    %27 = vector.load %arg10[%c22, %c0_20] : memref<56x128xf32, #tpu.memory_space<vmem>>, vector<2x128xf32>
    %c24 = arith.constant 24 : index
    %c0_21 = arith.constant 0 : index
    %28 = vector.load %arg10[%c24, %c0_21] : memref<56x128xf32, #tpu.memory_space<vmem>>, vector<2x128xf32>
    %c26 = arith.constant 26 : index
    %c0_22 = arith.constant 0 : index
    %29 = vector.load %arg10[%c26, %c0_22] : memref<56x128xf32, #tpu.memory_space<vmem>>, vector<2x128xf32>
    %c28 = arith.constant 28 : index
    %c0_23 = arith.constant 0 : index
    %30 = vector.load %arg10[%c28, %c0_23] : memref<56x128xf32, #tpu.memory_space<vmem>>, vector<2x128xf32>
    %c30 = arith.constant 30 : index
    %c0_24 = arith.constant 0 : index
    %31 = vector.load %arg10[%c30, %c0_24] : memref<56x128xf32, #tpu.memory_space<vmem>>, vector<2x128xf32>
    %c32 = arith.constant 32 : index
    %c0_25 = arith.constant 0 : index
    %32 = vector.load %arg10[%c32, %c0_25] : memref<56x128xf32, #tpu.memory_space<vmem>>, vector<2x128xf32>
    %c34 = arith.constant 34 : index
    %c0_26 = arith.constant 0 : index
    %33 = vector.load %arg10[%c34, %c0_26] : memref<56x128xf32, #tpu.memory_space<vmem>>, vector<2x128xf32>
    %c36 = arith.constant 36 : index
    %c0_27 = arith.constant 0 : index
    %34 = vector.load %arg10[%c36, %c0_27] : memref<56x128xf32, #tpu.memory_space<vmem>>, vector<2x128xf32>
    %c38 = arith.constant 38 : index
    %c0_28 = arith.constant 0 : index
    %35 = vector.load %arg10[%c38, %c0_28] : memref<56x128xf32, #tpu.memory_space<vmem>>, vector<2x128xf32>
    %c40 = arith.constant 40 : index
    %c0_29 = arith.constant 0 : index
    %36 = vector.load %arg10[%c40, %c0_29] : memref<56x128xf32, #tpu.memory_space<vmem>>, vector<2x128xf32>
    %c42 = arith.constant 42 : index
    %c0_30 = arith.constant 0 : index
    %37 = vector.load %arg10[%c42, %c0_30] : memref<56x128xf32, #tpu.memory_space<vmem>>, vector<2x128xf32>
    %c44 = arith.constant 44 : index
    %c0_31 = arith.constant 0 : index
    %38 = vector.load %arg10[%c44, %c0_31] : memref<56x128xf32, #tpu.memory_space<vmem>>, vector<2x128xf32>
    %c46 = arith.constant 46 : index
    %c0_32 = arith.constant 0 : index
    %39 = vector.load %arg10[%c46, %c0_32] : memref<56x128xf32, #tpu.memory_space<vmem>>, vector<2x128xf32>
    %c48 = arith.constant 48 : index
    %c0_33 = arith.constant 0 : index
    %40 = vector.load %arg10[%c48, %c0_33] : memref<56x128xf32, #tpu.memory_space<vmem>>, vector<2x128xf32>
    %41 = tpu.concatenate %16, %17, %18, %19, %20, %21, %22, %23, %24, %25, %26, %27, %28, %29, %30, %31 in 1 : vector<2x128xf32>, vector<2x128xf32>, vector<2x128xf32>, vector<2x128xf32>, vector<2x128xf32>, vector<2x128xf32>, vector<2x128xf32>, vector<2x128xf32>, vector<2x128xf32>, vector<2x128xf32>, vector<2x128xf32>, vector<2x128xf32>, vector<2x128xf32>, vector<2x128xf32>, vector<2x128xf32>, vector<2x128xf32> -> vector<2x2048xf32>
    %42 = tpu.concatenate %32, %33, %34, %35, %36, %37, %38, %39, %40 in 1 : vector<2x128xf32>, vector<2x128xf32>, vector<2x128xf32>, vector<2x128xf32>, vector<2x128xf32>, vector<2x128xf32>, vector<2x128xf32>, vector<2x128xf32>, vector<2x128xf32> -> vector<2x1152xf32>
    %43 = tpu.concatenate %41, %42 in 1 : vector<2x2048xf32>, vector<2x1152xf32> -> vector<2x3200xf32>
    %44 = arith.truncf %43 : vector<2x3200xf32> to vector<2x3200xbf16>
    %c0_34 = arith.constant 0 : index
    %c0_35 = arith.constant 0 : index
    %45 = vector.load %arg3[%c0_34, %c0_35] : memref<3200x128xbf16, #tpu.memory_space<vmem>>, vector<3200x128xbf16>
    %cst_36 = arith.constant dense<0.000000e+00> : vector<2x128xf32>
    %46 = tpu.matmul %44, %45, %cst_36 {dimension_numbers = #tpu.dot_dimension_numbers<[1], [0], [0], [1], [0, 0, 1, 1], [], []>} : vector<2x3200xbf16>, vector<3200x128xbf16>, vector<2x128xf32> -> vector<2x128xf32>
    %c0_37 = arith.constant 0 : index
    %c0_38 = arith.constant 0 : index
    %47 = vector.load %arg4[%c0_37, %c0_38] : memref<1x128xf32, #tpu.memory_space<vmem>>, vector<1x128xf32>
    %48 = vector.broadcast %47 : vector<1x128xf32> to vector<2x128xf32>
    %49 = arith.addf %46, %48 : vector<2x128xf32>
    %cst_39 = arith.constant 0.000000e+00 : f32
    %50 = vector.broadcast %cst_39 : f32 to vector<2x128xf32>
    %51 = arith.maximumf %49, %50 : vector<2x128xf32>
    %52 = arith.truncf %51 : vector<2x128xf32> to vector<2x128xbf16>
    %c0_40 = arith.constant 0 : index
    %c0_41 = arith.constant 0 : index
    %53 = vector.load %arg5[%c0_40, %c0_41] : memref<128x128xbf16, #tpu.memory_space<vmem>>, vector<128x128xbf16>
    %cst_42 = arith.constant dense<0.000000e+00> : vector<2x128xf32>
    %54 = tpu.matmul %52, %53, %cst_42 {dimension_numbers = #tpu.dot_dimension_numbers<[1], [0], [0], [1], [0, 0, 1, 1], [], []>} : vector<2x128xbf16>, vector<128x128xbf16>, vector<2x128xf32> -> vector<2x128xf32>
    %c0_43 = arith.constant 0 : index
    %c0_44 = arith.constant 0 : index
    %55 = vector.load %arg6[%c0_43, %c0_44] : memref<1x128xf32, #tpu.memory_space<vmem>>, vector<1x128xf32>
    %56 = vector.broadcast %55 : vector<1x128xf32> to vector<2x128xf32>
    %57 = arith.addf %54, %56 : vector<2x128xf32>
    %cst_45 = arith.constant 0.000000e+00 : f32
    %58 = vector.broadcast %cst_45 : f32 to vector<2x128xf32>
    %59 = arith.maximumf %57, %58 : vector<2x128xf32>
    %60 = arith.truncf %59 : vector<2x128xf32> to vector<2x128xbf16>
    %c0_46 = arith.constant 0 : index
    %c0_47 = arith.constant 0 : index
    %61 = vector.load %arg7[%c0_46, %c0_47] : memref<128x128xbf16, #tpu.memory_space<vmem>>, vector<128x128xbf16>
    %cst_48 = arith.constant dense<0.000000e+00> : vector<2x128xf32>
    %62 = tpu.matmul %60, %61, %cst_48 {dimension_numbers = #tpu.dot_dimension_numbers<[1], [0], [0], [1], [0, 0, 1, 1], [], []>} : vector<2x128xbf16>, vector<128x128xbf16>, vector<2x128xf32> -> vector<2x128xf32>
    %c0_49 = arith.constant 0 : index
    %c0_50 = arith.constant 0 : index
    %63 = vector.load %arg8[%c0_49, %c0_50] : memref<1x128xf32, #tpu.memory_space<vmem>>, vector<1x128xf32>
    %64 = vector.broadcast %63 : vector<1x128xf32> to vector<2x128xf32>
    %65 = arith.addf %62, %64 : vector<2x128xf32>
    %cst_51 = arith.constant dense<0xFF800000> : vector<2xf32>
    %66 = vector.multi_reduction <maximumf>, %65, %cst_51 [1] : vector<2x128xf32> to vector<2xf32>
    %67 = vector.shape_cast %66 : vector<2xf32> to vector<2x1xf32>
    %68 = vector.broadcast %67 : vector<2x1xf32> to vector<2x128xf32>
    %69 = arith.subf %65, %68 : vector<2x128xf32>
    %70 = math.exp %69 : vector<2x128xf32>
    %cst_52 = arith.constant dense<0.000000e+00> : vector<2xf32>
    %71 = vector.multi_reduction <add>, %70, %cst_52 [1] : vector<2x128xf32> to vector<2xf32>
    %72 = vector.shape_cast %71 : vector<2xf32> to vector<2x1xf32>
    %73 = math.log %72 : vector<2x1xf32>
    %74 = vector.broadcast %73 : vector<2x1xf32> to vector<2x128xf32>
    %75 = arith.subf %69, %74 : vector<2x128xf32>
    %c0_53 = arith.constant 0 : index
    %c0_54 = arith.constant 0 : index
    %76 = vector.load %arg9[%c0_53, %c0_54] : memref<2x128xf32, #tpu.memory_space<vmem>>, vector<2x128xf32>
    tpu.vector_store %arg9[%c0_53, %c0_54], %75 {strides = array<i32>} : memref<2x128xf32, #tpu.memory_space<vmem>>, vector<2x128xf32>,
    return
  }
}

</mosaic_0001>

<llo_original>
// kernel: cnn_cifar_forward.2
$region0: #{cnn_cifar_forward.2}
  #allocation0 [shape = 'u32[]', space=smem, size = 0x4, offset = 0x4, fixed_abs, tag = 'smem constant byte address 0x4 - core index']
  #allocation1 [shape = 'u32[144,128]{1,0:T(1,128)}', space=vmem, size = 0x12000, scoped, tag = 'internal scratch']
  %s0 = inlined_call_operand.vmem [shape: bf16[1568,128], index: 0, kind: input, shape index: {}]
  %s1 = inlined_call_operand.vmem [shape: bf16[128,128], index: 1, kind: input, shape index: {}]
  %s2 = inlined_call_operand.vmem [shape: f32[1,128], index: 2, kind: input, shape index: {}]
  %s3 = inlined_call_operand.vmem [shape: bf16[392,128], index: 3, kind: output, shape index: {}]
  %s4 = sld [smem:[#allocation0]]
  $region22: #{cnn_cifar_forward.2} parent=0
    _
  %s6 = ssub.s32 1, %s4
  %s7 = scalar_select 0, %s6, %s4
  // Predicated region
  $region2: #{cnn_cifar_forward.2} parent=0 // pred_check
    _
  $region3: #{cnn_cifar_forward.2} parent=0 // pred_check_branch
    %9 = sbr.rel (0) target = $region5
  $region4: #{cnn_cifar_forward.2} parent=0 // pred_region
    _
  $region5: #{cnn_cifar_forward.2} parent=0 // pred_fallthru
    _
  // Predicated region
  $region6: #{cnn_cifar_forward.2} parent=0 // pred_check
    _
  $region7: #{cnn_cifar_forward.2} parent=0 // pred_check_branch
    %11 = sbr.rel (0) target = $region9
  $region8: #{cnn_cifar_forward.2} parent=0 // pred_region
    _
  $region9: #{cnn_cifar_forward.2} parent=0 // pred_fallthru
    _
  // Predicated region
  $region10: #{cnn_cifar_forward.2} parent=0 // pred_check
    _
  $region11: #{cnn_cifar_forward.2} parent=0 // pred_check_branch
    %13 = sbr.rel (0) target = $region13
  $region12: #{cnn_cifar_forward.2} parent=0 // pred_region
    _
  $region13: #{cnn_cifar_forward.2} parent=0 // pred_fallthru
    _
  %v15 = vld [vmem:[%s1] sm:$0xf]
  %v16 = vld [vmem:[%s1 + $0x4] sm:$0xf]
  %v17 = vld [vmem:[%s1 + $0x8] sm:$0xf]
  %v18 = vld [vmem:[%s1 + $0xc] sm:$0xf]
  %v19 = vld [vmem:[%s1 + $0x10] sm:$0xf]
  %v20 = vld [vmem:[%s1 + $0x14] sm:$0xf]
  %v21 = vld [vmem:[%s1 + $0x18] sm:$0xf]
  %v22 = vld [vmem:[%s1 + $0x1c] sm:$0xf]
  %v23 = vld [vmem:[%s1 + $0x20] sm:$0xf]
  %v24 = vld [vmem:[%s1 + $0x24] sm:$0xf]
  %v25 = vld [vmem:[%s1 + $0x28] sm:$0xf]
  %v26 = vld [vmem:[%s1 + $0x2c] sm:$0xf]
  %v27 = vld [vmem:[%s1 + $0x30] sm:$0xf]
  %v28 = vld [vmem:[%s1 + $0x34] sm:$0xf]
  %v29 = vld [vmem:[%s1 + $0x38] sm:$0xf]
  %v30 = vld [vmem:[%s1 + $0x3c] sm:$0xf]
  %v31 = vld [vmem:[%s2] sm:$0x1]
  %v32 = vld [vmem:[%s0] sm:$0xf]
  %v33 = vld [vmem:[%s0 + $0x4] sm:$0xf]
  %v34 = vld [vmem:[%s0 + $0x8] sm:$0xf]
  %v35 = vld [vmem:[%s0 + $0xc] sm:$0xf]
  %v36 = vld [vmem:[%s0 + $0x10] sm:$0xf]
  %v37 = vld [vmem:[%s0 + $0x14] sm:$0xf]
  %v38 = vld [vmem:[%s0 + $0x18] sm:$0xf]
  %v39 = vld [vmem:[%s0 + $0x1c] sm:$0xf]
  %v40 = vld [vmem:[%s0 + $0x20] sm:$0xf]
  %v41 = vld [vmem:[%s0 + $0x24] sm:$0xf]
  %v42 = vld [vmem:[%s0 + $0x28] sm:$0xf]
  %v43 = vld [vmem:[%s0 + $0x2c] sm:$0xf]
  %v44 = vld [vmem:[%s0 + $0x30] sm:$0xf]
  %v45 = vld [vmem:[%s0 + $0x34] sm:$0xf]
  %v46 = vld [vmem:[%s0 + $0x38] sm:$0xf]
  %v47 = vld [vmem:[%s0 + $0x3c] sm:$0xf]
  %v48 = vld [vmem:[%s0 + $0x40] sm:$0xf]
  %v49 = vld [vmem:[%s0 + $0x44] sm:$0xf]
  %v50 = vld [vmem:[%s0 + $0x48] sm:$0xf]
  %v51 = vld [vmem:[%s0 + $0x4c] sm:$0xf]
  %v52 = vld [vmem:[%s0 + $0x50] sm:$0xf]
  %v53 = vld [vmem:[%s0 + $0x54] sm:$0xf]
  %v54 = vld [vmem:[%s0 + $0x58] sm:$0xf]
  %v55 = vld [vmem:[%s0 + $0x5c] sm:$0xf]
  %v56 = vld [vmem:[%s0 + $0x60] sm:$0xf]
  %v57 = vld [vmem:[%s0 + $0x64] sm:$0xf]
  %v58 = vld [vmem:[%s0 + $0x68] sm:$0xf]
  %v59 = vld [vmem:[%s0 + $0x6c] sm:$0xf]
  %v60 = vld [vmem:[%s0 + $0x70] sm:$0xf]
  %v61 = vld [vmem:[%s0 + $0x74] sm:$0xf]
  %v62 = vld [vmem:[%s0 + $0x78] sm:$0xf]
  %v63 = vld [vmem:[%s0 + $0x7c] sm:$0xf]
  %v64 = vld [vmem:[%s0 + $0x80] sm:$0xf]
  %v65 = vld [vmem:[%s0 + $0x84] sm:$0xf]
  %v66 = vld [vmem:[%s0 + $0x88] sm:$0xf]
  %v67 = vld [vmem:[%s0 + $0x8c] sm:$0xf]
  %v68 = vld [vmem:[%s0 + $0x90] sm:$0xf]
  %v69 = vld [vmem:[%s0 + $0x94] sm:$0xf]
  %v70 = vld [vmem:[%s0 + $0x98] sm:$0xf]
  %v71 = vld [vmem:[%s0 + $0x9c] sm:$0xf]
  %v72 = vld [vmem:[%s0 + $0xa0] sm:$0xf]
  %v73 = vld [vmem:[%s0 + $0xa4] sm:$0xf]
  %v74 = vld [vmem:[%s0 + $0xa8] sm:$0xf]
  %v75 = vld [vmem:[%s0 + $0xac] sm:$0xf]
  %v76 = vld [vmem:[%s0 + $0xb0] sm:$0xf]
  %v77 = vld [vmem:[%s0 + $0xb4] sm:$0xf]
  %v78 = vld [vmem:[%s0 + $0xb8] sm:$0xf]
  %v79 = vld [vmem:[%s0 + $0xbc] sm:$0xf]
  %v80 = vld [vmem:[%s0 + $0xc0] sm:$0xf]
  %v82 = vlaneseq
  %v83 = vshrl.u32 %v82, 7
  %v84 = vsub.s32 0, %v83
  %v85 = vrot.slane %v31, %v84
  %v136 = vunpack.c.l.b16 %v32
  %v137 = vunpack.c.l.b16 %v33
  %v138 = vunpack.c.l.b16 %v34
  %v139 = vunpack.c.l.b16 %v35
  %v140 = vunpack.c.l.b16 %v36
  %v141 = vunpack.c.l.b16 %v37
  %v142 = vunpack.c.l.b16 %v38
  %v143 = vunpack.c.l.b16 %v39
  %v144 = vunpack.c.l.b16 %v40
  %v145 = vunpack.c.l.b16 %v41
  %v146 = vunpack.c.l.b16 %v42
  %v147 = vunpack.c.l.b16 %v43
  %v148 = vunpack.c.l.b16 %v44
  %v149 = vunpack.c.l.b16 %v45
  %v150 = vunpack.c.l.b16 %v46
  %v151 = vunpack.c.l.b16 %v47
  %v152 = vunpack.c.l.b16 %v48
  %v153 = vunpack.c.l.b16 %v49
  %v154 = vunpack.c.l.b16 %v50
  %v155 = vunpack.c.l.b16 %v51
  %v156 = vunpack.c.l.b16 %v52
  %v157 = vunpack.c.l.b16 %v53
  %v158 = vunpack.c.l.b16 %v54
  %v159 = vunpack.c.l.b16 %v55
  %v160 = vunpack.c.l.b16 %v56
  %v161 = vunpack.c.l.b16 %v57
  %v162 = vunpack.c.l.b16 %v58
  %v163 = vunpack.c.l.b16 %v59
  %v164 = vunpack.c.l.b16 %v60
  %v165 = vunpack.c.l.b16 %v61
  %v166 = vunpack.c.l.b16 %v62
  %v167 = vunpack.c.l.b16 %v63
  %v168 = vunpack.c.l.b16 %v64
  %v169 = vunpack.c.l.b16 %v65
  %v170 = vunpack.c.l.b16 %v66
  %v171 = vunpack.c.l.b16 %v67
  %v172 = vunpack.c.l.b16 %v68
  %v173 = vunpack.c.l.b16 %v69
  %v174 = vunpack.c.l.b16 %v70
  %v175 = vunpack.c.l.b16 %v71
  %v176 = vunpack.c.l.b16 %v72
  %v177 = vunpack.c.l.b16 %v73
  %v178 = vunpack.c.l.b16 %v74
  %v179 = vunpack.c.l.b16 %v75
  %v180 = vunpack.c.l.b16 %v76
  %v181 = vunpack.c.l.b16 %v77
  %v182 = vunpack.c.l.b16 %v78
  %v183 = vunpack.c.l.b16 %v79
  %v184 = vunpack.c.l.b16 %v80
  %v185 = vpack.c.b16 %v137, %v136
  %v186 = vpack.c.b16 %v139, %v138
  %v187 = vpack.c.b16 %v141, %v140
  %v188 = vpack.c.b16 %v143, %v142
  %v189 = vpack.c.b16 %v145, %v144
  %v190 = vpack.c.b16 %v147, %v146
  %v191 = vpack.c.b16 %v149, %v148
  %v192 = vpack.c.b16 %v151, %v150
  %v193 = vpack.c.b16 %v153, %v152
  %v194 = vpack.c.b16 %v155, %v154
  %v195 = vpack.c.b16 %v157, %v156
  %v196 = vpack.c.b16 %v159, %v158
  %v197 = vpack.c.b16 %v161, %v160
  %v198 = vpack.c.b16 %v163, %v162
  %v199 = vpack.c.b16 %v165, %v164
  %v200 = vpack.c.b16 %v167, %v166
  %v201 = vpack.c.b16 %v169, %v168
  %v202 = vpack.c.b16 %v171, %v170
  %v203 = vpack.c.b16 %v173, %v172
  %v204 = vpack.c.b16 %v175, %v174
  %v205 = vpack.c.b16 %v177, %v176
  %v206 = vpack.c.b16 %v179, %v178
  %v207 = vpack.c.b16 %v181, %v180
  %v208 = vpack.c.b16 %v183, %v182
  %v209 = vpack.c.b16 %v184, %v184
  %v251 = vunpack.c.l.b16 %v15
  %v252 = vunpack.c.l.b16 %v16
  %v253 = vunpack.c.l.b16 %v17
  %v254 = vunpack.c.l.b16 %v18
  %v255 = vunpack.c.l.b16 %v19
  %v256 = vunpack.c.l.b16 %v20
  %v257 = vunpack.c.l.b16 %v21
  %v258 = vunpack.c.l.b16 %v22
  %v259 = vunpack.c.l.b16 %v23
  %v260 = vunpack.c.l.b16 %v24
  %v261 = vunpack.c.l.b16 %v25
  %v262 = vunpack.c.l.b16 %v26
  %v263 = vunpack.c.l.b16 %v27
  %v264 = vunpack.c.l.b16 %v28
  %v265 = vunpack.c.l.b16 %v29
  %v266 = vunpack.c.l.b16 %v30
  %v267 = vpack.c.b16 %v252, %v251
  %v268 = vpack.c.b16 %v254, %v253
  %v269 = vpack.c.b16 %v256, %v255
  %v270 = vpack.c.b16 %v258, %v257
  %v271 = vpack.c.b16 %v260, %v259
  %v272 = vpack.c.b16 %v262, %v261
  %v273 = vpack.c.b16 %v264, %v263
  %v274 = vpack.c.b16 %v266, %v265
  %283 = vmatprep.subr.bf16.mxu0 0
  %284 = vmatpush1.bf16.msra.mxu0 %v267
  %285 = vmatprep.subr.bf16.mxu0 0
  %286 = vmatpush1.bf16.msra.mxu0 %v268
  %287 = vmatprep.subr.bf16.mxu0 0
  %288 = vmatpush1.bf16.msra.mxu0 %v269
  %289 = vmatprep.subr.bf16.mxu0 0
  %290 = vmatpush1.bf16.msra.mxu0 %v270
  %291 = vmatprep.subr.bf16.mxu0 0
  %292 = vmatpush1.bf16.msra.mxu0 %v271
  %293 = vmatprep.subr.bf16.mxu0 0
  %294 = vmatpush1.bf16.msra.mxu0 %v272
  %295 = vmatprep.subr.bf16.mxu0 0
  %296 = vmatpush1.bf16.msra.mxu0 %v273
  %297 = vmatprep.subr.bf16.mxu0 0
  %298 = vmatpush1.bf16.msra.mxu0 %v274
  %299 = vmatprep.subr.bf16.mxu0 0
  %300 = vmatpush1.bf16.msra.mxu0 0
  %301 = vmatprep.subr.bf16.mxu0 0
  %302 = vmatpush1.bf16.msra.mxu0 0
  %303 = vmatprep.subr.bf16.mxu0 0
  %304 = vmatpush1.bf16.msra.mxu0 0
  %305 = vmatprep.subr.bf16.mxu0 0
  %306 = vmatpush1.bf16.msra.mxu0 0
  %307 = vmatprep.subr.bf16.mxu0 0
  %308 = vmatpush1.bf16.msra.mxu0 0
  %309 = vmatprep.subr.bf16.mxu0 0
  %310 = vmatpush1.bf16.msra.mxu0 0
  %311 = vmatprep.subr.bf16.mxu0 0
  %312 = vmatpush1.bf16.msra.mxu0 0
  %313 = vmatprep.subr.bf16.mxu0 0
  %314 = vmatpush1.bf16.msra.mxu0 0
  %315 = vmatprep.mubr.bf16.mxu0 0
  %316 = vmatmul.mubr.bf16.gmra.mrb[0].mxu0 %v185
  %v317 = vpop.f32.mrb[0].mxu0
  %v318 = vadd.f32 %v85, %v317
  %v319 = vpop.f32.mrb[0].mxu0
  %v320 = vpop.f32.mrb[0].mxu0
  %v321 = vadd.f32 %v85, %v320
  %v322 = vpop.f32.mrb[0].mxu0
  %323 = vmatprep.mubr.bf16.mxu0 0
  %324 = vmatmul.mubr.bf16.gmra.mrb[0].mxu0 %v186
  %v325 = vpop.f32.mrb[0].mxu0
  %v326 = vadd.f32 %v85, %v325
  %v327 = vpop.f32.mrb[0].mxu0
  %v328 = vpop.f32.mrb[0].mxu0
  %v329 = vadd.f32 %v85, %v328
  %v330 = vpop.f32.mrb[0].mxu0
  %331 = vmatprep.mubr.bf16.mxu0 0
  %332 = vmatmul.mubr.bf16.gmra.mrb[0].mxu0 %v187
  %v333 = vpop.f32.mrb[0].mxu0
  %v334 = vadd.f32 %v85, %v333
  %v335 = vpop.f32.mrb[0].mxu0
  %v336 = vpop.f32.mrb[0].mxu0
  %v337 = vadd.f32 %v85, %v336
  %v338 = vpop.f32.mrb[0].mxu0
  %339 = vmatprep.mubr.bf16.mxu0 0
  %340 = vmatmul.mubr.bf16.gmra.mrb[0].mxu0 %v188
  %v341 = vpop.f32.mrb[0].mxu0
  %v342 = vadd.f32 %v85, %v341
  %v343 = vpop.f32.mrb[0].mxu0
  %v344 = vpop.f32.mrb[0].mxu0
  %v345 = vadd.f32 %v85, %v344
  %v346 = vpop.f32.mrb[0].mxu0
  %347 = vmatprep.mubr.bf16.mxu0 0
  %348 = vmatmul.mubr.bf16.gmra.mrb[0].mxu0 %v189
  %v349 = vpop.f32.mrb[0].mxu0
  %v350 = vadd.f32 %v85, %v349
  %v351 = vpop.f32.mrb[0].mxu0
  %v352 = vpop.f32.mrb[0].mxu0
  %v353 = vadd.f32 %v85, %v352
  %v354 = vpop.f32.mrb[0].mxu0
  %355 = vmatprep.mubr.bf16.mxu0 0
  %356 = vmatmul.mubr.bf16.gmra.mrb[0].mxu0 %v190
  %v357 = vpop.f32.mrb[0].mxu0
  %v358 = vadd.f32 %v85, %v357
  %v359 = vpop.f32.mrb[0].mxu0
  %v360 = vpop.f32.mrb[0].mxu0
  %v361 = vadd.f32 %v85, %v360
  %v362 = vpop.f32.mrb[0].mxu0
  %363 = vmatprep.mubr.bf16.mxu0 0
  %364 = vmatmul.mubr.bf16.gmra.mrb[0].mxu0 %v191
  %v365 = vpop.f32.mrb[0].mxu0
  %v366 = vadd.f32 %v85, %v365
  %v367 = vpop.f32.mrb[0].mxu0
  %v368 = vpop.f32.mrb[0].mxu0
  %v369 = vadd.f32 %v85, %v368
  %v370 = vpop.f32.mrb[0].mxu0
  %371 = vmatprep.mubr.bf16.mxu0 0
  %372 = vmatmul.mubr.bf16.gmra.mrb[0].mxu0 %v192
  %v373 = vpop.f32.mrb[0].mxu0
  %v374 = vadd.f32 %v85, %v373
  %v375 = vpop.f32.mrb[0].mxu0
  %v376 = vpop.f32.mrb[0].mxu0
  %v377 = vadd.f32 %v85, %v376
  %v378 = vpop.f32.mrb[0].mxu0
  %379 = vmatprep.mubr.bf16.mxu0 0
  %380 = vmatmul.mubr.bf16.gmra.mrb[0].mxu0 %v193
  %v381 = vpop.f32.mrb[0].mxu0
  %v382 = vadd.f32 %v85, %v381
  %v383 = vpop.f32.mrb[0].mxu0
  %v384 = vpop.f32.mrb[0].mxu0
  %v385 = vadd.f32 %v85, %v384
  %v386 = vpop.f32.mrb[0].mxu0
  %387 = vmatprep.mubr.bf16.mxu0 0
  %388 = vmatmul.mubr.bf16.gmra.mrb[0].mxu0 %v194
  %v389 = vpop.f32.mrb[0].mxu0
  %v390 = vadd.f32 %v85, %v389
  %v391 = vpop.f32.mrb[0].mxu0
  %v392 = vpop.f32.mrb[0].mxu0
  %v393 = vadd.f32 %v85, %v392
  %v394 = vpop.f32.mrb[0].mxu0
  %395 = vmatprep.mubr.bf16.mxu0 0
  %396 = vmatmul.mubr.bf16.gmra.mrb[0].mxu0 %v195
  %v397 = vpop.f32.mrb[0].mxu0
  %v398 = vadd.f32 %v85, %v397
  %v399 = vpop.f32.mrb[0].mxu0
  %v400 = vpop.f32.mrb[0].mxu0
  %v401 = vadd.f32 %v85, %v400
  %v402 = vpop.f32.mrb[0].mxu0
  %403 = vmatprep.mubr.bf16.mxu0 0
  %404 = vmatmul.mubr.bf16.gmra.mrb[0].mxu0 %v196
  %v405 = vpop.f32.mrb[0].mxu0
  %v406 = vadd.f32 %v85, %v405
  %v407 = vpop.f32.mrb[0].mxu0
  %v408 = vpop.f32.mrb[0].mxu0
  %v409 = vadd.f32 %v85, %v408
  %v410 = vpop.f32.mrb[0].mxu0
  %411 = vmatprep.mubr.bf16.mxu0 0
  %412 = vmatmul.mubr.bf16.gmra.mrb[0].mxu0 %v197
  %v413 = vpop.f32.mrb[0].mxu0
  %v414 = vadd.f32 %v85, %v413
  %v415 = vpop.f32.mrb[0].mxu0
  %v416 = vpop.f32.mrb[0].mxu0
  %v417 = vadd.f32 %v85, %v416
  %v418 = vpop.f32.mrb[0].mxu0
  %419 = vmatprep.mubr.bf16.mxu0 0
  %420 = vmatmul.mubr.bf16.gmra.mrb[0].mxu0 %v198
  %v421 = vpop.f32.mrb[0].mxu0
  %v422 = vadd.f32 %v85, %v421
  %v423 = vpop.f32.mrb[0].mxu0
  %v424 = vpop.f32.mrb[0].mxu0
  %v425 = vadd.f32 %v85, %v424
  %v426 = vpop.f32.mrb[0].mxu0
  %427 = vmatprep.mubr.bf16.mxu0 0
  %428 = vmatmul.mubr.bf16.gmra.mrb[0].mxu0 %v199
  %v429 = vpop.f32.mrb[0].mxu0
  %v430 = vadd.f32 %v85, %v429
  %v431 = vpop.f32.mrb[0].mxu0
  %v432 = vpop.f32.mrb[0].mxu0
  %v433 = vadd.f32 %v85, %v432
  %v434 = vpop.f32.mrb[0].mxu0
  %435 = vmatprep.mubr.bf16.mxu0 0
  %436 = vmatmul.mubr.bf16.gmra.mrb[0].mxu0 %v200
  %v437 = vpop.f32.mrb[0].mxu0
  %v438 = vadd.f32 %v85, %v437
  %v439 = vpop.f32.mrb[0].mxu0
  %v440 = vpop.f32.mrb[0].mxu0
  %v441 = vadd.f32 %v85, %v440
  %v442 = vpop.f32.mrb[0].mxu0
  %443 = vmatprep.mubr.bf16.mxu0 0
  %444 = vmatmul.mubr.bf16.gmra.mrb[0].mxu0 %v201
  %v445 = vpop.f32.mrb[0].mxu0
  %v446 = vadd.f32 %v85, %v445
  %v447 = vpop.f32.mrb[0].mxu0
  %v448 = vpop.f32.mrb[0].mxu0
  %v449 = vadd.f32 %v85, %v448
  %v450 = vpop.f32.mrb[0].mxu0
  %451 = vmatprep.mubr.bf16.mxu0 0
  %452 = vmatmul.mubr.bf16.gmra.mrb[0].mxu0 %v202
  %v453 = vpop.f32.mrb[0].mxu0
  %v454 = vadd.f32 %v85, %v453
  %v455 = vpop.f32.mrb[0].mxu0
  %v456 = vpop.f32.mrb[0].mxu0
  %v457 = vadd.f32 %v85, %v456
  %v458 = vpop.f32.mrb[0].mxu0
  %459 = vmatprep.mubr.bf16.mxu0 0
  %460 = vmatmul.mubr.bf16.gmra.mrb[0].mxu0 %v203
  %v461 = vpop.f32.mrb[0].mxu0
  %v462 = vadd.f32 %v85, %v461
  %v463 = vpop.f32.mrb[0].mxu0
  %v464 = vpop.f32.mrb[0].mxu0
  %v465 = vadd.f32 %v85, %v464
  %v466 = vpop.f32.mrb[0].mxu0
  %467 = vmatprep.mubr.bf16.mxu0 0
  %468 = vmatmul.mubr.bf16.gmra.mrb[0].mxu0 %v204
  %v469 = vpop.f32.mrb[0].mxu0
  %v470 = vadd.f32 %v85, %v469
  %v471 = vpop.f32.mrb[0].mxu0
  %v472 = vpop.f32.mrb[0].mxu0
  %v473 = vadd.f32 %v85, %v472
  %v474 = vpop.f32.mrb[0].mxu0
  %475 = vmatprep.mubr.bf16.mxu0 0
  %476 = vmatmul.mubr.bf16.gmra.mrb[0].mxu0 %v205
  %v477 = vpop.f32.mrb[0].mxu0
  %v478 = vadd.f32 %v85, %v477
  %v479 = vpop.f32.mrb[0].mxu0
  %v480 = vpop.f32.mrb[0].mxu0
  %v481 = vadd.f32 %v85, %v480
  %v482 = vpop.f32.mrb[0].mxu0
  %483 = vmatprep.mubr.bf16.mxu0 0
  %484 = vmatmul.mubr.bf16.gmra.mrb[0].mxu0 %v206
  %v485 = vpop.f32.mrb[0].mxu0
  %v486 = vadd.f32 %v85, %v485
  %v487 = vpop.f32.mrb[0].mxu0
  %v488 = vpop.f32.mrb[0].mxu0
  %v489 = vadd.f32 %v85, %v488
  %v490 = vpop.f32.mrb[0].mxu0
  %491 = vmatprep.mubr.bf16.mxu0 0
  %492 = vmatmul.mubr.bf16.gmra.mrb[0].mxu0 %v207
  %v493 = vpop.f32.mrb[0].mxu0
  %v494 = vadd.f32 %v85, %v493
  %v495 = vpop.f32.mrb[0].mxu0
  %v496 = vpop.f32.mrb[0].mxu0
  %v497 = vadd.f32 %v85, %v496
  %v498 = vpop.f32.mrb[0].mxu0
  %499 = vmatprep.mubr.bf16.mxu0 0
  %500 = vmatmul.mubr.bf16.gmra.mrb[0].mxu0 %v208
  %v501 = vpop.f32.mrb[0].mxu0
  %v502 = vadd.f32 %v85, %v501
  %v503 = vpop.f32.mrb[0].mxu0
  %v504 = vpop.f32.mrb[0].mxu0
  %v505 = vadd.f32 %v85, %v504
  %v506 = vpop.f32.mrb[0].mxu0
  %507 = vmatprep.mubr.bf16.mxu0 0
  %508 = vmatmul.mubr.bf16.gmra.mrb[0].mxu0 %v209
  %v509 = vpop.f32.mrb[0].mxu0
  %v510 = vadd.f32 %v85, %v509
  %v511 = vpop.f32.mrb[0].mxu0
  %v512 = vpop.f32.mrb[0].mxu0
  %v513 = vpop.f32.mrb[0].mxu0
  %514 = vdwg.mxu0
  %v515 = vmax.f32 %v318, 0.0
  %v516 = vmax.f32 %v321, 0.0
  %v517 = vmax.f32 %v326, 0.0
  %v518 = vmax.f32 %v329, 0.0
  %v519 = vmax.f32 %v334, 0.0
  %v520 = vmax.f32 %v337, 0.0
  %v521 = vmax.f32 %v342, 0.0
  %v522 = vmax.f32 %v345, 0.0
  %v523 = vmax.f32 %v350, 0.0
  %v524 = vmax.f32 %v353, 0.0
  %v525 = vmax.f32 %v358, 0.0
  %v526 = vmax.f32 %v361, 0.0
  %v527 = vmax.f32 %v366, 0.0
  %v528 = vmax.f32 %v369, 0.0
  %v529 = vmax.f32 %v374, 0.0
  %v530 = vmax.f32 %v377, 0.0
  %v531 = vmax.f32 %v382, 0.0
  %v532 = vmax.f32 %v385, 0.0
  %v533 = vmax.f32 %v390, 0.0
  %v534 = vmax.f32 %v393, 0.0
  %v535 = vmax.f32 %v398, 0.0
  %v536 = vmax.f32 %v401, 0.0
  %v537 = vmax.f32 %v406, 0.0
  %v538 = vmax.f32 %v409, 0.0
  %v539 = vmax.f32 %v414, 0.0
  %v540 = vmax.f32 %v417, 0.0
  %v541 = vmax.f32 %v422, 0.0
  %v542 = vmax.f32 %v425, 0.0
  %v543 = vmax.f32 %v430, 0.0
  %v544 = vmax.f32 %v433, 0.0
  %v545 = vmax.f32 %v438, 0.0
  %v546 = vmax.f32 %v441, 0.0
  %v547 = vmax.f32 %v446, 0.0
  %v548 = vmax.f32 %v449, 0.0
  %v549 = vmax.f32 %v454, 0.0
  %v550 = vmax.f32 %v457, 0.0
  %v551 = vmax.f32 %v462, 0.0
  %v552 = vmax.f32 %v465, 0.0
  %v553 = vmax.f32 %v470, 0.0
  %v554 = vmax.f32 %v473, 0.0
  %v555 = vmax.f32 %v478, 0.0
  %v556 = vmax.f32 %v481, 0.0
  %v557 = vmax.f32 %v486, 0.0
  %v558 = vmax.f32 %v489, 0.0
  %v559 = vmax.f32 %v494, 0.0
  %v560 = vmax.f32 %v497, 0.0
  %v561 = vmax.f32 %v502, 0.0
  %v562 = vmax.f32 %v505, 0.0
  %v563 = vmax.f32 %v510, 0.0
  %v564 = vld [vmem:[%s0 + $0xc4] sm:$0xf]
  %v565 = vld [vmem:[%s0 + $0xc8] sm:$0xf]
  %v566 = vld [vmem:[%s0 + $0xcc] sm:$0xf]
  %v567 = vld [vmem:[%s0 + $0xd0] sm:$0xf]
  %v568 = vld [vmem:[%s0 + $0xd4] sm:$0xf]
  %v569 = vld [vmem:[%s0 + $0xd8] sm:$0xf]
  %v570 = vld [vmem:[%s0 + $0xdc] sm:$0xf]
  %v571 = vld [vmem:[%s0 + $0xe0] sm:$0xf]
  %v572 = vld [vmem:[%s0 + $0xe4] sm:$0xf]
  %v573 = vld [vmem:[%s0 + $0xe8] sm:$0xf]
  %v574 = vld [vmem:[%s0 + $0xec] sm:$0xf]
  %v575 = vld [vmem:[%s0 + $0xf0] sm:$0xf]
  %v576 = vld [vmem:[%s0 + $0xf4] sm:$0xf]
  %v577 = vld [vmem:[%s0 + $0xf8] sm:$0xf]
  %v578 = vld [vmem:[%s0 + $0xfc] sm:$0xf]
  %v579 = vld [vmem:[%s0 + $0x100] sm:$0xf]
  %v580 = vld [vmem:[%s0 + $0x104] sm:$0xf]
  %v581 = vld [vmem:[%s0 + $0x108] sm:$0xf]
  %v582 = vld [vmem:[%s0 + $0x10c] sm:$0xf]
  %v583 = vld [vmem:[%s0 + $0x110] sm:$0xf]
  %v584 = vld [vmem:[%s0 + $0x114] sm:$0xf]
  %v585 = vld [vmem:[%s0 + $0x118] sm:$0xf]
  %v586 = vld [vmem:[%s0 + $0x11c] sm:$0xf]
  %v587 = vld [vmem:[%s0 + $0x120] sm:$0xf]
  %v588 = vld [vmem:[%s0 + $0x124] sm:$0xf]
  %v589 = vld [vmem:[%s0 + $0x128] sm:$0xf]
  %v590 = vld [vmem:[%s0 + $0x12c] sm:$0xf]
  %v591 = vld [vmem:[%s0 + $0x130] sm:$0xf]
  %v592 = vld [vmem:[%s0 + $0x134] sm:$0xf]
  %v593 = vld [vmem:[%s0 + $0x138] sm:$0xf]
  %v594 = vld [vmem:[%s0 + $0x13c] sm:$0xf]
  %v595 = vld [vmem:[%s0 + $0x140] sm:$0xf]
  %v596 = vld [vmem:[%s0 + $0x144] sm:$0xf]
  %v597 = vld [vmem:[%s0 + $0x148] sm:$0xf]
  %v598 = vld [vmem:[%s0 + $0x14c] sm:$0xf]
  %v599 = vld [vmem:[%s0 + $0x150] sm:$0xf]
  %v600 = vld [vmem:[%s0 + $0x154] sm:$0xf]
  %v601 = vld [vmem:[%s0 + $0x158] sm:$0xf]
  %v602 = vld [vmem:[%s0 + $0x15c] sm:$0xf]
  %v603 = vld [vmem:[%s0 + $0x160] sm:$0xf]
  %v604 = vld [vmem:[%s0 + $0x164] sm:$0xf]
  %v605 = vld [vmem:[%s0 + $0x168] sm:$0xf]
  %v606 = vld [vmem:[%s0 + $0x16c] sm:$0xf]
  %v607 = vld [vmem:[%s0 + $0x170] sm:$0xf]
  %v608 = vld [vmem:[%s0 + $0x174] sm:$0xf]
  %v609 = vld [vmem:[%s0 + $0x178] sm:$0xf]
  %v610 = vld [vmem:[%s0 + $0x17c] sm:$0xf]
  %v611 = vld [vmem:[%s0 + $0x180] sm:$0xf]
  %v612 = vld [vmem:[%s0 + $0x184] sm:$0xf]
  %v662 = vunpack.c.l.b16 %v564
  %v663 = vunpack.c.l.b16 %v565
  %v664 = vunpack.c.l.b16 %v566
  %v665 = vunpack.c.l.b16 %v567
  %v666 = vunpack.c.l.b16 %v568
  %v667 = vunpack.c.l.b16 %v569
  %v668 = vunpack.c.l.b16 %v570
  %v669 = vunpack.c.l.b16 %v571
  %v670 = vunpack.c.l.b16 %v572
  %v671 = vunpack.c.l.b16 %v573
  %v672 = vunpack.c.l.b16 %v574
  %v673 = vunpack.c.l.b16 %v575
  %v674 = vunpack.c.l.b16 %v576
  %v675 = vunpack.c.l.b16 %v577
  %v676 = vunpack.c.l.b16 %v578
  %v677 = vunpack.c.l.b16 %v579
  %v678 = vunpack.c.l.b16 %v580
  %v679 = vunpack.c.l.b16 %v581
  %v680 = vunpack.c.l.b16 %v582
  %v681 = vunpack.c.l.b16 %v583
  %v682 = vunpack.c.l.b16 %v584
  %v683 = vunpack.c.l.b16 %v585
  %v684 = vunpack.c.l.b16 %v586
  %v685 = vunpack.c.l.b16 %v587
  %v686 = vunpack.c.l.b16 %v588
  %v687 = vunpack.c.l.b16 %v589
  %v688 = vunpack.c.l.b16 %v590
  %v689 = vunpack.c.l.b16 %v591
  %v690 = vunpack.c.l.b16 %v592
  %v691 = vunpack.c.l.b16 %v593
  %v692 = vunpack.c.l.b16 %v594
  %v693 = vunpack.c.l.b16 %v595
  %v694 = vunpack.c.l.b16 %v596
  %v695 = vunpack.c.l.b16 %v597
  %v696 = vunpack.c.l.b16 %v598
  %v697 = vunpack.c.l.b16 %v599
  %v698 = vunpack.c.l.b16 %v600
  %v699 = vunpack.c.l.b16 %v601
  %v700 = vunpack.c.l.b16 %v602
  %v701 = vunpack.c.l.b16 %v603
  %v702 = vunpack.c.l.b16 %v604
  %v703 = vunpack.c.l.b16 %v605
  %v704 = vunpack.c.l.b16 %v606
  %v705 = vunpack.c.l.b16 %v607
  %v706 = vunpack.c.l.b16 %v608
  %v707 = vunpack.c.l.b16 %v609
  %v708 = vunpack.c.l.b16 %v610
  %v709 = vunpack.c.l.b16 %v611
  %v710 = vunpack.c.l.b16 %v612
  %v711 = vpack.c.b16 %v663, %v662
  %v712 = vpack.c.b16 %v665, %v664
  %v713 = vpack.c.b16 %v667, %v666
  %v714 = vpack.c.b16 %v669, %v668
  %v715 = vpack.c.b16 %v671, %v670
  %v716 = vpack.c.b16 %v673, %v672
  %v717 = vpack.c.b16 %v675, %v674
  %v718 = vpack.c.b16 %v677, %v676
  %v719 = vpack.c.b16 %v679, %v678
  %v720 = vpack.c.b16 %v681, %v680
  %v721 = vpack.c.b16 %v683, %v682
  %v722 = vpack.c.b16 %v685, %v684
  %v723 = vpack.c.b16 %v687, %v686
  %v724 = vpack.c.b16 %v689, %v688
  %v725 = vpack.c.b16 %v691, %v690
  %v726 = vpack.c.b16 %v693, %v692
  %v727 = vpack.c.b16 %v695, %v694
  %v728 = vpack.c.b16 %v697, %v696
  %v729 = vpack.c.b16 %v699, %v698
  %v730 = vpack.c.b16 %v701, %v700
  %v731 = vpack.c.b16 %v703, %v702
  %v732 = vpack.c.b16 %v705, %v704
  %v733 = vpack.c.b16 %v707, %v706
  %v734 = vpack.c.b16 %v709, %v708
  %v735 = vpack.c.b16 %v710, %v710
  %761 = vmatprep.subr.bf16.mxu0 0
  %762 = vmatpush1.bf16.msra.mxu0 %v267
  %763 = vmatprep.subr.bf16.mxu0 0
  %764 = vmatpush1.bf16.msra.mxu0 %v268
  %765 = vmatprep.subr.bf16.mxu0 0
  %766 = vmatpush1.bf16.msra.mxu0 %v269
  %767 = vmatprep.subr.bf16.mxu0 0
  %768 = vmatpush1.bf16.msra.mxu0 %v270
  %769 = vmatprep.subr.bf16.mxu0 0
  %770 = vmatpush1.bf16.msra.mxu0 %v271
  %771 = vmatprep.subr.bf16.mxu0 0
  %772 = vmatpush1.bf16.msra.mxu0 %v272
  %773 = vmatprep.subr.bf16.mxu0 0
  %774 = vmatpush1.bf16.msra.mxu0 %v273
  %775 = vmatprep.subr.bf16.mxu0 0
  %776 = vmatpush1.bf16.msra.mxu0 %v274
  %777 = vmatprep.subr.bf16.mxu0 0
  %778 = vmatpush1.bf16.msra.mxu0 0
  %779 = vmatprep.subr.bf16.mxu0 0
  %780 = vmatpush1.bf16.msra.mxu0 0
  %781 = vmatprep.subr.bf16.mxu0 0
  %782 = vmatpush1.bf16.msra.mxu0 0
  %783 = vmatprep.subr.bf16.mxu0 0
  %784 = vmatpush1.bf16.msra.mxu0 0
  %785 = vmatprep.subr.bf16.mxu0 0
  %786 = vmatpush1.bf16.msra.mxu0 0
  %787 = vmatprep.subr.bf16.mxu0 0
  %788 = vmatpush1.bf16.msra.mxu0 0
  %789 = vmatprep.subr.bf16.mxu0 0
  %790 = vmatpush1.bf16.msra.mxu0 0
  %791 = vmatprep.subr.bf16.mxu0 0
  %792 = vmatpush1.bf16.msra.mxu0 0
  %793 = vmatprep.mubr.bf16.mxu0 0
  %794 = vmatmul.mubr.bf16.gmra.mrb[0].mxu0 %v711
  %v795 = vpop.f32.mrb[0].mxu0
  %v796 = vadd.f32 %v85, %v795
  %v797 = vpop.f32.mrb[0].mxu0
  %v798 = vpop.f32.mrb[0].mxu0
  %v799 = vadd.f32 %v85, %v798
  %v800 = vpop.f32.mrb[0].mxu0
  %801 = vmatprep.mubr.bf16.mxu0 0
  %802 = vmatmul.mubr.bf16.gmra.mrb[0].mxu0 %v712
  %v803 = vpop.f32.mrb[0].mxu0
  %v804 = vadd.f32 %v85, %v803
  %v805 = vpop.f32.mrb[0].mxu0
  %v806 = vpop.f32.mrb[0].mxu0
  %v807 = vadd.f32 %v85, %v806
  %v808 = vpop.f32.mrb[0].mxu0
  %809 = vmatprep.mubr.bf16.mxu0 0
  %810 = vmatmul.mubr.bf16.gmra.mrb[0].mxu0 %v713
  %v811 = vpop.f32.mrb[0].mxu0
  %v812 = vadd.f32 %v85, %v811
  %v813 = vpop.f32.mrb[0].mxu0
  %v814 = vpop.f32.mrb[0].mxu0
  %v815 = vadd.f32 %v85, %v814
  %v816 = vpop.f32.mrb[0].mxu0
  %817 = vmatprep.mubr.bf16.mxu0 0
  %818 = vmatmul.mubr.bf16.gmra.mrb[0].mxu0 %v714
  %v819 = vpop.f32.mrb[0].mxu0
  %v820 = vadd.f32 %v85, %v819
  %v821 = vpop.f32.mrb[0].mxu0
  %v822 = vpop.f32.mrb[0].mxu0
  %v823 = vadd.f32 %v85, %v822
  %v824 = vpop.f32.mrb[0].mxu0
  %825 = vmatprep.mubr.bf16.mxu0 0
  %826 = vmatmul.mubr.bf16.gmra.mrb[0].mxu0 %v715
  %v827 = vpop.f32.mrb[0].mxu0
  %v828 = vadd.f32 %v85, %v827
  %v829 = vpop.f32.mrb[0].mxu0
  %v830 = vpop.f32.mrb[0].mxu0
  %v831 = vadd.f32 %v85, %v830
  %v832 = vpop.f32.mrb[0].mxu0
  %833 = vmatprep.mubr.bf16.mxu0 0
  %834 = vmatmul.mubr.bf16.gmra.mrb[0].mxu0 %v716
  %v835 = vpop.f32.mrb[0].mxu0
  %v836 = vadd.f32 %v85, %v835
  %v837 = vpop.f32.mrb[0].mxu0
  %v838 = vpop.f32.mrb[0].mxu0
  %v839 = vadd.f32 %v85, %v838
  %v840 = vpop.f32.mrb[0].mxu0
  %841 = vmatprep.mubr.bf16.mxu0 0
  %842 = vmatmul.mubr.bf16.gmra.mrb[0].mxu0 %v717
  %v843 = vpop.f32.mrb[0].mxu0
  %v844 = vadd.f32 %v85, %v843
  %v845 = vpop.f32.mrb[0].mxu0
  %v846 = vpop.f32.mrb[0].mxu0
  %v847 = vadd.f32 %v85, %v846
  %v848 = vpop.f32.mrb[0].mxu0
  %849 = vmatprep.mubr.bf16.mxu0 0
  %850 = vmatmul.mubr.bf16.gmra.mrb[0].mxu0 %v718
  %v851 = vpop.f32.mrb[0].mxu0
  %v852 = vadd.f32 %v85, %v851
  %v853 = vpop.f32.mrb[0].mxu0
  %v854 = vpop.f32.mrb[0].mxu0
  %v855 = vadd.f32 %v85, %v854
  %v856 = vpop.f32.mrb[0].mxu0
  %857 = vmatprep.mubr.bf16.mxu0 0
  %858 = vmatmul.mubr.bf16.gmra.mrb[0].mxu0 %v719
  %v859 = vpop.f32.mrb[0].mxu0
  %v860 = vadd.f32 %v85, %v859
  %v861 = vpop.f32.mrb[0].mxu0
  %v862 = vpop.f32.mrb[0].mxu0
  %v863 = vadd.f32 %v85, %v862
  %v864 = vpop.f32.mrb[0].mxu0
  %865 = vmatprep.mubr.bf16.mxu0 0
  %866 = vmatmul.mubr.bf16.gmra.mrb[0].mxu0 %v720
  %v867 = vpop.f32.mrb[0].mxu0
  %v868 = vadd.f32 %v85, %v867
  %v869 = vpop.f32.mrb[0].mxu0
  %v870 = vpop.f32.mrb[0].mxu0
  %v871 = vadd.f32 %v85, %v870
  %v872 = vpop.f32.mrb[0].mxu0
  %873 = vmatprep.mubr.bf16.mxu0 0
  %874 = vmatmul.mubr.bf16.gmra.mrb[0].mxu0 %v721
  %v875 = vpop.f32.mrb[0].mxu0
  %v876 = vadd.f32 %v85, %v875
  %v877 = vpop.f32.mrb[0].mxu0
  %v878 = vpop.f32.mrb[0].mxu0
  %v879 = vadd.f32 %v85, %v878
  %v880 = vpop.f32.mrb[0].mxu0
  %881 = vmatprep.mubr.bf16.mxu0 0
  %882 = vmatmul.mubr.bf16.gmra.mrb[0].mxu0 %v722
  %v883 = vpop.f32.mrb[0].mxu0
  %v884 = vadd.f32 %v85, %v883
  %v885 = vpop.f32.mrb[0].mxu0
  %v886 = vpop.f32.mrb[0].mxu0
  %v887 = vadd.f32 %v85, %v886
  %v888 = vpop.f32.mrb[0].mxu0
  %889 = vmatprep.mubr.bf16.mxu0 0
  %890 = vmatmul.mubr.bf16.gmra.mrb[0].mxu0 %v723
  %v891 = vpop.f32.mrb[0].mxu0
  %v892 = vadd.f32 %v85, %v891
  %v893 = vpop.f32.mrb[0].mxu0
  %v894 = vpop.f32.mrb[0].mxu0
  %v895 = vadd.f32 %v85, %v894
  %v896 = vpop.f32.mrb[0].mxu0
  %897 = vmatprep.mubr.bf16.mxu0 0
  %898 = vmatmul.mubr.bf16.gmra.mrb[0].mxu0 %v724
  %v899 = vpop.f32.mrb[0].mxu0
  %v900 = vadd.f32 %v85, %v899
  %v901 = vpop.f32.mrb[0].mxu0
  %v902 = vpop.f32.mrb[0].mxu0
  %v903 = vadd.f32 %v85, %v902
  %v904 = vpop.f32.mrb[0].mxu0
  %905 = vmatprep.mubr.bf16.mxu0 0
  %906 = vmatmul.mubr.bf16.gmra.mrb[0].mxu0 %v725
  %v907 = vpop.f32.mrb[0].mxu0
  %v908 = vadd.f32 %v85, %v907
  %v909 = vpop.f32.mrb[0].mxu0
  %v910 = vpop.f32.mrb[0].mxu0
  %v911 = vadd.f32 %v85, %v910
  %v912 = vpop.f32.mrb[0].mxu0
  %913 = vmatprep.mubr.bf16.mxu0 0
  %914 = vmatmul.mubr.bf16.gmra.mrb[0].mxu0 %v726
  %v915 = vpop.f32.mrb[0].mxu0
  %v916 = vadd.f32 %v85, %v915
  %v917 = vpop.f32.mrb[0].mxu0
  %v918 = vpop.f32.mrb[0].mxu0
  %v919 = vadd.f32 %v85, %v918
  %v920 = vpop.f32.mrb[0].mxu0
  %921 = vmatprep.mubr.bf16.mxu0 0
  %922 = vmatmul.mubr.bf16.gmra.mrb[0].mxu0 %v727
  %v923 = vpop.f32.mrb[0].mxu0
  %v924 = vadd.f32 %v85, %v923
  %v925 = vpop.f32.mrb[0].mxu0
  %v926 = vpop.f32.mrb[0].mxu0
  %v927 = vadd.f32 %v85, %v926
  %v928 = vpop.f32.mrb[0].mxu0
  %929 = vmatprep.mubr.bf16.mxu0 0
  %930 = vmatmul.mubr.bf16.gmra.mrb[0].mxu0 %v728
  %v931 = vpop.f32.mrb[0].mxu0
  %v932 = vadd.f32 %v85, %v931
  %v933 = vpop.f32.mrb[0].mxu0
  %v934 = vpop.f32.mrb[0].mxu0
  %v935 = vadd.f32 %v85, %v934
  %v936 = vpop.f32.mrb[0].mxu0
  %937 = vmatprep.mubr.bf16.mxu0 0
  %938 = vmatmul.mubr.bf16.gmra.mrb[0].mxu0 %v729
  %v939 = vpop.f32.mrb[0].mxu0
  %v940 = vadd.f32 %v85, %v939
  %v941 = vpop.f32.mrb[0].mxu0
  %v942 = vpop.f32.mrb[0].mxu0
  %v943 = vadd.f32 %v85, %v942
  %v944 = vpop.f32.mrb[0].mxu0
  %945 = vmatprep.mubr.bf16.mxu0 0
  %946 = vmatmul.mubr.bf16.gmra.mrb[0].mxu0 %v730
  %v947 = vpop.f32.mrb[0].mxu0
  %v948 = vadd.f32 %v85, %v947
  %v949 = vpop.f32.mrb[0].mxu0
  %v950 = vpop.f32.mrb[0].mxu0
  %v951 = vadd.f32 %v85, %v950
  %v952 = vpop.f32.mrb[0].mxu0
  %953 = vmatprep.mubr.bf16.mxu0 0
  %954 = vmatmul.mubr.bf16.gmra.mrb[0].mxu0 %v731
  %v955 = vpop.f32.mrb[0].mxu0
  %v956 = vadd.f32 %v85, %v955
  %v957 = vpop.f32.mrb[0].mxu0
  %v958 = vpop.f32.mrb[0].mxu0
  %v959 = vadd.f32 %v85, %v958
  %v960 = vpop.f32.mrb[0].mxu0
  %961 = vmatprep.mubr.bf16.mxu0 0
  %962 = vmatmul.mubr.bf16.gmra.mrb[0].mxu0 %v732
  %v963 = vpop.f32.mrb[0].mxu0
  %v964 = vadd.f32 %v85, %v963
  %v965 = vpop.f32.mrb[0].mxu0
  %v966 = vpop.f32.mrb[0].mxu0
  %v967 = vadd.f32 %v85, %v966
  %v968 = vpop.f32.mrb[0].mxu0
  %969 = vmatprep.mubr.bf16.mxu0 0
  %970 = vmatmul.mubr.bf16.gmra.mrb[0].mxu0 %v733
  %v971 = vpop.f32.mrb[0].mxu0
  %v972 = vadd.f32 %v85, %v971
  %v973 = vpop.f32.mrb[0].mxu0
  %v974 = vpop.f32.mrb[0].mxu0
  %v975 = vadd.f32 %v85, %v974
  %v976 = vpop.f32.mrb[0].mxu0
  %977 = vmatprep.mubr.bf16.mxu0 0
  %978 = vmatmul.mubr.bf16.gmra.mrb[0].mxu0 %v734
  %v979 = vpop.f32.mrb[0].mxu0
  %v980 = vadd.f32 %v85, %v979
  %v981 = vpop.f32.mrb[0].mxu0
  %v982 = vpop.f32.mrb[0].mxu0
  %v983 = vadd.f32 %v85, %v982
  %v984 = vpop.f32.mrb[0].mxu0
  %985 = vmatprep.mubr.bf16.mxu0 0
  %986 = vmatmul.mubr.bf16.gmra.mrb[0].mxu0 %v735
  %v987 = vpop.f32.mrb[0].mxu0
  %v988 = vadd.f32 %v85, %v987
  %v989 = vpop.f32.mrb[0].mxu0
  %v990 = vpop.f32.mrb[0].mxu0
  %v991 = vpop.f32.mrb[0].mxu0
  %992 = vdwg.mxu0
  %v993 = vmax.f32 %v796, 0.0
  %v994 = vmax.f32 %v799, 0.0
  %v995 = vmax.f32 %v804, 0.0
  %v996 = vmax.f32 %v807, 0.0
  %v997 = vmax.f32 %v812, 0.0
  %v998 = vmax.f32 %v815, 0.0
  %v999 = vmax.f32 %v820, 0.0
  %v1000 = vmax.f32 %v823, 0.0
  %v1001 = vmax.f32 %v828, 0.0
  %v1002 = vmax.f32 %v831, 0.0
  %v1003 = vmax.f32 %v836, 0.0
  %v1004 = vmax.f32 %v839, 0.0
  %v1005 = vmax.f32 %v844, 0.0
  %v1006 = vmax.f32 %v847, 0.0
  %v1007 = vmax.f32 %v852, 0.0
  %v1008 = vmax.f32 %v855, 0.0
  %v1009 = vmax.f32 %v860, 0.0
  %v1010 = vmax.f32 %v863, 0.0
  %v1011 = vmax.f32 %v868, 0.0
  %v1012 = vmax.f32 %v871, 0.0
  %v1013 = vmax.f32 %v876, 0.0
  %v1014 = vmax.f32 %v879, 0.0
  %v1015 = vmax.f32 %v884, 0.0
  %v1016 = vmax.f32 %v887, 0.0
  %v1017 = vmax.f32 %v892, 0.0
  %v1018 = vmax.f32 %v895, 0.0
  %v1019 = vmax.f32 %v900, 0.0
  %v1020 = vmax.f32 %v903, 0.0
  %v1021 = vmax.f32 %v908, 0.0
  %v1022 = vmax.f32 %v911, 0.0
  %v1023 = vmax.f32 %v916, 0.0
  %v1024 = vmax.f32 %v919, 0.0
  %v1025 = vmax.f32 %v924, 0.0
  %v1026 = vmax.f32 %v927, 0.0
  %v1027 = vmax.f32 %v932, 0.0
  %v1028 = vmax.f32 %v935, 0.0
  %v1029 = vmax.f32 %v940, 0.0
  %v1030 = vmax.f32 %v943, 0.0
  %v1031 = vmax.f32 %v948, 0.0
  %v1032 = vmax.f32 %v951, 0.0
  %v1033 = vmax.f32 %v956, 0.0
  %v1034 = vmax.f32 %v959, 0.0
  %v1035 = vmax.f32 %v964, 0.0
  %v1036 = vmax.f32 %v967, 0.0
  %v1037 = vmax.f32 %v972, 0.0
  %v1038 = vmax.f32 %v975, 0.0
  %v1039 = vmax.f32 %v980, 0.0
  %v1040 = vmax.f32 %v983, 0.0
  %v1041 = vmax.f32 %v988, 0.0
  %v1042 = vmax.f32 %v515, %v993
  %v1043 = vmax.f32 %v516, %v994
  %v1044 = vmax.f32 %v517, %v995
  %v1045 = vmax.f32 %v518, %v996
  %v1046 = vmax.f32 %v519, %v997
  %v1047 = vmax.f32 %v520, %v998
  %v1048 = vmax.f32 %v521, %v999
  %v1049 = vmax.f32 %v522, %v1000
  %v1050 = vmax.f32 %v523, %v1001
  %v1051 = vmax.f32 %v524, %v1002
  %v1052 = vmax.f32 %v525, %v1003
  %v1053 = vmax.f32 %v526, %v1004
  %v1054 = vmax.f32 %v527, %v1005
  %v1055 = vmax.f32 %v528, %v1006
  %v1056 = vmax.f32 %v529, %v1007
  %v1057 = vmax.f32 %v530, %v1008
  %v1058 = vmax.f32 %v531, %v1009
  %v1059 = vmax.f32 %v532, %v1010
  %v1060 = vmax.f32 %v533, %v1011
  %v1061 = vmax.f32 %v534, %v1012
  %v1062 = vmax.f32 %v535, %v1013
  %v1063 = vmax.f32 %v536, %v1014
  %v1064 = vmax.f32 %v537, %v1015
  %v1065 = vmax.f32 %v538, %v1016
  %v1066 = vmax.f32 %v539, %v1017
  %v1067 = vmax.f32 %v540, %v1018
  %v1068 = vmax.f32 %v541, %v1019
  %v1069 = vmax.f32 %v542, %v1020
  %v1070 = vmax.f32 %v543, %v1021
  %v1071 = vmax.f32 %v544, %v1022
  %v1072 = vmax.f32 %v545, %v1023
  %v1073 = vmax.f32 %v546, %v1024
  %v1074 = vmax.f32 %v547, %v1025
  %v1075 = vmax.f32 %v548, %v1026
  %v1076 = vmax.f32 %v549, %v1027
  %v1077 = vmax.f32 %v550, %v1028
  %v1078 = vmax.f32 %v551, %v1029
  %v1079 = vmax.f32 %v552, %v1030
  %v1080 = vmax.f32 %v553, %v1031
  %v1081 = vmax.f32 %v554, %v1032
  %v1082 = vmax.f32 %v555, %v1033
  %v1083 = vmax.f32 %v556, %v1034
  %v1084 = vmax.f32 %v557, %v1035
  %v1085 = vmax.f32 %v558, %v1036
  %v1086 = vmax.f32 %v559, %v1037
  %v1087 = vmax.f32 %v560, %v1038
  %v1088 = vmax.f32 %v561, %v1039
  %v1089 = vmax.f32 %v562, %v1040
  %v1090 = vmax.f32 %v563, %v1041
  %v1091 = vld [vmem:[%s0 + $0x188] sm:$0xf]
  %v1092 = vld [vmem:[%s0 + $0x18c] sm:$0xf]
  %v1093 = vld [vmem:[%s0 + $0x190] sm:$0xf]
  %v1094 = vld [vmem:[%s0 + $0x194] sm:$0xf]
  %v1095 = vld [vmem:[%s0 + $0x198] sm:$0xf]
  %v1096 = vld [vmem:[%s0 + $0x19c] sm:$0xf]
  %v1097 = vld [vmem:[%s0 + $0x1a0] sm:$0xf]
  %v1098 = vld [vmem:[%s0 + $0x1a4] sm:$0xf]
  %v1099 = vld [vmem:[%s0 + $0x1a8] sm:$0xf]
  %v1100 = vld [vmem:[%s0 + $0x1ac] sm:$0xf]
  %v1101 = vld [vmem:[%s0 + $0x1b0] sm:$0xf]
  %v1102 = vld [vmem:[%s0 + $0x1b4] sm:$0xf]
  %v1103 = vld [vmem:[%s0 + $0x1b8] sm:$0xf]
  %v1104 = vld [vmem:[%s0 + $0x1bc] sm:$0xf]
  %v1105 = vld [vmem:[%s0 + $0x1c0] sm:$0xf]
  %v1106 = vld [vmem:[%s0 + $0x1c4] sm:$0xf]
  %v1107 = vld [vmem:[%s0 + $0x1c8] sm:$0xf]
  %v1108 = vld [vmem:[%s0 + $0x1cc] sm:$0xf]
  %v1109 = vld [vmem:[%s0 + $0x1d0] sm:$0xf]
  %v1110 = vld [vmem:[%s0 + $0x1d4] sm:$0xf]
  %v1111 = vld [vmem:[%s0 + $0x1d8] sm:$0xf]
  %v1112 = vld [vmem:[%s0 + $0x1dc] sm:$0xf]
  %v1113 = vld [vmem:[%s0 + $0x1e0] sm:$0xf]
  %v1114 = vld [vmem:[%s0 + $0x1e4] sm:$0xf]
  %v1115 = vld [vmem:[%s0 + $0x1e8] sm:$0xf]
  %v1116 = vld [vmem:[%s0 + $0x1ec] sm:$0xf]
  %v1117 = vld [vmem:[%s0 + $0x1f0] sm:$0xf]
  %v1118 = vld [vmem:[%s0 + $0x1f4] sm:$0xf]
  %v1119 = vld [vmem:[%s0 + $0x1f8] sm:$0xf]
  %v1120 = vld [vmem:[%s0 + $0x1fc] sm:$0xf]
  %v1121 = vld [vmem:[%s0 + $0x200] sm:$0xf]
  %v1122 = vld [vmem:[%s0 + $0x204] sm:$0xf]
  %v1123 = vld [vmem:[%s0 + $0x208] sm:$0xf]
  %v1124 = vld [vmem:[%s0 + $0x20c] sm:$0xf]
  %v1125 = vld [vmem:[%s0 + $0x210] sm:$0xf]
  %v1126 = vld [vmem:[%s0 + $0x214] sm:$0xf]
  %v1127 = vld [vmem:[%s0 + $0x218] sm:$0xf]
  %v1128 = vld [vmem:[%s0 + $0x21c] sm:$0xf]
  %v1129 = vld [vmem:[%s0 + $0x220] sm:$0xf]
  %v1130 = vld [vmem:[%s0 + $0x224] sm:$0xf]
  %v1131 = vld [vmem:[%s0 + $0x228] sm:$0xf]
  %v1132 = vld [vmem:[%s0 + $0x22c] sm:$0xf]
  %v1133 = vld [vmem:[%s0 + $0x230] sm:$0xf]
  %v1134 = vld [vmem:[%s0 + $0x234] sm:$0xf]
  %v1135 = vld [vmem:[%s0 + $0x238] sm:$0xf]
  %v1136 = vld [vmem:[%s0 + $0x23c] sm:$0xf]
  %v1137 = vld [vmem:[%s0 + $0x240] sm:$0xf]
  %v1138 = vld [vmem:[%s0 + $0x244] sm:$0xf]
  %v1139 = vld [vmem:[%s0 + $0x248] sm:$0xf]
  %v1189 = vunpack.c.l.b16 %v1091
  %v1190 = vunpack.c.l.b16 %v1092
  %v1191 = vunpack.c.l.b16 %v1093
  %v1192 = vunpack.c.l.b16 %v1094
  %v1193 = vunpack.c.l.b16 %v1095
  %v1194 = vunpack.c.l.b16 %v1096
  %v1195 = vunpack.c.l.b16 %v1097
  %v1196 = vunpack.c.l.b16 %v1098
  %v1197 = vunpack.c.l.b16 %v1099
  %v1198 = vunpack.c.l.b16 %v1100
  %v1199 = vunpack.c.l.b16 %v1101
  %v1200 = vunpack.c.l.b16 %v1102
  %v1201 = vunpack.c.l.b16 %v1103
  %v1202 = vunpack.c.l.b16 %v1104
  %v1203 = vunpack.c.l.b16 %v1105
  %v1204 = vunpack.c.l.b16 %v1106
  %v1205 = vunpack.c.l.b16 %v1107
  %v1206 = vunpack.c.l.b16 %v1108
  %v1207 = vunpack.c.l.b16 %v1109
  %v1208 = vunpack.c.l.b16 %v1110
  %v1209 = vunpack.c.l.b16 %v1111
  %v1210 = vunpack.c.l.b16 %v1112
  %v1211 = vunpack.c.l.b16 %v1113
  %v1212 = vunpack.c.l.b16 %v1114
  %v1213 = vunpack.c.l.b16 %v1115
  %v1214 = vunpack.c.l.b16 %v1116
  %v1215 = vunpack.c.l.b16 %v1117
  %v1216 = vunpack.c.l.b16 %v1118
  %v1217 = vunpack.c.l.b16 %v1119
  %v1218 = vunpack.c.l.b16 %v1120
  %v1219 = vunpack.c.l.b16 %v1121
  %v1220 = vunpack.c.l.b16 %v1122
  %v1221 = vunpack.c.l.b16 %v1123
  %v1222 = vunpack.c.l.b16 %v1124
  %v1223 = vunpack.c.l.b16 %v1125
  %v1224 = vunpack.c.l.b16 %v1126
  %v1225 = vunpack.c.l.b16 %v1127
  %v1226 = vunpack.c.l.b16 %v1128
  %v1227 = vunpack.c.l.b16 %v1129
  %v1228 = vunpack.c.l.b16 %v1130
  %v1229 = vunpack.c.l.b16 %v1131
  %v1230 = vunpack.c.l.b16 %v1132
  %v1231 = vunpack.c.l.b16 %v1133
  %v1232 = vunpack.c.l.b16 %v1134
  %v1233 = vunpack.c.l.b16 %v1135
  %v1234 = vunpack.c.l.b16 %v1136
  %v1235 = vunpack.c.l.b16 %v1137
  %v1236 = vunpack.c.l.b16 %v1138
  %v1237 = vunpack.c.l.b16 %v1139
  %v1238 = vpack.c.b16 %v1190, %v1189
  %v1239 = vpack.c.b16 %v1192, %v1191
  %v1240 = vpack.c.b16 %v1194, %v1193
  %v1241 = vpack.c.b16 %v1196, %v1195
  %v1242 = vpack.c.b16 %v1198, %v1197
  %v1243 = vpack.c.b16 %v1200, %v1199
  %v1244 = vpack.c.b16 %v1202, %v1201
  %v1245 = vpack.c.b16 %v1204, %v1203
  %v1246 = vpack.c.b16 %v1206, %v1205
  %v1247 = vpack.c.b16 %v1208, %v1207
  %v1248 = vpack.c.b16 %v1210, %v1209
  %v1249 = vpack.c.b16 %v1212, %v1211
  %v1250 = vpack.c.b16 %v1214, %v1213
  %v1251 = vpack.c.b16 %v1216, %v1215
  %v1252 = vpack.c.b16 %v1218, %v1217
  %v1253 = vpack.c.b16 %v1220, %v1219
  %v1254 = vpack.c.b16 %v1222, %v1221
  %v1255 = vpack.c.b16 %v1224, %v1223
  %v1256 = vpack.c.b16 %v1226, %v1225
  %v1257 = vpack.c.b16 %v1228, %v1227
  %v1258 = vpack.c.b16 %v1230, %v1229
  %v1259 = vpack.c.b16 %v1232, %v1231
  %v1260 = vpack.c.b16 %v1234, %v1233
  %v1261 = vpack.c.b16 %v1236, %v1235
  %v1262 = vpack.c.b16 %v1237, %v1237
  %1288 = vmatprep.subr.bf16.mxu0 0
  %1289 = vmatpush1.bf16.msra.mxu0 %v267
  %1290 = vmatprep.subr.bf16.mxu0 0
  %1291 = vmatpush1.bf16.msra.mxu0 %v268
  %1292 = vmatprep.subr.bf16.mxu0 0
  %1293 = vmatpush1.bf16.msra.mxu0 %v269
  %1294 = vmatprep.subr.bf16.mxu0 0
  %1295 = vmatpush1.bf16.msra.mxu0 %v270
  %1296 = vmatprep.subr.bf16.mxu0 0
  %1297 = vmatpush1.bf16.msra.mxu0 %v271
  %1298 = vmatprep.subr.bf16.mxu0 0
  %1299 = vmatpush1.bf16.msra.mxu0 %v272
  %1300 = vmatprep.subr.bf16.mxu0 0
  %1301 = vmatpush1.bf16.msra.mxu0 %v273
  %1302 = vmatprep.subr.bf16.mxu0 0
  %1303 = vmatpush1.bf16.msra.mxu0 %v274
  %1304 = vmatprep.subr.bf16.mxu0 0
  %1305 = vmatpush1.bf16.msra.mxu0 0
  %1306 = vmatprep.subr.bf16.mxu0 0
  %1307 = vmatpush1.bf16.msra.mxu0 0
  %1308 = vmatprep.subr.bf16.mxu0 0
  %1309 = vmatpush1.bf16.msra.mxu0 0
  %1310 = vmatprep.subr.bf16.mxu0 0
  %1311 = vmatpush1.bf16.msra.mxu0 0
  %1312 = vmatprep.subr.bf16.mxu0 0
  %1313 = vmatpush1.bf16.msra.mxu0 0
  %1314 = vmatprep.subr.bf16.mxu0 0
  %1315 = vmatpush1.bf16.msra.mxu0 0
  %1316 = vmatprep.subr.bf16.mxu0 0
  %1317 = vmatpush1.bf16.msra.mxu0 0
  %1318 = vmatprep.subr.bf16.mxu0 0
  %1319 = vmatpush1.bf16.msra.mxu0 0
  %1320 = vmatprep.mubr.bf16.mxu0 0
  %1321 = vmatmul.mubr.bf16.gmra.mrb[0].mxu0 %v1238
  %v1322 = vpop.f32.mrb[0].mxu0
  %v1323 = vadd.f32 %v85, %v1322
  %v1324 = vpop.f32.mrb[0].mxu0
  %v1325 = vpop.f32.mrb[0].mxu0
  %v1326 = vadd.f32 %v85, %v1325
  %v1327 = vpop.f32.mrb[0].mxu0
  %1328 = vmatprep.mubr.bf16.mxu0 0
  %1329 = vmatmul.mubr.bf16.gmra.mrb[0].mxu0 %v1239
  %v1330 = vpop.f32.mrb[0].mxu0
  %v1331 = vadd.f32 %v85, %v1330
  %v1332 = vpop.f32.mrb[0].mxu0
  %v1333 = vpop.f32.mrb[0].mxu0
  %v1334 = vadd.f32 %v85, %v1333
  %v1335 = vpop.f32.mrb[0].mxu0
  %1336 = vmatprep.mubr.bf16.mxu0 0
  %1337 = vmatmul.mubr.bf16.gmra.mrb[0].mxu0 %v1240
  %v1338 = vpop.f32.mrb[0].mxu0
  %v1339 = vadd.f32 %v85, %v1338
  %v1340 = vpop.f32.mrb[0].mxu0
  %v1341 = vpop.f32.mrb[0].mxu0
  %v1342 = vadd.f32 %v85, %v1341
  %v1343 = vpop.f32.mrb[0].mxu0
  %1344 = vmatprep.mubr.bf16.mxu0 0
  %1345 = vmatmul.mubr.bf16.gmra.mrb[0].mxu0 %v1241
  %v1346 = vpop.f32.mrb[0].mxu0
  %v1347 = vadd.f32 %v85, %v1346
  %v1348 = vpop.f32.mrb[0].mxu0
  %v1349 = vpop.f32.mrb[0].mxu0
  %v1350 = vadd.f32 %v85, %v1349
  %v1351 = vpop.f32.mrb[0].mxu0
  %1352 = vmatprep.mubr.bf16.mxu0 0
  %1353 = vmatmul.mubr.bf16.gmra.mrb[0].mxu0 %v1242
  %v1354 = vpop.f32.mrb[0].mxu0
  %v1355 = vadd.f32 %v85, %v1354
  %v1356 = vpop.f32.mrb[0].mxu0
  %v1357 = vpop.f32.mrb[0].mxu0
  %v1358 = vadd.f32 %v85, %v1357
  %v1359 = vpop.f32.mrb[0].mxu0
  %1360 = vmatprep.mubr.bf16.mxu0 0
  %1361 = vmatmul.mubr.bf16.gmra.mrb[0].mxu0 %v1243
  %v1362 = vpop.f32.mrb[0].mxu0
  %v1363 = vadd.f32 %v85, %v1362
  %v1364 = vpop.f32.mrb[0].mxu0
  %v1365 = vpop.f32.mrb[0].mxu0
  %v1366 = vadd.f32 %v85, %v1365
  %v1367 = vpop.f32.mrb[0].mxu0
  %1368 = vmatprep.mubr.bf16.mxu0 0
  %1369 = vmatmul.mubr.bf16.gmra.mrb[0].mxu0 %v1244
  %v1370 = vpop.f32.mrb[0].mxu0
  %v1371 = vadd.f32 %v85, %v1370
  %v1372 = vpop.f32.mrb[0].mxu0
  %v1373 = vpop.f32.mrb[0].mxu0
  %v1374 = vadd.f32 %v85, %v1373
  %v1375 = vpop.f32.mrb[0].mxu0
  %1376 = vmatprep.mubr.bf16.mxu0 0
  %1377 = vmatmul.mubr.bf16.gmra.mrb[0].mxu0 %v1245
  %v1378 = vpop.f32.mrb[0].mxu0
  %v1379 = vadd.f32 %v85, %v1378
  %v1380 = vpop.f32.mrb[0].mxu0
  %v1381 = vpop.f32.mrb[0].mxu0
  %v1382 = vadd.f32 %v85, %v1381
  %v1383 = vpop.f32.mrb[0].mxu0
  %1384 = vmatprep.mubr.bf16.mxu0 0
  %1385 = vmatmul.mubr.bf16.gmra.mrb[0].mxu0 %v1246
  %v1386 = vpop.f32.mrb[0].mxu0
  %v1387 = vadd.f32 %v85, %v1386
  %v1388 = vpop.f32.mrb[0].mxu0
  %v1389 = vpop.f32.mrb[0].mxu0
  %v1390 = vadd.f32 %v85, %v1389
  %v1391 = vpop.f32.mrb[0].mxu0
  %1392 = vmatprep.mubr.bf16.mxu0 0
  %1393 = vmatmul.mubr.bf16.gmra.mrb[0].mxu0 %v1247
  %v1394 = vpop.f32.mrb[0].mxu0
  %v1395 = vadd.f32 %v85, %v1394
  %v1396 = vpop.f32.mrb[0].mxu0
  %v1397 = vpop.f32.mrb[0].mxu0
  %v1398 = vadd.f32 %v85, %v1397
  %v1399 = vpop.f32.mrb[0].mxu0
  %1400 = vmatprep.mubr.bf16.mxu0 0
  %1401 = vmatmul.mubr.bf16.gmra.mrb[0].mxu0 %v1248
  %v1402 = vpop.f32.mrb[0].mxu0
  %v1403 = vadd.f32 %v85, %v1402
  %v1404 = vpop.f32.mrb[0].mxu0
  %v1405 = vpop.f32.mrb[0].mxu0
  %v1406 = vadd.f32 %v85, %v1405
  %v1407 = vpop.f32.mrb[0].mxu0
  %1408 = vmatprep.mubr.bf16.mxu0 0
  %1409 = vmatmul.mubr.bf16.gmra.mrb[0].mxu0 %v1249
  %v1410 = vpop.f32.mrb[0].mxu0
  %v1411 = vadd.f32 %v85, %v1410
  %v1412 = vpop.f32.mrb[0].mxu0
  %v1413 = vpop.f32.mrb[0].mxu0
  %v1414 = vadd.f32 %v85, %v1413
  %v1415 = vpop.f32.mrb[0].mxu0
  %1416 = vmatprep.mubr.bf16.mxu0 0
  %1417 = vmatmul.mubr.bf16.gmra.mrb[0].mxu0 %v1250
  %v1418 = vpop.f32.mrb[0].mxu0
  %v1419 = vadd.f32 %v85, %v1418
  %v1420 = vpop.f32.mrb[0].mxu0
  %v1421 = vpop.f32.mrb[0].mxu0
  %v1422 = vadd.f32 %v85, %v1421
  %v1423 = vpop.f32.mrb[0].mxu0
  %1424 = vmatprep.mubr.bf16.mxu0 0
  %1425 = vmatmul.mubr.bf16.gmra.mrb[0].mxu0 %v1251
  %v1426 = vpop.f32.mrb[0].mxu0
  %v1427 = vadd.f32 %v85, %v1426
  %v1428 = vpop.f32.mrb[0].mxu0
  %v1429 = vpop.f32.mrb[0].mxu0
  %v1430 = vadd.f32 %v85, %v1429
  %v1431 = vpop.f32.mrb[0].mxu0
  %1432 = vmatprep.mubr.bf16.mxu0 0
  %1433 = vmatmul.mubr.bf16.gmra.mrb[0].mxu0 %v1252
  %v1434 = vpop.f32.mrb[0].mxu0
  %v1435 = vadd.f32 %v85, %v1434
  %v1436 = vpop.f32.mrb[0].mxu0
  %v1437 = vpop.f32.mrb[0].mxu0
  %v1438 = vadd.f32 %v85, %v1437
  %v1439 = vpop.f32.mrb[0].mxu0
  %1440 = vmatprep.mubr.bf16.mxu0 0
  %1441 = vmatmul.mubr.bf16.gmra.mrb[0].mxu0 %v1253
  %v1442 = vpop.f32.mrb[0].mxu0
  %v1443 = vadd.f32 %v85, %v1442
  %v1444 = vpop.f32.mrb[0].mxu0
  %v1445 = vpop.f32.mrb[0].mxu0
  %v1446 = vadd.f32 %v85, %v1445
  %v1447 = vpop.f32.mrb[0].mxu0
  %1448 = vmatprep.mubr.bf16.mxu0 0
  %1449 = vmatmul.mubr.bf16.gmra.mrb[0].mxu0 %v1254
  %v1450 = vpop.f32.mrb[0].mxu0
  %v1451 = vadd.f32 %v85, %v1450
  %v1452 = vpop.f32.mrb[0].mxu0
  %v1453 = vpop.f32.mrb[0].mxu0
  %v1454 = vadd.f32 %v85, %v1453
  %v1455 = vpop.f32.mrb[0].mxu0
  %1456 = vmatprep.mubr.bf16.mxu0 0
  %1457 = vmatmul.mubr.bf16.gmra.mrb[0].mxu0 %v1255
  %v1458 = vpop.f32.mrb[0].mxu0
  %v1459 = vadd.f32 %v85, %v1458
  %v1460 = vpop.f32.mrb[0].mxu0
  %v1461 = vpop.f32.mrb[0].mxu0
  %v1462 = vadd.f32 %v85, %v1461
  %v1463 = vpop.f32.mrb[0].mxu0
  %1464 = vmatprep.mubr.bf16.mxu0 0
  %1465 = vmatmul.mubr.bf16.gmra.mrb[0].mxu0 %v1256
  %v1466 = vpop.f32.mrb[0].mxu0
  %v1467 = vadd.f32 %v85, %v1466
  %v1468 = vpop.f32.mrb[0].mxu0
  %v1469 = vpop.f32.mrb[0].mxu0
  %v1470 = vadd.f32 %v85, %v1469
  %v1471 = vpop.f32.mrb[0].mxu0
  %1472 = vmatprep.mubr.bf16.mxu0 0
  %1473 = vmatmul.mubr.bf16.gmra.mrb[0].mxu0 %v1257
  %v1474 = vpop.f32.mrb[0].mxu0
  %v1475 = vadd.f32 %v85, %v1474
  %v1476 = vpop.f32.mrb[0].mxu0
  %v1477 = vpop.f32.mrb[0].mxu0
  %v1478 = vadd.f32 %v85, %v1477
  %v1479 = vpop.f32.mrb[0].mxu0
  %1480 = vmatprep.mubr.bf16.mxu0 0
  %1481 = vmatmul.mubr.bf16.gmra.mrb[0].mxu0 %v1258
  %v1482 = vpop.f32.mrb[0].mxu0
  %v1483 = vadd.f32 %v85, %v1482
  %v1484 = vpop.f32.mrb[0].mxu0
  %v1485 = vpop.f32.mrb[0].mxu0
  %v1486 = vadd.f32 %v85, %v1485
  %v1487 = vpop.f32.mrb[0].mxu0
  %1488 = vmatprep.mubr.bf16.mxu0 0
  %1489 = vmatmul.mubr.bf16.gmra.mrb[0].mxu0 %v1259
  %v1490 = vpop.f32.mrb[0].mxu0
  %v1491 = vadd.f32 %v85, %v1490
  %v1492 = vpop.f32.mrb[0].mxu0
  %v1493 = vpop.f32.mrb[0].mxu0
  %v1494 = vadd.f32 %v85, %v1493
  %v1495 = vpop.f32.mrb[0].mxu0
  %1496 = vmatprep.mubr.bf16.mxu0 0
  %1497 = vmatmul.mubr.bf16.gmra.mrb[0].mxu0 %v1260
  %v1498 = vpop.f32.mrb[0].mxu0
  %v1499 = vadd.f32 %v85, %v1498
  %v1500 = vpop.f32.mrb[0].mxu0
  %v1501 = vpop.f32.mrb[0].mxu0
  %v1502 = vadd.f32 %v85, %v1501
  %v1503 = vpop.f32.mrb[0].mxu0
  %1504 = vmatprep.mubr.bf16.mxu0 0
  %1505 = vmatmul.mubr.bf16.gmra.mrb[0].mxu0 %v1261
  %v1506 = vpop.f32.mrb[0].mxu0
  %v1507 = vadd.f32 %v85, %v1506
  %v1508 = vpop.f32.mrb[0].mxu0
  %v1509 = vpop.f32.mrb[0].mxu0
  %v1510 = vadd.f32 %v85, %v1509
  %v1511 = vpop.f32.mrb[0].mxu0
  %1512 = vmatprep.mubr.bf16.mxu0 0
  %1513 = vmatmul.mubr.bf16.gmra.mrb[0].mxu0 %v1262
  %v1514 = vpop.f32.mrb[0].mxu0
  %v1515 = vadd.f32 %v85, %v1514
  %v1516 = vpop.f32.mrb[0].mxu0
  %v1517 = vpop.f32.mrb[0].mxu0
  %v1518 = vpop.f32.mrb[0].mxu0
  %1519 = vdwg.mxu0
  %v1520 = vmax.f32 %v1323, 0.0
  %v1521 = vmax.f32 %v1326, 0.0
  %v1522 = vmax.f32 %v1331, 0.0
  %v1523 = vmax.f32 %v1334, 0.0
  %v1524 = vmax.f32 %v1339, 0.0
  %v1525 = vmax.f32 %v1342, 0.0
  %v1526 = vmax.f32 %v1347, 0.0
  %v1527 = vmax.f32 %v1350, 0.0
  %v1528 = vmax.f32 %v1355, 0.0
  %v1529 = vmax.f32 %v1358, 0.0
  %v1530 = vmax.f32 %v1363, 0.0
  %v1531 = vmax.f32 %v1366, 0.0
  %v1532 = vmax.f32 %v1371, 0.0
  %v1533 = vmax.f32 %v1374, 0.0
  %v1534 = vmax.f32 %v1379, 0.0
  %v1535 = vmax.f32 %v1382, 0.0
  %v1536 = vmax.f32 %v1387, 0.0
  %v1537 = vmax.f32 %v1390, 0.0
  %v1538 = vmax.f32 %v1395, 0.0
  %v1539 = vmax.f32 %v1398, 0.0
  %v1540 = vmax.f32 %v1403, 0.0
  %v1541 = vmax.f32 %v1406, 0.0
  %v1542 = vmax.f32 %v1411, 0.0
  %v1543 = vmax.f32 %v1414, 0.0
  %v1544 = vmax.f32 %v1419, 0.0
  %v1545 = vmax.f32 %v1422, 0.0
  %v1546 = vmax.f32 %v1427, 0.0
  %v1547 = vmax.f32 %v1430, 0.0
  %v1548 = vmax.f32 %v1435, 0.0
  %v1549 = vmax.f32 %v1438, 0.0
  %v1550 = vmax.f32 %v1443, 0.0
  %v1551 = vmax.f32 %v1446, 0.0
  %v1552 = vmax.f32 %v1451, 0.0
  %v1553 = vmax.f32 %v1454, 0.0
  %v1554 = vmax.f32 %v1459, 0.0
  %v1555 = vmax.f32 %v1462, 0.0
  %v1556 = vmax.f32 %v1467, 0.0
  %v1557 = vmax.f32 %v1470, 0.0
  %v1558 = vmax.f32 %v1475, 0.0
  %v1559 = vmax.f32 %v1478, 0.0
  %v1560 = vmax.f32 %v1483, 0.0
  %v1561 = vmax.f32 %v1486, 0.0
  %v1562 = vmax.f32 %v1491, 0.0
  %v1563 = vmax.f32 %v1494, 0.0
  %v1564 = vmax.f32 %v1499, 0.0
  %v1565 = vmax.f32 %v1502, 0.0
  %v1566 = vmax.f32 %v1507, 0.0
  %v1567 = vmax.f32 %v1510, 0.0
  %v1568 = vmax.f32 %v1515, 0.0
  %v1569 = vmax.f32 %v1042, %v1520
  %v1570 = vmax.f32 %v1043, %v1521
  %v1571 = vmax.f32 %v1044, %v1522
  %v1572 = vmax.f32 %v1045, %v1523
  %v1573 = vmax.f32 %v1046, %v1524
  %v1574 = vmax.f32 %v1047, %v1525
  %v1575 = vmax.f32 %v1048, %v1526
  %v1576 = vmax.f32 %v1049, %v1527
  %v1577 = vmax.f32 %v1050, %v1528
  %v1578 = vmax.f32 %v1051, %v1529
  %v1579 = vmax.f32 %v1052, %v1530
  %v1580 = vmax.f32 %v1053, %v1531
  %v1581 = vmax.f32 %v1054, %v1532
  %v1582 = vmax.f32 %v1055, %v1533
  %v1583 = vmax.f32 %v1056, %v1534
  %v1584 = vmax.f32 %v1057, %v1535
  %v1585 = vmax.f32 %v1058, %v1536
  %v1586 = vmax.f32 %v1059, %v1537
  %v1587 = vmax.f32 %v1060, %v1538
  %v1588 = vmax.f32 %v1061, %v1539
  %v1589 = vmax.f32 %v1062, %v1540
  %v1590 = vmax.f32 %v1063, %v1541
  %v1591 = vmax.f32 %v1064, %v1542
  %v1592 = vmax.f32 %v1065, %v1543
  %v1593 = vmax.f32 %v1066, %v1544
  %v1594 = vmax.f32 %v1067, %v1545
  %v1595 = vmax.f32 %v1068, %v1546
  %v1596 = vmax.f32 %v1069, %v1547
  %v1597 = vmax.f32 %v1070, %v1548
  %v1598 = vmax.f32 %v1071, %v1549
  %v1599 = vmax.f32 %v1072, %v1550
  %v1600 = vmax.f32 %v1073, %v1551
  %v1601 = vmax.f32 %v1074, %v1552
  %v1602 = vmax.f32 %v1075, %v1553
  %v1603 = vmax.f32 %v1076, %v1554
  %v1604 = vmax.f32 %v1077, %v1555
  %v1605 = vmax.f32 %v1078, %v1556
  %v1606 = vmax.f32 %v1079, %v1557
  %v1607 = vmax.f32 %v1080, %v1558
  %v1608 = vmax.f32 %v1081, %v1559
  %v1609 = vmax.f32 %v1082, %v1560
  %v1610 = vmax.f32 %v1083, %v1561
  %v1611 = vmax.f32 %v1084, %v1562
  %v1612 = vmax.f32 %v1085, %v1563
  %v1613 = vmax.f32 %v1086, %v1564
  %v1614 = vmax.f32 %v1087, %v1565
  %v1615 = vmax.f32 %v1088, %v1566
  %v1616 = vmax.f32 %v1089, %v1567
  %v1617 = vmax.f32 %v1090, %v1568
  %v1618 = vld [vmem:[%s0 + $0x24c] sm:$0xf]
  %v1619 = vld [vmem:[%s0 + $0x250] sm:$0xf]
  %v1620 = vld [vmem:[%s0 + $0x254] sm:$0xf]
  %v1621 = vld [vmem:[%s0 + $0x258] sm:$0xf]
  %v1622 = vld [vmem:[%s0 + $0x25c] sm:$0xf]
  %v1623 = vld [vmem:[%s0 + $0x260] sm:$0xf]
  %v1624 = vld [vmem:[%s0 + $0x264] sm:$0xf]
  %v1625 = vld [vmem:[%s0 + $0x268] sm:$0xf]
  %v1626 = vld [vmem:[%s0 + $0x26c] sm:$0xf]
  %v1627 = vld [vmem:[%s0 + $0x270] sm:$0xf]
  %v1628 = vld [vmem:[%s0 + $0x274] sm:$0xf]
  %v1629 = vld [vmem:[%s0 + $0x278] sm:$0xf]
  %v1630 = vld [vmem:[%s0 + $0x27c] sm:$0xf]
  %v1631 = vld [vmem:[%s0 + $0x280] sm:$0xf]
  %v1632 = vld [vmem:[%s0 + $0x284] sm:$0xf]
  %v1633 = vld [vmem:[%s0 + $0x288] sm:$0xf]
  %v1634 = vld [vmem:[%s0 + $0x28c] sm:$0xf]
  %v1635 = vld [vmem:[%s0 + $0x290] sm:$0xf]
  %v1636 = vld [vmem:[%s0 + $0x294] sm:$0xf]
  %v1637 = vld [vmem:[%s0 + $0x298] sm:$0xf]
  %v1638 = vld [vmem:[%s0 + $0x29c] sm:$0xf]
  %v1639 = vld [vmem:[%s0 + $0x2a0] sm:$0xf]
  %v1640 = vld [vmem:[%s0 + $0x2a4] sm:$0xf]
  %v1641 = vld [vmem:[%s0 + $0x2a8] sm:$0xf]
  %v1642 = vld [vmem:[%s0 + $0x2ac] sm:$0xf]
  %v1643 = vld [vmem:[%s0 + $0x2b0] sm:$0xf]
  %v1644 = vld [vmem:[%s0 + $0x2b4] sm:$0xf]
  %v1645 = vld [vmem:[%s0 + $0x2b8] sm:$0xf]
  %v1646 = vld [vmem:[%s0 + $0x2bc] sm:$0xf]
  %v1647 = vld [vmem:[%s0 + $0x2c0] sm:$0xf]
  %v1648 = vld [vmem:[%s0 + $0x2c4] sm:$0xf]
  %v1649 = vld [vmem:[%s0 + $0x2c8] sm:$0xf]
  %v1650 = vld [vmem:[%s0 + $0x2cc] sm:$0xf]
  %v1651 = vld [vmem:[%s0 + $0x2d0] sm:$0xf]
  %v1652 = vld [vmem:[%s0 + $0x2d4] sm:$0xf]
  %v1653 = vld [vmem:[%s0 + $0x2d8] sm:$0xf]
  %v1654 = vld [vmem:[%s0 + $0x2dc] sm:$0xf]
  %v1655 = vld [vmem:[%s0 + $0x2e0] sm:$0xf]
  %v1656 = vld [vmem:[%s0 + $0x2e4] sm:$0xf]
  %v1657 = vld [vmem:[%s0 + $0x2e8] sm:$0xf]
  %v1658 = vld [vmem:[%s0 + $0x2ec] sm:$0xf]
  %v1659 = vld [vmem:[%s0 + $0x2f0] sm:$0xf]
  %v1660 = vld [vmem:[%s0 + $0x2f4] sm:$0xf]
  %v1661 = vld [vmem:[%s0 + $0x2f8] sm:$0xf]
  %v1662 = vld [vmem:[%s0 + $0x2fc] sm:$0xf]
  %v1663 = vld [vmem:[%s0 + $0x300] sm:$0xf]
  %v1664 = vld [vmem:[%s0 + $0x304] sm:$0xf]
  %v1665 = vld [vmem:[%s0 + $0x308] sm:$0xf]
  %v1666 = vld [vmem:[%s0 + $0x30c] sm:$0xf]
  %v1716 = vunpack.c.l.b16 %v1618
  %v1717 = vunpack.c.l.b16 %v1619
  %v1718 = vunpack.c.l.b16 %v1620
  %v1719 = vunpack.c.l.b16 %v1621
  %v1720 = vunpack.c.l.b16 %v1622
  %v1721 = vunpack.c.l.b16 %v1623
  %v1722 = vunpack.c.l.b16 %v1624
  %v1723 = vunpack.c.l.b16 %v1625
  %v1724 = vunpack.c.l.b16 %v1626
  %v1725 = vunpack.c.l.b16 %v1627
  %v1726 = vunpack.c.l.b16 %v1628
  %v1727 = vunpack.c.l.b16 %v1629
  %v1728 = vunpack.c.l.b16 %v1630
  %v1729 = vunpack.c.l.b16 %v1631
  %v1730 = vunpack.c.l.b16 %v1632
  %v1731 = vunpack.c.l.b16 %v1633
  %v1732 = vunpack.c.l.b16 %v1634
  %v1733 = vunpack.c.l.b16 %v1635
  %v1734 = vunpack.c.l.b16 %v1636
  %v1735 = vunpack.c.l.b16 %v1637
  %v1736 = vunpack.c.l.b16 %v1638
  %v1737 = vunpack.c.l.b16 %v1639
  %v1738 = vunpack.c.l.b16 %v1640
  %v1739 = vunpack.c.l.b16 %v1641
  %v1740 = vunpack.c.l.b16 %v1642
  %v1741 = vunpack.c.l.b16 %v1643
  %v1742 = vunpack.c.l.b16 %v1644
  %v1743 = vunpack.c.l.b16 %v1645
  %v1744 = vunpack.c.l.b16 %v1646
  %v1745 = vunpack.c.l.b16 %v1647
  %v1746 = vunpack.c.l.b16 %v1648
  %v1747 = vunpack.c.l.b16 %v1649
  %v1748 = vunpack.c.l.b16 %v1650
  %v1749 = vunpack.c.l.b16 %v1651
  %v1750 = vunpack.c.l.b16 %v1652
  %v1751 = vunpack.c.l.b16 %v1653
  %v1752 = vunpack.c.l.b16 %v1654
  %v1753 = vunpack.c.l.b16 %v1655
  %v1754 = vunpack.c.l.b16 %v1656
  %v1755 = vunpack.c.l.b16 %v1657
  %v1756 = vunpack.c.l.b16 %v1658
  %v1757 = vunpack.c.l.b16 %v1659
  %v1758 = vunpack.c.l.b16 %v1660
  %v1759 = vunpack.c.l.b16 %v1661
  %v1760 = vunpack.c.l.b16 %v1662
  %v1761 = vunpack.c.l.b16 %v1663
  %v1762 = vunpack.c.l.b16 %v1664
  %v1763 = vunpack.c.l.b16 %v1665
  %v1764 = vunpack.c.l.b16 %v1666
  %v1765 = vpack.c.b16 %v1717, %v1716
  %v1766 = vpack.c.b16 %v1719, %v1718
  %v1767 = vpack.c.b16 %v1721, %v1720
  %v1768 = vpack.c.b16 %v1723, %v1722
  %v1769 = vpack.c.b16 %v1725, %v1724
  %v1770 = vpack.c.b16 %v1727, %v1726
  %v1771 = vpack.c.b16 %v1729, %v1728
  %v1772 = vpack.c.b16 %v1731, %v1730
  %v1773 = vpack.c.b16 %v1733, %v1732
  %v1774 = vpack.c.b16 %v1735, %v1734
  %v1775 = vpack.c.b16 %v1737, %v1736
  %v1776 = vpack.c.b16 %v1739, %v1738
  %v1777 = vpack.c.b16 %v1741, %v1740
  %v1778 = vpack.c.b16 %v1743, %v1742
  %v1779 = vpack.c.b16 %v1745, %v1744
  %v1780 = vpack.c.b16 %v1747, %v1746
  %v1781 = vpack.c.b16 %v1749, %v1748
  %v1782 = vpack.c.b16 %v1751, %v1750
  %v1783 = vpack.c.b16 %v1753, %v1752
  %v1784 = vpack.c.b16 %v1755, %v1754
  %v1785 = vpack.c.b16 %v1757, %v1756
  %v1786 = vpack.c.b16 %v1759, %v1758
  %v1787 = vpack.c.b16 %v1761, %v1760
  %v1788 = vpack.c.b16 %v1763, %v1762
  %v1789 = vpack.c.b16 %v1764, %v1764
  %1815 = vmatprep.subr.bf16.mxu0 0
  %1816 = vmatpush1.bf16.msra.mxu0 %v267
  %1817 = vmatprep.subr.bf16.mxu0 0
  %1818 = vmatpush1.bf16.msra.mxu0 %v268
  %1819 = vmatprep.subr.bf16.mxu0 0
  %1820 = vmatpush1.bf16.msra.mxu0 %v269
  %1821 = vmatprep.subr.bf16.mxu0 0
  %1822 = vmatpush1.bf16.msra.mxu0 %v270
  %1823 = vmatprep.subr.bf16.mxu0 0
  %1824 = vmatpush1.bf16.msra.mxu0 %v271
  %1825 = vmatprep.subr.bf16.mxu0 0
  %1826 = vmatpush1.bf16.msra.mxu0 %v272
  %1827 = vmatprep.subr.bf16.mxu0 0
  %1828 = vmatpush1.bf16.msra.mxu0 %v273
  %1829 = vmatprep.subr.bf16.mxu0 0
  %1830 = vmatpush1.bf16.msra.mxu0 %v274
  %1831 = vmatprep.subr.bf16.mxu0 0
  %1832 = vmatpush1.bf16.msra.mxu0 0
  %1833 = vmatprep.subr.bf16.mxu0 0
  %1834 = vmatpush1.bf16.msra.mxu0 0
  %1835 = vmatprep.subr.bf16.mxu0 0
  %1836 = vmatpush1.bf16.msra.mxu0 0
  %1837 = vmatprep.subr.bf16.mxu0 0
  %1838 = vmatpush1.bf16.msra.mxu0 0
  %1839 = vmatprep.subr.bf16.mxu0 0
  %1840 = vmatpush1.bf16.msra.mxu0 0
  %1841 = vmatprep.subr.bf16.mxu0 0
  %1842 = vmatpush1.bf16.msra.mxu0 0
  %1843 = vmatprep.subr.bf16.mxu0 0
  %1844 = vmatpush1.bf16.msra.mxu0 0
  %1845 = vmatprep.subr.bf16.mxu0 0
  %1846 = vmatpush1.bf16.msra.mxu0 0
  %1847 = vmatprep.mubr.bf16.mxu0 0
  %1848 = vmatmul.mubr.bf16.gmra.mrb[0].mxu0 %v1765
  %v1849 = vpop.f32.mrb[0].mxu0
  %v1850 = vadd.f32 %v85, %v1849
  %v1851 = vpop.f32.mrb[0].mxu0
  %v1852 = vpop.f32.mrb[0].mxu0
  %v1853 = vadd.f32 %v85, %v1852
  %v1854 = vpop.f32.mrb[0].mxu0
  %1855 = vmatprep.mubr.bf16.mxu0 0
  %1856 = vmatmul.mubr.bf16.gmra.mrb[0].mxu0 %v1766
  %v1857 = vpop.f32.mrb[0].mxu0
  %v1858 = vadd.f32 %v85, %v1857
  %v1859 = vpop.f32.mrb[0].mxu0
  %v1860 = vpop.f32.mrb[0].mxu0
  %v1861 = vadd.f32 %v85, %v1860
  %v1862 = vpop.f32.mrb[0].mxu0
  %1863 = vmatprep.mubr.bf16.mxu0 0
  %1864 = vmatmul.mubr.bf16.gmra.mrb[0].mxu0 %v1767
  %v1865 = vpop.f32.mrb[0].mxu0
  %v1866 = vadd.f32 %v85, %v1865
  %v1867 = vpop.f32.mrb[0].mxu0
  %v1868 = vpop.f32.mrb[0].mxu0
  %v1869 = vadd.f32 %v85, %v1868
  %v1870 = vpop.f32.mrb[0].mxu0
  %1871 = vmatprep.mubr.bf16.mxu0 0
  %1872 = vmatmul.mubr.bf16.gmra.mrb[0].mxu0 %v1768
  %v1873 = vpop.f32.mrb[0].mxu0
  %v1874 = vadd.f32 %v85, %v1873
  %v1875 = vpop.f32.mrb[0].mxu0
  %v1876 = vpop.f32.mrb[0].mxu0
  %v1877 = vadd.f32 %v85, %v1876
  %v1878 = vpop.f32.mrb[0].mxu0
  %1879 = vmatprep.mubr.bf16.mxu0 0
  %1880 = vmatmul.mubr.bf16.gmra.mrb[0].mxu0 %v1769
  %v1881 = vpop.f32.mrb[0].mxu0
  %v1882 = vadd.f32 %v85, %v1881
  %v1883 = vpop.f32.mrb[0].mxu0
  %v1884 = vpop.f32.mrb[0].mxu0
  %v1885 = vadd.f32 %v85, %v1884
  %v1886 = vpop.f32.mrb[0].mxu0
  %1887 = vmatprep.mubr.bf16.mxu0 0
  %1888 = vmatmul.mubr.bf16.gmra.mrb[0].mxu0 %v1770
  %v1889 = vpop.f32.mrb[0].mxu0
  %v1890 = vadd.f32 %v85, %v1889
  %v1891 = vpop.f32.mrb[0].mxu0
  %v1892 = vpop.f32.mrb[0].mxu0
  %v1893 = vadd.f32 %v85, %v1892
  %v1894 = vpop.f32.mrb[0].mxu0
  %1895 = vmatprep.mubr.bf16.mxu0 0
  %1896 = vmatmul.mubr.bf16.gmra.mrb[0].mxu0 %v1771
  %v1897 = vpop.f32.mrb[0].mxu0
  %v1898 = vadd.f32 %v85, %v1897
  %v1899 = vpop.f32.mrb[0].mxu0
  %v1900 = vpop.f32.mrb[0].mxu0
  %v1901 = vadd.f32 %v85, %v1900
  %v1902 = vpop.f32.mrb[0].mxu0
  %1903 = vmatprep.mubr.bf16.mxu0 0
  %1904 = vmatmul.mubr.bf16.gmra.mrb[0].mxu0 %v1772
  %v1905 = vpop.f32.mrb[0].mxu0
  %v1906 = vadd.f32 %v85, %v1905
  %v1907 = vpop.f32.mrb[0].mxu0
  %v1908 = vpop.f32.mrb[0].mxu0
  %v1909 = vadd.f32 %v85, %v1908
  %v1910 = vpop.f32.mrb[0].mxu0
  %1911 = vmatprep.mubr.bf16.mxu0 0
  %1912 = vmatmul.mubr.bf16.gmra.mrb[0].mxu0 %v1773
  %v1913 = vpop.f32.mrb[0].mxu0
  %v1914 = vadd.f32 %v85, %v1913
  %v1915 = vpop.f32.mrb[0].mxu0
  %v1916 = vpop.f32.mrb[0].mxu0
  %v1917 = vadd.f32 %v85, %v1916
  %v1918 = vpop.f32.mrb[0].mxu0
  %1919 = vmatprep.mubr.bf16.mxu0 0
  %1920 = vmatmul.mubr.bf16.gmra.mrb[0].mxu0 %v1774
  %v1921 = vpop.f32.mrb[0].mxu0
  %v1922 = vadd.f32 %v85, %v1921
  %v1923 = vpop.f32.mrb[0].mxu0
  %v1924 = vpop.f32.mrb[0].mxu0
  %v1925 = vadd.f32 %v85, %v1924
  %v1926 = vpop.f32.mrb[0].mxu0
  %1927 = vmatprep.mubr.bf16.mxu0 0
  %1928 = vmatmul.mubr.bf16.gmra.mrb[0].mxu0 %v1775
  %v1929 = vpop.f32.mrb[0].mxu0
  %v1930 = vadd.f32 %v85, %v1929
  %v1931 = vpop.f32.mrb[0].mxu0
  %v1932 = vpop.f32.mrb[0].mxu0
  %v1933 = vadd.f32 %v85, %v1932
  %v1934 = vpop.f32.mrb[0].mxu0
  %1935 = vmatprep.mubr.bf16.mxu0 0
  %1936 = vmatmul.mubr.bf16.gmra.mrb[0].mxu0 %v1776
  %v1937 = vpop.f32.mrb[0].mxu0
  %v1938 = vadd.f32 %v85, %v1937
  %v1939 = vpop.f32.mrb[0].mxu0
  %v1940 = vpop.f32.mrb[0].mxu0
  %v1941 = vadd.f32 %v85, %v1940
  %v1942 = vpop.f32.mrb[0].mxu0
  %1943 = vmatprep.mubr.bf16.mxu0 0
  %1944 = vmatmul.mubr.bf16.gmra.mrb[0].mxu0 %v1777
  %v1945 = vpop.f32.mrb[0].mxu0
  %v1946 = vadd.f32 %v85, %v1945
  %v1947 = vpop.f32.mrb[0].mxu0
  %v1948 = vpop.f32.mrb[0].mxu0
  %v1949 = vadd.f32 %v85, %v1948
  %v1950 = vpop.f32.mrb[0].mxu0
  %1951 = vmatprep.mubr.bf16.mxu0 0
  %1952 = vmatmul.mubr.bf16.gmra.mrb[0].mxu0 %v1778
  %v1953 = vpop.f32.mrb[0].mxu0
  %v1954 = vadd.f32 %v85, %v1953
  %v1955 = vpop.f32.mrb[0].mxu0
  %v1956 = vpop.f32.mrb[0].mxu0
  %v1957 = vadd.f32 %v85, %v1956
  %v1958 = vpop.f32.mrb[0].mxu0
  %1959 = vmatprep.mubr.bf16.mxu0 0
  %1960 = vmatmul.mubr.bf16.gmra.mrb[0].mxu0 %v1779
  %v1961 = vpop.f32.mrb[0].mxu0
  %v1962 = vadd.f32 %v85, %v1961
  %v1963 = vpop.f32.mrb[0].mxu0
  %v1964 = vpop.f32.mrb[0].mxu0
  %v1965 = vadd.f32 %v85, %v1964
  %v1966 = vpop.f32.mrb[0].mxu0
  %1967 = vmatprep.mubr.bf16.mxu0 0
  %1968 = vmatmul.mubr.bf16.gmra.mrb[0].mxu0 %v1780
  %v1969 = vpop.f32.mrb[0].mxu0
  %v1970 = vadd.f32 %v85, %v1969
  %v1971 = vpop.f32.mrb[0].mxu0
  %v1972 = vpop.f32.mrb[0].mxu0
  %v1973 = vadd.f32 %v85, %v1972
  %v1974 = vpop.f32.mrb[0].mxu0
  %1975 = vmatprep.mubr.bf16.mxu0 0
  %1976 = vmatmul.mubr.bf16.gmra.mrb[0].mxu0 %v1781
  %v1977 = vpop.f32.mrb[0].mxu0
  %v1978 = vadd.f32 %v85, %v1977
  %v1979 = vpop.f32.mrb[0].mxu0
  %v1980 = vpop.f32.mrb[0].mxu0
  %v1981 = vadd.f32 %v85, %v1980
  %v1982 = vpop.f32.mrb[0].mxu0
  %1983 = vmatprep.mubr.bf16.mxu0 0
  %1984 = vmatmul.mubr.bf16.gmra.mrb[0].mxu0 %v1782
  %v1985 = vpop.f32.mrb[0].mxu0
  %v1986 = vadd.f32 %v85, %v1985
  %v1987 = vpop.f32.mrb[0].mxu0
  %v1988 = vpop.f32.mrb[0].mxu0
  %v1989 = vadd.f32 %v85, %v1988
  %v1990 = vpop.f32.mrb[0].mxu0
  %1991 = vmatprep.mubr.bf16.mxu0 0
  %1992 = vmatmul.mubr.bf16.gmra.mrb[0].mxu0 %v1783
  %v1993 = vpop.f32.mrb[0].mxu0
  %v1994 = vadd.f32 %v85, %v1993
  %v1995 = vpop.f32.mrb[0].mxu0
  %v1996 = vpop.f32.mrb[0].mxu0
  %v1997 = vadd.f32 %v85, %v1996
  %v1998 = vpop.f32.mrb[0].mxu0
  %1999 = vmatprep.mubr.bf16.mxu0 0
  %2000 = vmatmul.mubr.bf16.gmra.mrb[0].mxu0 %v1784
  %v2001 = vpop.f32.mrb[0].mxu0
  %v2002 = vadd.f32 %v85, %v2001
  %v2003 = vpop.f32.mrb[0].mxu0
  %v2004 = vpop.f32.mrb[0].mxu0
  %v2005 = vadd.f32 %v85, %v2004
  %v2006 = vpop.f32.mrb[0].mxu0
  %2007 = vmatprep.mubr.bf16.mxu0 0
  %2008 = vmatmul.mubr.bf16.gmra.mrb[0].mxu0 %v1785
  %v2009 = vpop.f32.mrb[0].mxu0
  %v2010 = vadd.f32 %v85, %v2009
  %v2011 = vpop.f32.mrb[0].mxu0
  %v2012 = vpop.f32.mrb[0].mxu0
  %v2013 = vadd.f32 %v85, %v2012
  %v2014 = vpop.f32.mrb[0].mxu0
  %2015 = vmatprep.mubr.bf16.mxu0 0
  %2016 = vmatmul.mubr.bf16.gmra.mrb[0].mxu0 %v1786
  %v2017 = vpop.f32.mrb[0].mxu0
  %v2018 = vadd.f32 %v85, %v2017
  %v2019 = vpop.f32.mrb[0].mxu0
  %v2020 = vpop.f32.mrb[0].mxu0
  %v2021 = vadd.f32 %v85, %v2020
  %v2022 = vpop.f32.mrb[0].mxu0
  %2023 = vmatprep.mubr.bf16.mxu0 0
  %2024 = vmatmul.mubr.bf16.gmra.mrb[0].mxu0 %v1787
  %v2025 = vpop.f32.mrb[0].mxu0
  %v2026 = vadd.f32 %v85, %v2025
  %v2027 = vpop.f32.mrb[0].mxu0
  %v2028 = vpop.f32.mrb[0].mxu0
  %v2029 = vadd.f32 %v85, %v2028
  %v2030 = vpop.f32.mrb[0].mxu0
  %2031 = vmatprep.mubr.bf16.mxu0 0
  %2032 = vmatmul.mubr.bf16.gmra.mrb[0].mxu0 %v1788
  %v2033 = vpop.f32.mrb[0].mxu0
  %v2034 = vadd.f32 %v85, %v2033
  %v2035 = vpop.f32.mrb[0].mxu0
  %v2036 = vpop.f32.mrb[0].mxu0
  %v2037 = vadd.f32 %v85, %v2036
  %v2038 = vpop.f32.mrb[0].mxu0
  %2039 = vmatprep.mubr.bf16.mxu0 0
  %2040 = vmatmul.mubr.bf16.gmra.mrb[0].mxu0 %v1789
  %v2041 = vpop.f32.mrb[0].mxu0
  %v2042 = vadd.f32 %v85, %v2041
  %v2043 = vpop.f32.mrb[0].mxu0
  %v2044 = vpop.f32.mrb[0].mxu0
  %v2045 = vpop.f32.mrb[0].mxu0
  %2046 = vdwg.mxu0
  %v2047 = vmax.f32 %v1850, 0.0
  %v2048 = vmax.f32 %v1853, 0.0
  %v2049 = vmax.f32 %v1858, 0.0
  %v2050 = vmax.f32 %v1861, 0.0
  %v2051 = vmax.f32 %v1866, 0.0
  %v2052 = vmax.f32 %v1869, 0.0
  %v2053 = vmax.f32 %v1874, 0.0
  %v2054 = vmax.f32 %v1877, 0.0
  %v2055 = vmax.f32 %v1882, 0.0
  %v2056 = vmax.f32 %v1885, 0.0
  %v2057 = vmax.f32 %v1890, 0.0
  %v2058 = vmax.f32 %v1893, 0.0
  %v2059 = vmax.f32 %v1898, 0.0
  %v2060 = vmax.f32 %v1901, 0.0
  %v2061 = vmax.f32 %v1906, 0.0
  %v2062 = vmax.f32 %v1909, 0.0
  %v2063 = vmax.f32 %v1914, 0.0
  %v2064 = vmax.f32 %v1917, 0.0
  %v2065 = vmax.f32 %v1922, 0.0
  %v2066 = vmax.f32 %v1925, 0.0
  %v2067 = vmax.f32 %v1930, 0.0
  %v2068 = vmax.f32 %v1933, 0.0
  %v2069 = vmax.f32 %v1938, 0.0
  %v2070 = vmax.f32 %v1941, 0.0
  %v2071 = vmax.f32 %v1946, 0.0
  %v2072 = vmax.f32 %v1949, 0.0
  %v2073 = vmax.f32 %v1954, 0.0
  %v2074 = vmax.f32 %v1957, 0.0
  %v2075 = vmax.f32 %v1962, 0.0
  %v2076 = vmax.f32 %v1965, 0.0
  %v2077 = vmax.f32 %v1970, 0.0
  %v2078 = vmax.f32 %v1973, 0.0
  %v2079 = vmax.f32 %v1978, 0.0
  %v2080 = vmax.f32 %v1981, 0.0
  %v2081 = vmax.f32 %v1986, 0.0
  %v2082 = vmax.f32 %v1989, 0.0
  %v2083 = vmax.f32 %v1994, 0.0
  %v2084 = vmax.f32 %v1997, 0.0
  %v2085 = vmax.f32 %v2002, 0.0
  %v2086 = vmax.f32 %v2005, 0.0
  %v2087 = vmax.f32 %v2010, 0.0
  %v2088 = vmax.f32 %v2013, 0.0
  %v2089 = vmax.f32 %v2018, 0.0
  %v2090 = vmax.f32 %v2021, 0.0
  %v2091 = vmax.f32 %v2026, 0.0
  %v2092 = vmax.f32 %v2029, 0.0
  %v2093 = vmax.f32 %v2034, 0.0
  %v2094 = vmax.f32 %v2037, 0.0
  %v2095 = vmax.f32 %v2042, 0.0
  %v2096 = vmax.f32 %v1569, %v2047
  %v2097 = vmax.f32 %v1570, %v2048
  %v2098 = vmax.f32 %v1571, %v2049
  %v2099 = vmax.f32 %v1572, %v2050
  %v2100 = vmax.f32 %v1573, %v2051
  %v2101 = vmax.f32 %v1574, %v2052
  %v2102 = vmax.f32 %v1575, %v2053
  %v2103 = vmax.f32 %v1576, %v2054
  %v2104 = vmax.f32 %v1577, %v2055
  %v2105 = vmax.f32 %v1578, %v2056
  %v2106 = vmax.f32 %v1579, %v2057
  %v2107 = vmax.f32 %v1580, %v2058
  %v2108 = vmax.f32 %v1581, %v2059
  %v2109 = vmax.f32 %v1582, %v2060
  %v2110 = vmax.f32 %v1583, %v2061
  %v2111 = vmax.f32 %v1584, %v2062
  %v2112 = vmax.f32 %v1585, %v2063
  %v2113 = vmax.f32 %v1586, %v2064
  %v2114 = vmax.f32 %v1587, %v2065
  %v2115 = vmax.f32 %v1588, %v2066
  %v2116 = vmax.f32 %v1589, %v2067
  %v2117 = vmax.f32 %v1590, %v2068
  %v2118 = vmax.f32 %v1591, %v2069
  %v2119 = vmax.f32 %v1592, %v2070
  %v2120 = vmax.f32 %v1593, %v2071
  %v2121 = vmax.f32 %v1594, %v2072
  %v2122 = vmax.f32 %v1595, %v2073
  %v2123 = vmax.f32 %v1596, %v2074
  %v2124 = vmax.f32 %v1597, %v2075
  %v2125 = vmax.f32 %v1598, %v2076
  %v2126 = vmax.f32 %v1599, %v2077
  %v2127 = vmax.f32 %v1600, %v2078
  %v2128 = vmax.f32 %v1601, %v2079
  %v2129 = vmax.f32 %v1602, %v2080
  %v2130 = vmax.f32 %v1603, %v2081
  %v2131 = vmax.f32 %v1604, %v2082
  %v2132 = vmax.f32 %v1605, %v2083
  %v2133 = vmax.f32 %v1606, %v2084
  %v2134 = vmax.f32 %v1607, %v2085
  %v2135 = vmax.f32 %v1608, %v2086
  %v2136 = vmax.f32 %v1609, %v2087
  %v2137 = vmax.f32 %v1610, %v2088
  %v2138 = vmax.f32 %v1611, %v2089
  %v2139 = vmax.f32 %v1612, %v2090
  %v2140 = vmax.f32 %v1613, %v2091
  %v2141 = vmax.f32 %v1614, %v2092
  %v2142 = vmax.f32 %v1615, %v2093
  %v2143 = vmax.f32 %v1616, %v2094
  %v2144 = vmax.f32 %v1617, %v2095
  %v2145 = vpack.c.bf16 %v2097, %v2096
  %v2146 = vpack.c.bf16 %v2099, %v2098
  %v2147 = vpack.c.bf16 %v2101, %v2100
  %v2148 = vpack.c.bf16 %v2103, %v2102
  %v2149 = vpack.c.bf16 %v2105, %v2104
  %v2150 = vpack.c.bf16 %v2107, %v2106
  %v2151 = vpack.c.bf16 %v2109, %v2108
  %v2152 = vpack.c.bf16 %v2111, %v2110
  %v2153 = vpack.c.bf16 %v2113, %v2112
  %v2154 = vpack.c.bf16 %v2115, %v2114
  %v2155 = vpack.c.bf16 %v2117, %v2116
  %v2156 = vpack.c.bf16 %v2119, %v2118
  %v2157 = vpack.c.bf16 %v2121, %v2120
  %v2158 = vpack.c.bf16 %v2123, %v2122
  %v2159 = vpack.c.bf16 %v2125, %v2124
  %v2160 = vpack.c.bf16 %v2127, %v2126
  %v2161 = vpack.c.bf16 %v2129, %v2128
  %v2162 = vpack.c.bf16 %v2131, %v2130
  %v2163 = vpack.c.bf16 %v2133, %v2132
  %v2164 = vpack.c.bf16 %v2135, %v2134
  %v2165 = vpack.c.bf16 %v2137, %v2136
  %v2166 = vpack.c.bf16 %v2139, %v2138
  %v2167 = vpack.c.bf16 %v2141, %v2140
  %v2168 = vpack.c.bf16 %v2143, %v2142
  %v2169 = vpack.c.bf16 %v2144, %v2144
  %v2195 = vunpack.c.l.b16 %v2145
  %v2196 = vunpack.c.h.b16 %v2145
  %v2197 = vunpack.c.l.b16 %v2146
  %v2198 = vunpack.c.h.b16 %v2146
  %v2199 = vunpack.c.l.b16 %v2147
  %v2200 = vunpack.c.h.b16 %v2147
  %v2201 = vunpack.c.l.b16 %v2148
  %v2202 = vunpack.c.h.b16 %v2148
  %v2203 = vunpack.c.l.b16 %v2149
  %v2204 = vunpack.c.h.b16 %v2149
  %v2205 = vunpack.c.l.b16 %v2150
  %v2206 = vunpack.c.h.b16 %v2150
  %v2207 = vunpack.c.l.b16 %v2151
  %v2208 = vunpack.c.h.b16 %v2151
  %v2209 = vunpack.c.l.b16 %v2152
  %v2210 = vunpack.c.h.b16 %v2152
  %v2211 = vunpack.c.l.b16 %v2153
  %v2212 = vunpack.c.h.b16 %v2153
  %v2213 = vunpack.c.l.b16 %v2154
  %v2214 = vunpack.c.h.b16 %v2154
  %v2215 = vunpack.c.l.b16 %v2155
  %v2216 = vunpack.c.h.b16 %v2155
  %v2217 = vunpack.c.l.b16 %v2156
  %v2218 = vunpack.c.h.b16 %v2156
  %v2219 = vunpack.c.l.b16 %v2157
  %v2220 = vunpack.c.h.b16 %v2157
  %v2221 = vunpack.c.l.b16 %v2158
  %v2222 = vunpack.c.h.b16 %v2158
  %v2223 = vunpack.c.l.b16 %v2159
  %v2224 = vunpack.c.h.b16 %v2159
  %v2225 = vunpack.c.l.b16 %v2160
  %v2226 = vunpack.c.h.b16 %v2160
  %v2227 = vunpack.c.l.b16 %v2161
  %v2228 = vunpack.c.h.b16 %v2161
  %v2229 = vunpack.c.l.b16 %v2162
  %v2230 = vunpack.c.h.b16 %v2162
  %v2231 = vunpack.c.l.b16 %v2163
  %v2232 = vunpack.c.h.b16 %v2163
  %v2233 = vunpack.c.l.b16 %v2164
  %v2234 = vunpack.c.h.b16 %v2164
  %v2235 = vunpack.c.l.b16 %v2165
  %v2236 = vunpack.c.h.b16 %v2165
  %v2237 = vunpack.c.l.b16 %v2166
  %v2238 = vunpack.c.h.b16 %v2166
  %v2239 = vunpack.c.l.b16 %v2167
  %v2240 = vunpack.c.h.b16 %v2167
  %v2241 = vunpack.c.l.b16 %v2168
  %v2242 = vunpack.c.h.b16 %v2168
  %v2243 = vunpack.c.l.b16 %v2169
  %v2244 = vpack.c.b16 %v2195, %v2195
  %v2245 = vpack.c.b16 %v2196, %v2196
  %v2246 = vpack.c.b16 %v2197, %v2197
  %v2247 = vpack.c.b16 %v2198, %v2198
  %v2248 = vpack.c.b16 %v2199, %v2199
  %v2249 = vpack.c.b16 %v2200, %v2200
  %v2250 = vpack.c.b16 %v2201, %v2201
  %v2251 = vpack.c.b16 %v2202, %v2202
  %v2252 = vpack.c.b16 %v2203, %v2203
  %v2253 = vpack.c.b16 %v2204, %v2204
  %v2254 = vpack.c.b16 %v2205, %v2205
  %v2255 = vpack.c.b16 %v2206, %v2206
  %v2256 = vpack.c.b16 %v2207, %v2207
  %v2257 = vpack.c.b16 %v2208, %v2208
  %v2258 = vpack.c.b16 %v2209, %v2209
  %v2259 = vpack.c.b16 %v2210, %v2210
  %v2260 = vpack.c.b16 %v2211, %v2211
  %v2261 = vpack.c.b16 %v2212, %v2212
  %v2262 = vpack.c.b16 %v2213, %v2213
  %v2263 = vpack.c.b16 %v2214, %v2214
  %v2264 = vpack.c.b16 %v2215, %v2215
  %v2265 = vpack.c.b16 %v2216, %v2216
  %v2266 = vpack.c.b16 %v2217, %v2217
  %v2267 = vpack.c.b16 %v2218, %v2218
  %v2268 = vpack.c.b16 %v2219, %v2219
  %v2269 = vpack.c.b16 %v2220, %v2220
  %v2270 = vpack.c.b16 %v2221, %v2221
  %v2271 = vpack.c.b16 %v2222, %v2222
  %v2272 = vpack.c.b16 %v2223, %v2223
  %v2273 = vpack.c.b16 %v2224, %v2224
  %v2274 = vpack.c.b16 %v2225, %v2225
  %v2275 = vpack.c.b16 %v2226, %v2226
  %v2276 = vpack.c.b16 %v2227, %v2227
  %v2277 = vpack.c.b16 %v2228, %v2228
  %v2278 = vpack.c.b16 %v2229, %v2229
  %v2279 = vpack.c.b16 %v2230, %v2230
  %v2280 = vpack.c.b16 %v2231, %v2231
  %v2281 = vpack.c.b16 %v2232, %v2232
  %v2282 = vpack.c.b16 %v2233, %v2233
  %v2283 = vpack.c.b16 %v2234, %v2234
  %v2284 = vpack.c.b16 %v2235, %v2235
  %v2285 = vpack.c.b16 %v2236, %v2236
  %v2286 = vpack.c.b16 %v2237, %v2237
  %v2287 = vpack.c.b16 %v2238, %v2238
  %v2288 = vpack.c.b16 %v2239, %v2239
  %v2289 = vpack.c.b16 %v2240, %v2240
  %v2290 = vpack.c.b16 %v2241, %v2241
  %v2291 = vpack.c.b16 %v2242, %v2242
  %v2292 = vpack.c.b16 %v2243, %v2243
  %2342 = vst [vmem:[%s3] sm:$0xf] %v2244
  %2343 = vst [vmem:[%s3 + $0x4] sm:$0xf] %v2245
  %2344 = vst [vmem:[%s3 + $0x8] sm:$0xf] %v2246
  %2345 = vst [vmem:[%s3 + $0xc] sm:$0xf] %v2247
  %2346 = vst [vmem:[%s3 + $0x10] sm:$0xf] %v2248
  %2347 = vst [vmem:[%s3 + $0x14] sm:$0xf] %v2249
  %2348 = vst [vmem:[%s3 + $0x18] sm:$0xf] %v2250
  %2349 = vst [vmem:[%s3 + $0x1c] sm:$0xf] %v2251
  %2350 = vst [vmem:[%s3 + $0x20] sm:$0xf] %v2252
  %2351 = vst [vmem:[%s3 + $0x24] sm:$0xf] %v2253
  %2352 = vst [vmem:[%s3 + $0x28] sm:$0xf] %v2254
  %2353 = vst [vmem:[%s3 + $0x2c] sm:$0xf] %v2255
  %2354 = vst [vmem:[%s3 + $0x30] sm:$0xf] %v2256
  %2355 = vst [vmem:[%s3 + $0x34] sm:$0xf] %v2257
  %2356 = vst [vmem:[%s3 + $0x38] sm:$0xf] %v2258
  %2357 = vst [vmem:[%s3 + $0x3c] sm:$0xf] %v2259
  %2358 = vst [vmem:[%s3 + $0x40] sm:$0xf] %v2260
  %2359 = vst [vmem:[%s3 + $0x44] sm:$0xf] %v2261
  %2360 = vst [vmem:[%s3 + $0x48] sm:$0xf] %v2262
  %2361 = vst [vmem:[%s3 + $0x4c] sm:$0xf] %v2263
  %2362 = vst [vmem:[%s3 + $0x50] sm:$0xf] %v2264
  %2363 = vst [vmem:[%s3 + $0x54] sm:$0xf] %v2265
  %2364 = vst [vmem:[%s3 + $0x58] sm:$0xf] %v2266
  %2365 = vst [vmem:[%s3 + $0x5c] sm:$0xf] %v2267
  %2366 = vst [vmem:[%s3 + $0x60] sm:$0xf] %v2268
  %2367 = vst [vmem:[%s3 + $0x64] sm:$0xf] %v2269
  %2368 = vst [vmem:[%s3 + $0x68] sm:$0xf] %v2270
  %2369 = vst [vmem:[%s3 + $0x6c] sm:$0xf] %v2271
  %2370 = vst [vmem:[%s3 + $0x70] sm:$0xf] %v2272
  %2371 = vst [vmem:[%s3 + $0x74] sm:$0xf] %v2273
  %2372 = vst [vmem:[%s3 + $0x78] sm:$0xf] %v2274
  %2373 = vst [vmem:[%s3 + $0x7c] sm:$0xf] %v2275
  %2374 = vst [vmem:[%s3 + $0x80] sm:$0xf] %v2276
  %2375 = vst [vmem:[%s3 + $0x84] sm:$0xf] %v2277
  %2376 = vst [vmem:[%s3 + $0x88] sm:$0xf] %v2278
  %2377 = vst [vmem:[%s3 + $0x8c] sm:$0xf] %v2279
  %2378 = vst [vmem:[%s3 + $0x90] sm:$0xf] %v2280
  %2379 = vst [vmem:[%s3 + $0x94] sm:$0xf] %v2281
  %2380 = vst [vmem:[%s3 + $0x98] sm:$0xf] %v2282
  %2381 = vst [vmem:[%s3 + $0x9c] sm:$0xf] %v2283
  %2382 = vst [vmem:[%s3 + $0xa0] sm:$0xf] %v2284
  %2383 = vst [vmem:[%s3 + $0xa4] sm:$0xf] %v2285
  %2384 = vst [vmem:[%s3 + $0xa8] sm:$0xf] %v2286
  %2385 = vst [vmem:[%s3 + $0xac] sm:$0xf] %v2287
  %2386 = vst [vmem:[%s3 + $0xb0] sm:$0xf] %v2288
  %2387 = vst [vmem:[%s3 + $0xb4] sm:$0xf] %v2289
  %2388 = vst [vmem:[%s3 + $0xb8] sm:$0xf] %v2290
  %2389 = vst [vmem:[%s3 + $0xbc] sm:$0xf] %v2291
  %2390 = vst [vmem:[%s3 + $0xc0] sm:$0xf] %v2292
  // Predicated region
  $region14: #{cnn_cifar_forward.2} parent=0 // pred_check
    _
  $region15: #{cnn_cifar_forward.2} parent=0 // pred_check_branch
    %2392 = sbr.rel (0) target = $region17
  $region16: #{cnn_cifar_forward.2} parent=0 // pred_region
    _
  $region17: #{cnn_cifar_forward.2} parent=0 // pred_fallthru
    _
  // Predicated region
  $region18: #{cnn_cifar_forward.2} parent=0 // pred_check
    _
  $region19: #{cnn_cifar_forward.2} parent=0 // pred_check_branch
    %2394 = sbr.rel (0) target = $region21
  $region20: #{cnn_cifar_forward.2} parent=0 // pred_region
    _
  $region21: #{cnn_cifar_forward.2} parent=0 // pred_fallthru
    _

// kernel: cnn_cifar_forward.3
$region0: #{cnn_cifar_forward.3}
  #allocation0 [shape = 'u32[]', space=smem, size = 0x4, offset = 0x4, fixed_abs, tag = 'smem constant byte address 0x4 - core index']
  #allocation1 [shape = 'u32[144,128]{1,0:T(1,128)}', space=vmem, size = 0x12000, scoped, tag = 'internal scratch']
  #allocation2 [shape = 'f32[56,128]{1,0:T(8,128)}', space=vmem, size = 0x7000, scoped, tag = 'scratch operand']
  %s0 = inlined_call_operand.vmem [shape: bf16[224,256], index: 0, kind: input, shape index: {}]
  %s1 = inlined_call_operand.vmem [shape: bf16[256,128], index: 1, kind: input, shape index: {}]
  %s2 = inlined_call_operand.vmem [shape: f32[1,128], index: 2, kind: input, shape index: {}]
  %s3 = inlined_call_operand.vmem [shape: bf16[3200,128], index: 3, kind: input, shape index: {}]
  %s4 = inlined_call_operand.vmem [shape: f32[1,128], index: 4, kind: input, shape index: {}]
  %s5 = inlined_call_operand.vmem [shape: bf16[128,128], index: 5, kind: input, shape index: {}]
  %s6 = inlined_call_operand.vmem [shape: f32[1,128], index: 6, kind: input, shape index: {}]
  %s7 = inlined_call_operand.vmem [shape: bf16[128,128], index: 7, kind: input, shape index: {}]
  %s8 = inlined_call_operand.vmem [shape: f32[1,128], index: 8, kind: input, shape index: {}]
  %s9 = inlined_call_operand.hbm [shape: f32[2,128], index: 9, kind: output, shape index: {}]
  %s10 = sld [smem:[#allocation0]]
  $region46: #{cnn_cifar_forward.3} parent=0
    _
  %s12 = ssub.s32 1, %s10
  %s13 = scalar_select 0, %s12, %s10
  $region1: #{cnn_cifar_forward.3} parent=0
    #allocation3 [shape = 'u8[1024]{0}', space=vmem, size = 0x400, scoped, tag = 'output window, operand 0, single buffered']
    #allocation4 [shape = 's32[1]{0}', space=sflag, size = 0x4, scoped, tag = 'scoped memory for cnn_cifar_forward.3']
    %14 = vsyncpa [#allocation4], 0
    // Predicated region
    $region2: #{cnn_cifar_forward.3} parent=1 // pred_check
      _
    $region3: #{cnn_cifar_forward.3} parent=1 // pred_check_branch
      %16 = sbr.rel (0) target = $region5
    $region4: #{cnn_cifar_forward.3} parent=1 // pred_region
      _
    $region5: #{cnn_cifar_forward.3} parent=1 // pred_fallthru
      _
    // Predicated region
    $region6: #{cnn_cifar_forward.3} parent=1 // pred_check
      _
    $region7: #{cnn_cifar_forward.3} parent=1 // pred_check_branch
      %18 = sbr.rel (0) target = $region9
    $region8: #{cnn_cifar_forward.3} parent=1 // pred_region
      _
    $region9: #{cnn_cifar_forward.3} parent=1 // pred_fallthru
      _
    // Predicated region
    $region10: #{cnn_cifar_forward.3} parent=1 // pred_check
      _
    $region11: #{cnn_cifar_forward.3} parent=1 // pred_check_branch
      %20 = sbr.rel (0) target = $region13
    $region12: #{cnn_cifar_forward.3} parent=1 // pred_region
      _
    $region13: #{cnn_cifar_forward.3} parent=1 // pred_fallthru
      _
    // Predicated region
    $region14: #{cnn_cifar_forward.3} parent=1 // pred_check
      _
    $region15: #{cnn_cifar_forward.3} parent=1 // pred_check_branch
      %22 = sbr.rel (0) target = $region17
    $region16: #{cnn_cifar_forward.3} parent=1 // pred_region
      _
    $region17: #{cnn_cifar_forward.3} parent=1 // pred_fallthru
      _
    // Predicated region
    $region18: #{cnn_cifar_forward.3} parent=1 // pred_check
      _
    $region19: #{cnn_cifar_forward.3} parent=1 // pred_check_branch
      %24 = sbr.rel (0) target = $region21
    $region20: #{cnn_cifar_forward.3} parent=1 // pred_region
      _
    $region21: #{cnn_cifar_forward.3} parent=1 // pred_fallthru
      _
    // Predicated region
    $region22: #{cnn_cifar_forward.3} parent=1 // pred_check
      _
    $region23: #{cnn_cifar_forward.3} parent=1 // pred_check_branch
      %26 = sbr.rel (0) target = $region25
    $region24: #{cnn_cifar_forward.3} parent=1 // pred_region
      _
    $region25: #{cnn_cifar_forward.3} parent=1 // pred_fallthru
      _
    // Predicated region
    $region26: #{cnn_cifar_forward.3} parent=1 // pred_check
      _
    $region27: #{cnn_cifar_forward.3} parent=1 // pred_check_branch
      %28 = sbr.rel (0) target = $region29
    $region28: #{cnn_cifar_forward.3} parent=1 // pred_region
      _
    $region29: #{cnn_cifar_forward.3} parent=1 // pred_fallthru
      _
    // Predicated region
    $region30: #{cnn_cifar_forward.3} parent=1 // pred_check
      _
    $region31: #{cnn_cifar_forward.3} parent=1 // pred_check_branch
      %30 = sbr.rel (0) target = $region33
    $region32: #{cnn_cifar_forward.3} parent=1 // pred_region
      _
    $region33: #{cnn_cifar_forward.3} parent=1 // pred_fallthru
      _
    // Predicated region
    $region34: #{cnn_cifar_forward.3} parent=1 // pred_check
      _
    $region35: #{cnn_cifar_forward.3} parent=1 // pred_check_branch
      %32 = sbr.rel (0) target = $region37
    $region36: #{cnn_cifar_forward.3} parent=1 // pred_region
      _
    $region37: #{cnn_cifar_forward.3} parent=1 // pred_fallthru
      _
    %v34 = vld [vmem:[%s0] sm:$0xff]
    %v35 = vld [vmem:[%s0 + $0x8] sm:$0xff]
    %v36 = vld [vmem:[%s0 + $0x10] sm:$0xff]
    %v37 = vld [vmem:[%s0 + $0x18] sm:$0xff]
    %v38 = vld [vmem:[%s0 + $0x20] sm:$0xff]
    %v39 = vld [vmem:[%s0 + $0x28] sm:$0xff]
    %v40 = vld [vmem:[%s0 + $0x30] sm:$0xff]
    %v41 = vld [vmem:[%s0 + $0x38] sm:$0xff]
    %v42 = vld [vmem:[%s0 + $0x40] sm:$0xff]
    %v43 = vld [vmem:[%s0 + $0x48] sm:$0xff]
    %v44 = vld [vmem:[%s0 + $0x50] sm:$0xff]
    %v45 = vld [vmem:[%s0 + $0x58] sm:$0xff]
    %v46 = vld [vmem:[%s0 + $0x60] sm:$0xff]
    %v47 = vld [vmem:[%s0 + $0x68] sm:$0xff]
    %v48 = vld [vmem:[%s0 + $0x70] sm:$0xff]
    %v49 = vld [vmem:[%s0 + $0x78] sm:$0xff]
    %v50 = vld [vmem:[%s0 + $0x80] sm:$0xff]
    %v51 = vld [vmem:[%s0 + $0x88] sm:$0xff]
    %v52 = vld [vmem:[%s0 + $0x90] sm:$0xff]
    %v53 = vld [vmem:[%s0 + $0x98] sm:$0xff]
    %v54 = vld [vmem:[%s0 + $0xa0] sm:$0xff]
    %v55 = vld [vmem:[%s0 + $0xa8] sm:$0xff]
    %v56 = vld [vmem:[%s0 + $0xb0] sm:$0xff]
    %v57 = vld [vmem:[%s0 + $0xb8] sm:$0xff]
    %v58 = vld [vmem:[%s0 + $0xc0] sm:$0xff]
    %v59 = vld [vmem:[%s0 + $0xc8] sm:$0xff]
    %v60 = vld [vmem:[%s0 + $0xd0] sm:$0xff]
    %v61 = vld [vmem:[%s0 + $0xd8] sm:$0xff]
    %v62 = vld [vmem:[%s1] sm:$0xf]
    %v63 = vld [vmem:[%s1 + $0x4] sm:$0xf]
    %v64 = vld [vmem:[%s1 + $0x8] sm:$0xf]
    %v65 = vld [vmem:[%s1 + $0xc] sm:$0xf]
    %v66 = vld [vmem:[%s1 + $0x10] sm:$0xf]
    %v67 = vld [vmem:[%s1 + $0x14] sm:$0xf]
    %v68 = vld [vmem:[%s1 + $0x18] sm:$0xf]
    %v69 = vld [vmem:[%s1 + $0x1c] sm:$0xf]
    %v70 = vld [vmem:[%s1 + $0x20] sm:$0xf]
    %v71 = vld [vmem:[%s1 + $0x24] sm:$0xf]
    %v72 = vld [vmem:[%s1 + $0x28] sm:$0xf]
    %v73 = vld [vmem:[%s1 + $0x2c] sm:$0xf]
    %v74 = vld [vmem:[%s1 + $0x30] sm:$0xf]
    %v75 = vld [vmem:[%s1 + $0x34] sm:$0xf]
    %v76 = vld [vmem:[%s1 + $0x38] sm:$0xf]
    %v77 = vld [vmem:[%s1 + $0x3c] sm:$0xf]
    %v78 = vld [vmem:[%s1 + $0x40] sm:$0xf]
    %v79 = vld [vmem:[%s1 + $0x44] sm:$0xf]
    %v80 = vld [vmem:[%s1 + $0x48] sm:$0xf]
    %v81 = vld [vmem:[%s1 + $0x4c] sm:$0xf]
    %v82 = vld [vmem:[%s1 + $0x50] sm:$0xf]
    %v83 = vld [vmem:[%s1 + $0x54] sm:$0xf]
    %v84 = vld [vmem:[%s1 + $0x58] sm:$0xf]
    %v85 = vld [vmem:[%s1 + $0x5c] sm:$0xf]
    %v86 = vld [vmem:[%s1 + $0x60] sm:$0xf]
    %v87 = vld [vmem:[%s1 + $0x64] sm:$0xf]
    %v88 = vld [vmem:[%s1 + $0x68] sm:$0xf]
    %v89 = vld [vmem:[%s1 + $0x6c] sm:$0xf]
    %v90 = vld [vmem:[%s1 + $0x70] sm:$0xf]
    %v91 = vld [vmem:[%s1 + $0x74] sm:$0xf]
    %v92 = vld [vmem:[%s1 + $0x78] sm:$0xf]
    %v93 = vld [vmem:[%s1 + $0x7c] sm:$0xf]
    %v94 = vld [vmem:[%s2] sm:$0x1]
    %v96 = vlaneseq
    %v97 = vshrl.u32 %v96, 7
    %v98 = vsub.s32 0, %v97
    %v99 = vrot.slane %v94, %v98
    %v129 = vunpack.c.l.b16 %v34
    %v130 = vunpack.c.h.b16 %v34
    %v131 = vunpack.c.l.b16 %v35
    %v132 = vunpack.c.h.b16 %v35
    %v133 = vunpack.c.l.b16 %v36
    %v134 = vunpack.c.h.b16 %v36
    %v135 = vunpack.c.l.b16 %v37
    %v136 = vunpack.c.h.b16 %v37
    %v137 = vunpack.c.l.b16 %v38
    %v138 = vunpack.c.h.b16 %v38
    %v139 = vunpack.c.l.b16 %v39
    %v140 = vunpack.c.h.b16 %v39
    %v141 = vunpack.c.l.b16 %v40
    %v142 = vunpack.c.h.b16 %v40
    %v143 = vunpack.c.l.b16 %v41
    %v144 = vunpack.c.h.b16 %v41
    %v145 = vunpack.c.l.b16 %v42
    %v146 = vunpack.c.h.b16 %v42
    %v147 = vunpack.c.l.b16 %v43
    %v148 = vunpack.c.h.b16 %v43
    %v149 = vunpack.c.l.b16 %v44
    %v150 = vunpack.c.h.b16 %v44
    %v151 = vunpack.c.l.b16 %v45
    %v152 = vunpack.c.h.b16 %v45
    %v153 = vunpack.c.l.b16 %v46
    %v154 = vunpack.c.h.b16 %v46
    %v155 = vunpack.c.l.b16 %v47
    %v156 = vunpack.c.h.b16 %v47
    %v157 = vunpack.c.l.b16 %v48
    %v158 = vunpack.c.h.b16 %v48
    %v159 = vunpack.c.l.b16 %v49
    %v160 = vunpack.c.h.b16 %v49
    %v161 = vunpack.c.l.b16 %v50
    %v162 = vunpack.c.h.b16 %v50
    %v163 = vunpack.c.l.b16 %v51
    %v164 = vunpack.c.h.b16 %v51
    %v165 = vunpack.c.l.b16 %v52
    %v166 = vunpack.c.h.b16 %v52
    %v167 = vunpack.c.l.b16 %v53
    %v168 = vunpack.c.h.b16 %v53
    %v169 = vunpack.c.l.b16 %v54
    %v170 = vunpack.c.h.b16 %v54
    %v171 = vunpack.c.l.b16 %v55
    %v172 = vunpack.c.h.b16 %v55
    %v173 = vunpack.c.l.b16 %v56
    %v174 = vunpack.c.h.b16 %v56
    %v175 = vunpack.c.l.b16 %v57
    %v176 = vunpack.c.h.b16 %v57
    %v177 = vunpack.c.l.b16 %v58
    %v178 = vunpack.c.h.b16 %v58
    %v179 = vunpack.c.l.b16 %v59
    %v180 = vunpack.c.h.b16 %v59
    %v181 = vunpack.c.l.b16 %v60
    %v182 = vunpack.c.h.b16 %v60
    %v183 = vunpack.c.l.b16 %v61
    %v184 = vunpack.c.h.b16 %v61
    %v185 = vpack.c.b16 %v131, %v129
    %v186 = vpack.c.b16 %v132, %v130
    %v187 = vpack.c.b16 %v135, %v133
    %v188 = vpack.c.b16 %v136, %v134
    %v189 = vpack.c.b16 %v139, %v137
    %v190 = vpack.c.b16 %v140, %v138
    %v191 = vpack.c.b16 %v143, %v141
    %v192 = vpack.c.b16 %v144, %v142
    %v193 = vpack.c.b16 %v147, %v145
    %v194 = vpack.c.b16 %v148, %v146
    %v195 = vpack.c.b16 %v151, %v149
    %v196 = vpack.c.b16 %v152, %v150
    %v197 = vpack.c.b16 %v155, %v153
    %v198 = vpack.c.b16 %v156, %v154
    %v199 = vpack.c.b16 %v159, %v157
    %v200 = vpack.c.b16 %v160, %v158
    %v201 = vpack.c.b16 %v163, %v161
    %v202 = vpack.c.b16 %v164, %v162
    %v203 = vpack.c.b16 %v167, %v165
    %v204 = vpack.c.b16 %v168, %v166
    %v205 = vpack.c.b16 %v171, %v169
    %v206 = vpack.c.b16 %v172, %v170
    %v207 = vpack.c.b16 %v175, %v173
    %v208 = vpack.c.b16 %v176, %v174
    %v209 = vpack.c.b16 %v179, %v177
    %v210 = vpack.c.b16 %v180, %v178
    %v211 = vpack.c.b16 %v183, %v181
    %v212 = vpack.c.b16 %v184, %v182
    %v273 = vunpack.c.l.b16 %v62
    %v274 = vunpack.c.l.b16 %v63
    %v275 = vunpack.c.l.b16 %v64
    %v276 = vunpack.c.l.b16 %v65
    %v277 = vunpack.c.l.b16 %v66
    %v278 = vunpack.c.l.b16 %v67
    %v279 = vunpack.c.l.b16 %v68
    %v280 = vunpack.c.l.b16 %v69
    %v281 = vunpack.c.l.b16 %v70
    %v282 = vunpack.c.l.b16 %v71
    %v283 = vunpack.c.l.b16 %v72
    %v284 = vunpack.c.l.b16 %v73
    %v285 = vunpack.c.l.b16 %v74
    %v286 = vunpack.c.l.b16 %v75
    %v287 = vunpack.c.l.b16 %v76
    %v288 = vunpack.c.l.b16 %v77
    %v289 = vunpack.c.l.b16 %v78
    %v290 = vunpack.c.l.b16 %v79
    %v291 = vunpack.c.l.b16 %v80
    %v292 = vunpack.c.l.b16 %v81
    %v293 = vunpack.c.l.b16 %v82
    %v294 = vunpack.c.l.b16 %v83
    %v295 = vunpack.c.l.b16 %v84
    %v296 = vunpack.c.l.b16 %v85
    %v297 = vunpack.c.l.b16 %v86
    %v298 = vunpack.c.l.b16 %v87
    %v299 = vunpack.c.l.b16 %v88
    %v300 = vunpack.c.l.b16 %v89
    %v301 = vunpack.c.l.b16 %v90
    %v302 = vunpack.c.l.b16 %v91
    %v303 = vunpack.c.l.b16 %v92
    %v304 = vunpack.c.l.b16 %v93
    %v305 = vpack.c.b16 %v274, %v273
    %v306 = vpack.c.b16 %v276, %v275
    %v307 = vpack.c.b16 %v278, %v277
    %v308 = vpack.c.b16 %v280, %v279
    %v309 = vpack.c.b16 %v282, %v281
    %v310 = vpack.c.b16 %v284, %v283
    %v311 = vpack.c.b16 %v286, %v285
    %v312 = vpack.c.b16 %v288, %v287
    %v313 = vpack.c.b16 %v290, %v289
    %v314 = vpack.c.b16 %v292, %v291
    %v315 = vpack.c.b16 %v294, %v293
    %v316 = vpack.c.b16 %v296, %v295
    %v317 = vpack.c.b16 %v298, %v297
    %v318 = vpack.c.b16 %v300, %v299
    %v319 = vpack.c.b16 %v302, %v301
    %v320 = vpack.c.b16 %v304, %v303
    %337 = vmatprep.subr.bf16.mxu0 0
    %338 = vmatpush1.bf16.msra.mxu0 %v305
    %339 = vmatprep.subr.bf16.mxu0 0
    %340 = vmatpush1.bf16.msra.mxu0 %v306
    %341 = vmatprep.subr.bf16.mxu0 0
    %342 = vmatpush1.bf16.msra.mxu0 %v307
    %343 = vmatprep.subr.bf16.mxu0 0
    %344 = vmatpush1.bf16.msra.mxu0 %v308
    %345 = vmatprep.subr.bf16.mxu0 0
    %346 = vmatpush1.bf16.msra.mxu0 %v309
    %347 = vmatprep.subr.bf16.mxu0 0
    %348 = vmatpush1.bf16.msra.mxu0 %v310
    %349 = vmatprep.subr.bf16.mxu0 0
    %350 = vmatpush1.bf16.msra.mxu0 %v311
    %351 = vmatprep.subr.bf16.mxu0 0
    %352 = vmatpush1.bf16.msra.mxu0 %v312
    %353 = vmatprep.subr.bf16.mxu0 0
    %354 = vmatpush1.bf16.msra.mxu0 %v313
    %355 = vmatprep.subr.bf16.mxu0 0
    %356 = vmatpush1.bf16.msra.mxu0 %v314
    %357 = vmatprep.subr.bf16.mxu0 0
    %358 = vmatpush1.bf16.msra.mxu0 %v315
    %359 = vmatprep.subr.bf16.mxu0 0
    %360 = vmatpush1.bf16.msra.mxu0 %v316
    %361 = vmatprep.subr.bf16.mxu0 0
    %362 = vmatpush1.bf16.msra.mxu0 %v317
    %363 = vmatprep.subr.bf16.mxu0 0
    %364 = vmatpush1.bf16.msra.mxu0 %v318
    %365 = vmatprep.subr.bf16.mxu0 0
    %366 = vmatpush1.bf16.msra.mxu0 %v319
    %367 = vmatprep.subr.bf16.mxu0 0
    %368 = vmatpush1.bf16.msra.mxu0 %v320
    %369 = vmatprep.mubr.bf16.mxu0 %v186
    %370 = vmatmul.mubr.bf16.gmra.mrb[0].mxu0 %v185
    %v371 = vpop.f32.mrb[0].mxu0
    %v372 = vadd.f32 %v99, %v371
    %v373 = vpop.f32.mrb[0].mxu0
    %v374 = vpop.f32.mrb[0].mxu0
    %v375 = vadd.f32 %v99, %v374
    %v376 = vpop.f32.mrb[0].mxu0
    %377 = vmatprep.mubr.bf16.mxu0 %v188
    %378 = vmatmul.mubr.bf16.gmra.mrb[0].mxu0 %v187
    %v379 = vpop.f32.mrb[0].mxu0
    %v380 = vadd.f32 %v99, %v379
    %v381 = vpop.f32.mrb[0].mxu0
    %v382 = vpop.f32.mrb[0].mxu0
    %v383 = vadd.f32 %v99, %v382
    %v384 = vpop.f32.mrb[0].mxu0
    %385 = vmatprep.mubr.bf16.mxu0 %v190
    %386 = vmatmul.mubr.bf16.gmra.mrb[0].mxu0 %v189
    %v387 = vpop.f32.mrb[0].mxu0
    %v388 = vadd.f32 %v99, %v387
    %v389 = vpop.f32.mrb[0].mxu0
    %v390 = vpop.f32.mrb[0].mxu0
    %v391 = vadd.f32 %v99, %v390
    %v392 = vpop.f32.mrb[0].mxu0
    %393 = vmatprep.mubr.bf16.mxu0 %v192
    %394 = vmatmul.mubr.bf16.gmra.mrb[0].mxu0 %v191
    %v395 = vpop.f32.mrb[0].mxu0
    %v396 = vadd.f32 %v99, %v395
    %v397 = vpop.f32.mrb[0].mxu0
    %v398 = vpop.f32.mrb[0].mxu0
    %v399 = vadd.f32 %v99, %v398
    %v400 = vpop.f32.mrb[0].mxu0
    %401 = vmatprep.mubr.bf16.mxu0 %v194
    %402 = vmatmul.mubr.bf16.gmra.mrb[0].mxu0 %v193
    %v403 = vpop.f32.mrb[0].mxu0
    %v404 = vadd.f32 %v99, %v403
    %v405 = vpop.f32.mrb[0].mxu0
    %v406 = vpop.f32.mrb[0].mxu0
    %v407 = vadd.f32 %v99, %v406
    %v408 = vpop.f32.mrb[0].mxu0
    %409 = vmatprep.mubr.bf16.mxu0 %v196
    %410 = vmatmul.mubr.bf16.gmra.mrb[0].mxu0 %v195
    %v411 = vpop.f32.mrb[0].mxu0
    %v412 = vadd.f32 %v99, %v411
    %v413 = vpop.f32.mrb[0].mxu0
    %v414 = vpop.f32.mrb[0].mxu0
    %v415 = vadd.f32 %v99, %v414
    %v416 = vpop.f32.mrb[0].mxu0
    %417 = vmatprep.mubr.bf16.mxu0 %v198
    %418 = vmatmul.mubr.bf16.gmra.mrb[0].mxu0 %v197
    %v419 = vpop.f32.mrb[0].mxu0
    %v420 = vadd.f32 %v99, %v419
    %v421 = vpop.f32.mrb[0].mxu0
    %v422 = vpop.f32.mrb[0].mxu0
    %v423 = vadd.f32 %v99, %v422
    %v424 = vpop.f32.mrb[0].mxu0
    %425 = vmatprep.mubr.bf16.mxu0 %v200
    %426 = vmatmul.mubr.bf16.gmra.mrb[0].mxu0 %v199
    %v427 = vpop.f32.mrb[0].mxu0
    %v428 = vadd.f32 %v99, %v427
    %v429 = vpop.f32.mrb[0].mxu0
    %v430 = vpop.f32.mrb[0].mxu0
    %v431 = vadd.f32 %v99, %v430
    %v432 = vpop.f32.mrb[0].mxu0
    %433 = vmatprep.mubr.bf16.mxu0 %v202
    %434 = vmatmul.mubr.bf16.gmra.mrb[0].mxu0 %v201
    %v435 = vpop.f32.mrb[0].mxu0
    %v436 = vadd.f32 %v99, %v435
    %v437 = vpop.f32.mrb[0].mxu0
    %v438 = vpop.f32.mrb[0].mxu0
    %v439 = vadd.f32 %v99, %v438
    %v440 = vpop.f32.mrb[0].mxu0
    %441 = vmatprep.mubr.bf16.mxu0 %v204
    %442 = vmatmul.mubr.bf16.gmra.mrb[0].mxu0 %v203
    %v443 = vpop.f32.mrb[0].mxu0
    %v444 = vadd.f32 %v99, %v443
    %v445 = vpop.f32.mrb[0].mxu0
    %v446 = vpop.f32.mrb[0].mxu0
    %v447 = vadd.f32 %v99, %v446
    %v448 = vpop.f32.mrb[0].mxu0
    %449 = vmatprep.mubr.bf16.mxu0 %v206
    %450 = vmatmul.mubr.bf16.gmra.mrb[0].mxu0 %v205
    %v451 = vpop.f32.mrb[0].mxu0
    %v452 = vadd.f32 %v99, %v451
    %v453 = vpop.f32.mrb[0].mxu0
    %v454 = vpop.f32.mrb[0].mxu0
    %v455 = vadd.f32 %v99, %v454
    %v456 = vpop.f32.mrb[0].mxu0
    %457 = vmatprep.mubr.bf16.mxu0 %v208
    %458 = vmatmul.mubr.bf16.gmra.mrb[0].mxu0 %v207
    %v459 = vpop.f32.mrb[0].mxu0
    %v460 = vadd.f32 %v99, %v459
    %v461 = vpop.f32.mrb[0].mxu0
    %v462 = vpop.f32.mrb[0].mxu0
    %v463 = vadd.f32 %v99, %v462
    %v464 = vpop.f32.mrb[0].mxu0
    %465 = vmatprep.mubr.bf16.mxu0 %v210
    %466 = vmatmul.mubr.bf16.gmra.mrb[0].mxu0 %v209
    %v467 = vpop.f32.mrb[0].mxu0
    %v468 = vadd.f32 %v99, %v467
    %v469 = vpop.f32.mrb[0].mxu0
    %v470 = vpop.f32.mrb[0].mxu0
    %v471 = vadd.f32 %v99, %v470
    %v472 = vpop.f32.mrb[0].mxu0
    %473 = vmatprep.mubr.bf16.mxu0 %v212
    %474 = vmatmul.mubr.bf16.gmra.mrb[0].mxu0 %v211
    %v475 = vpop.f32.mrb[0].mxu0
    %v476 = vadd.f32 %v99, %v475
    %v477 = vpop.f32.mrb[0].mxu0
    %v478 = vpop.f32.mrb[0].mxu0
    %v479 = vadd.f32 %v99, %v478
    %v480 = vpop.f32.mrb[0].mxu0
    %481 = vdwg.mxu0
    %v482 = vmax.f32 %v372, 0.0
    %v483 = vmax.f32 %v375, 0.0
    %v484 = vmax.f32 %v380, 0.0
    %v485 = vmax.f32 %v383, 0.0
    %v486 = vmax.f32 %v388, 0.0
    %v487 = vmax.f32 %v391, 0.0
    %v488 = vmax.f32 %v396, 0.0
    %v489 = vmax.f32 %v399, 0.0
    %v490 = vmax.f32 %v404, 0.0
    %v491 = vmax.f32 %v407, 0.0
    %v492 = vmax.f32 %v412, 0.0
    %v493 = vmax.f32 %v415, 0.0
    %v494 = vmax.f32 %v420, 0.0
    %v495 = vmax.f32 %v423, 0.0
    %v496 = vmax.f32 %v428, 0.0
    %v497 = vmax.f32 %v431, 0.0
    %v498 = vmax.f32 %v436, 0.0
    %v499 = vmax.f32 %v439, 0.0
    %v500 = vmax.f32 %v444, 0.0
    %v501 = vmax.f32 %v447, 0.0
    %v502 = vmax.f32 %v452, 0.0
    %v503 = vmax.f32 %v455, 0.0
    %v504 = vmax.f32 %v460, 0.0
    %v505 = vmax.f32 %v463, 0.0
    %v506 = vmax.f32 %v468, 0.0
    %v507 = vmax.f32 %v471, 0.0
    %v508 = vmax.f32 %v476, 0.0
    %v509 = vmax.f32 %v479, 0.0
    %v510 = vmax.f32 %v482, %v489
    %v511 = vmax.f32 %v483, %v490
    %v512 = vmax.f32 %v484, %v491
    %v513 = vmax.f32 %v485, %v492
    %v514 = vmax.f32 %v486, %v493
    %v515 = vmax.f32 %v487, %v494
    %v516 = vmax.f32 %v488, %v495
    %v517 = vmax.f32 %v496, %v503
    %v518 = vmax.f32 %v497, %v504
    %v519 = vmax.f32 %v498, %v505
    %v520 = vmax.f32 %v499, %v506
    %v521 = vmax.f32 %v500, %v507
    %v522 = vmax.f32 %v501, %v508
    %v523 = vmax.f32 %v502, %v509
    %v524 = vmax.f32 %v510, %v517
    %v525 = vmax.f32 %v511, %v518
    %v526 = vmax.f32 %v512, %v519
    %v527 = vmax.f32 %v513, %v520
    %v528 = vmax.f32 %v514, %v521
    %v529 = vmax.f32 %v515, %v522
    %v530 = vmax.f32 %v516, %v523
    %531 = vst [vmem:[#allocation2] sm:$0xff] %v524
    %532 = vst [vmem:[#allocation2 + $0x8] sm:$0xff] %v525
    %533 = vst [vmem:[#allocation2 + $0x10] sm:$0xff] %v526
    %534 = vst [vmem:[#allocation2 + $0x18] sm:$0xff] %v527
    %535 = vst [vmem:[#allocation2 + $0x20] sm:$0xff] %v528
    %536 = vst [vmem:[#allocation2 + $0x28] sm:$0xff] %v529
    %537 = vst [vmem:[#allocation2 + $0x30] sm:$0xff] %v530
    %v538 = vld [vmem:[#allocation2] sm:$0x3]
    %v539 = vld [vmem:[#allocation2 + $0x2] sm:$0x3]
    %v540 = vld [vmem:[#allocation2 + $0x4] sm:$0x3]
    %v541 = vld [vmem:[#allocation2 + $0x6] sm:$0x3]
    %v542 = vld [vmem:[#allocation2 + $0x8] sm:$0x3]
    %v543 = vld [vmem:[#allocation2 + $0xa] sm:$0x3]
    %v544 = vld [vmem:[#allocation2 + $0xc] sm:$0x3]
    %v545 = vld [vmem:[#allocation2 + $0xe] sm:$0x3]
    %v546 = vld [vmem:[#allocation2 + $0x10] sm:$0x3]
    %v547 = vld [vmem:[#allocation2 + $0x12] sm:$0x3]
    %v548 = vld [vmem:[#allocation2 + $0x14] sm:$0x3]
    %v549 = vld [vmem:[#allocation2 + $0x16] sm:$0x3]
    %v550 = vld [vmem:[#allocation2 + $0x18] sm:$0x3]
    %v551 = vld [vmem:[#allocation2 + $0x1a] sm:$0x3]
    %v552 = vld [vmem:[#allocation2 + $0x1c] sm:$0x3]
    %v553 = vld [vmem:[#allocation2 + $0x1e] sm:$0x3]
    %v554 = vld [vmem:[#allocation2 + $0x20] sm:$0x3]
    %v555 = vld [vmem:[#allocation2 + $0x22] sm:$0x3]
    %v556 = vld [vmem:[#allocation2 + $0x24] sm:$0x3]
    %v557 = vld [vmem:[#allocation2 + $0x26] sm:$0x3]
    %v558 = vld [vmem:[#allocation2 + $0x28] sm:$0x3]
    %v559 = vld [vmem:[#allocation2 + $0x2a] sm:$0x3]
    %v560 = vld [vmem:[#allocation2 + $0x2c] sm:$0x3]
    %v561 = vld [vmem:[#allocation2 + $0x2e] sm:$0x3]
    %v562 = vld [vmem:[#allocation2 + $0x30] sm:$0x3]
    %v563 = vpack.c.bf16 %v538, %v538
    %v564 = vpack.c.bf16 %v539, %v539
    %v565 = vpack.c.bf16 %v540, %v540
    %v566 = vpack.c.bf16 %v541, %v541
    %v567 = vpack.c.bf16 %v542, %v542
    %v568 = vpack.c.bf16 %v543, %v543
    %v569 = vpack.c.bf16 %v544, %v544
    %v570 = vpack.c.bf16 %v545, %v545
    %v571 = vpack.c.bf16 %v546, %v546
    %v572 = vpack.c.bf16 %v547, %v547
    %v573 = vpack.c.bf16 %v548, %v548
    %v574 = vpack.c.bf16 %v549, %v549
    %v575 = vpack.c.bf16 %v550, %v550
    %v576 = vpack.c.bf16 %v551, %v551
    %v577 = vpack.c.bf16 %v552, %v552
    %v578 = vpack.c.bf16 %v553, %v553
    %v579 = vpack.c.bf16 %v554, %v554
    %v580 = vpack.c.bf16 %v555, %v555
    %v581 = vpack.c.bf16 %v556, %v556
    %v582 = vpack.c.bf16 %v557, %v557
    %v583 = vpack.c.bf16 %v558, %v558
    %v584 = vpack.c.bf16 %v559, %v559
    %v585 = vpack.c.bf16 %v560, %v560
    %v586 = vpack.c.bf16 %v561, %v561
    %v587 = vpack.c.bf16 %v562, %v562
    %v588 = vld [vmem:[%s3] sm:$0xf]
    %v589 = vld [vmem:[%s3 + $0x4] sm:$0xf]
    %v590 = vld [vmem:[%s3 + $0x8] sm:$0xf]
    %v591 = vld [vmem:[%s3 + $0xc] sm:$0xf]
    %v592 = vld [vmem:[%s3 + $0x10] sm:$0xf]
    %v593 = vld [vmem:[%s3 + $0x14] sm:$0xf]
    %v594 = vld [vmem:[%s3 + $0x18] sm:$0xf]
    %v595 = vld [vmem:[%s3 + $0x1c] sm:$0xf]
    %v596 = vld [vmem:[%s3 + $0x20] sm:$0xf]
    %v597 = vld [vmem:[%s3 + $0x24] sm:$0xf]
    %v598 = vld [vmem:[%s3 + $0x28] sm:$0xf]
    %v599 = vld [vmem:[%s3 + $0x2c] sm:$0xf]
    %v600 = vld [vmem:[%s3 + $0x30] sm:$0xf]
    %v601 = vld [vmem:[%s3 + $0x34] sm:$0xf]
    %v602 = vld [vmem:[%s3 + $0x38] sm:$0xf]
    %v603 = vld [vmem:[%s3 + $0x3c] sm:$0xf]
    %v604 = vld [vmem:[%s3 + $0x40] sm:$0xf]
    %v605 = vld [vmem:[%s3 + $0x44] sm:$0xf]
    %v606 = vld [vmem:[%s3 + $0x48] sm:$0xf]
    %v607 = vld [vmem:[%s3 + $0x4c] sm:$0xf]
    %v608 = vld [vmem:[%s3 + $0x50] sm:$0xf]
    %v609 = vld [vmem:[%s3 + $0x54] sm:$0xf]
    %v610 = vld [vmem:[%s3 + $0x58] sm:$0xf]
    %v611 = vld [vmem:[%s3 + $0x5c] sm:$0xf]
    %v612 = vld [vmem:[%s3 + $0x60] sm:$0xf]
    %v613 = vld [vmem:[%s3 + $0x64] sm:$0xf]
    %v614 = vld [vmem:[%s3 + $0x68] sm:$0xf]
    %v615 = vld [vmem:[%s3 + $0x6c] sm:$0xf]
    %v616 = vld [vmem:[%s3 + $0x70] sm:$0xf]
    %v617 = vld [vmem:[%s3 + $0x74] sm:$0xf]
    %v618 = vld [vmem:[%s3 + $0x78] sm:$0xf]
    %v619 = vld [vmem:[%s3 + $0x7c] sm:$0xf]
    %v620 = vld [vmem:[%s3 + $0x80] sm:$0xf]
    %v621 = vld [vmem:[%s3 + $0x84] sm:$0xf]
    %v622 = vld [vmem:[%s3 + $0x88] sm:$0xf]
    %v623 = vld [vmem:[%s3 + $0x8c] sm:$0xf]
    %v624 = vld [vmem:[%s3 + $0x90] sm:$0xf]
    %v625 = vld [vmem:[%s3 + $0x94] sm:$0xf]
    %v626 = vld [vmem:[%s3 + $0x98] sm:$0xf]
    %v627 = vld [vmem:[%s3 + $0x9c] sm:$0xf]
    %v628 = vld [vmem:[%s3 + $0xa0] sm:$0xf]
    %v629 = vld [vmem:[%s3 + $0xa4] sm:$0xf]
    %v630 = vld [vmem:[%s3 + $0xa8] sm:$0xf]
    %v631 = vld [vmem:[%s3 + $0xac] sm:$0xf]
    %v632 = vld [vmem:[%s3 + $0xb0] sm:$0xf]
    %v633 = vld [vmem:[%s3 + $0xb4] sm:$0xf]
    %v634 = vld [vmem:[%s3 + $0xb8] sm:$0xf]
    %v635 = vld [vmem:[%s3 + $0xbc] sm:$0xf]
    %v636 = vld [vmem:[%s3 + $0xc0] sm:$0xf]
    %v637 = vld [vmem:[%s3 + $0xc4] sm:$0xf]
    %v638 = vld [vmem:[%s3 + $0xc8] sm:$0xf]
    %v639 = vld [vmem:[%s3 + $0xcc] sm:$0xf]
    %v640 = vld [vmem:[%s3 + $0xd0] sm:$0xf]
    %v641 = vld [vmem:[%s3 + $0xd4] sm:$0xf]
    %v642 = vld [vmem:[%s3 + $0xd8] sm:$0xf]
    %v643 = vld [vmem:[%s3 + $0xdc] sm:$0xf]
    %v644 = vld [vmem:[%s3 + $0xe0] sm:$0xf]
    %v645 = vld [vmem:[%s3 + $0xe4] sm:$0xf]
    %v646 = vld [vmem:[%s3 + $0xe8] sm:$0xf]
    %v647 = vld [vmem:[%s3 + $0xec] sm:$0xf]
    %v648 = vld [vmem:[%s3 + $0xf0] sm:$0xf]
    %v649 = vld [vmem:[%s3 + $0xf4] sm:$0xf]
    %v650 = vld [vmem:[%s3 + $0xf8] sm:$0xf]
    %v651 = vld [vmem:[%s3 + $0xfc] sm:$0xf]
    %v652 = vld [vmem:[%s3 + $0x100] sm:$0xf]
    %v653 = vld [vmem:[%s3 + $0x104] sm:$0xf]
    %v654 = vld [vmem:[%s3 + $0x108] sm:$0xf]
    %v655 = vld [vmem:[%s3 + $0x10c] sm:$0xf]
    %v656 = vld [vmem:[%s3 + $0x110] sm:$0xf]
    %v657 = vld [vmem:[%s3 + $0x114] sm:$0xf]
    %v658 = vld [vmem:[%s3 + $0x118] sm:$0xf]
    %v659 = vld [vmem:[%s3 + $0x11c] sm:$0xf]
    %v660 = vld [vmem:[%s3 + $0x120] sm:$0xf]
    %v661 = vld [vmem:[%s3 + $0x124] sm:$0xf]
    %v662 = vld [vmem:[%s3 + $0x128] sm:$0xf]
    %v663 = vld [vmem:[%s3 + $0x12c] sm:$0xf]
    %v664 = vld [vmem:[%s3 + $0x130] sm:$0xf]
    %v665 = vld [vmem:[%s3 + $0x134] sm:$0xf]
    %v666 = vld [vmem:[%s3 + $0x138] sm:$0xf]
    %v667 = vld [vmem:[%s3 + $0x13c] sm:$0xf]
    %v668 = vld [vmem:[%s3 + $0x140] sm:$0xf]
    %v669 = vld [vmem:[%s3 + $0x144] sm:$0xf]
    %v670 = vld [vmem:[%s3 + $0x148] sm:$0xf]
    %v671 = vld [vmem:[%s3 + $0x14c] sm:$0xf]
    %v672 = vld [vmem:[%s3 + $0x150] sm:$0xf]
    %v673 = vld [vmem:[%s3 + $0x154] sm:$0xf]
    %v674 = vld [vmem:[%s3 + $0x158] sm:$0xf]
    %v675 = vld [vmem:[%s3 + $0x15c] sm:$0xf]
    %v676 = vld [vmem:[%s3 + $0x160] sm:$0xf]
    %v677 = vld [vmem:[%s3 + $0x164] sm:$0xf]
    %v678 = vld [vmem:[%s3 + $0x168] sm:$0xf]
    %v679 = vld [vmem:[%s3 + $0x16c] sm:$0xf]
    %v680 = vld [vmem:[%s3 + $0x170] sm:$0xf]
    %v681 = vld [vmem:[%s3 + $0x174] sm:$0xf]
    %v682 = vld [vmem:[%s3 + $0x178] sm:$0xf]
    %v683 = vld [vmem:[%s3 + $0x17c] sm:$0xf]
    %v684 = vld [vmem:[%s3 + $0x180] sm:$0xf]
    %v685 = vld [vmem:[%s3 + $0x184] sm:$0xf]
    %v686 = vld [vmem:[%s3 + $0x188] sm:$0xf]
    %v687 = vld [vmem:[%s3 + $0x18c] sm:$0xf]
    %v688 = vld [vmem:[%s3 + $0x190] sm:$0xf]
    %v689 = vld [vmem:[%s3 + $0x194] sm:$0xf]
    %v690 = vld [vmem:[%s3 + $0x198] sm:$0xf]
    %v691 = vld [vmem:[%s3 + $0x19c] sm:$0xf]
    %v692 = vld [vmem:[%s3 + $0x1a0] sm:$0xf]
    %v693 = vld [vmem:[%s3 + $0x1a4] sm:$0xf]
    %v694 = vld [vmem:[%s3 + $0x1a8] sm:$0xf]
    %v695 = vld [vmem:[%s3 + $0x1ac] sm:$0xf]
    %v696 = vld [vmem:[%s3 + $0x1b0] sm:$0xf]
    %v697 = vld [vmem:[%s3 + $0x1b4] sm:$0xf]
    %v698 = vld [vmem:[%s3 + $0x1b8] sm:$0xf]
    %v699 = vld [vmem:[%s3 + $0x1bc] sm:$0xf]
    %v700 = vld [vmem:[%s3 + $0x1c0] sm:$0xf]
    %v701 = vld [vmem:[%s3 + $0x1c4] sm:$0xf]
    %v702 = vld [vmem:[%s3 + $0x1c8] sm:$0xf]
    %v703 = vld [vmem:[%s3 + $0x1cc] sm:$0xf]
    %v704 = vld [vmem:[%s3 + $0x1d0] sm:$0xf]
    %v705 = vld [vmem:[%s3 + $0x1d4] sm:$0xf]
    %v706 = vld [vmem:[%s3 + $0x1d8] sm:$0xf]
    %v707 = vld [vmem:[%s3 + $0x1dc] sm:$0xf]
    %v708 = vld [vmem:[%s3 + $0x1e0] sm:$0xf]
    %v709 = vld [vmem:[%s3 + $0x1e4] sm:$0xf]
    %v710 = vld [vmem:[%s3 + $0x1e8] sm:$0xf]
    %v711 = vld [vmem:[%s3 + $0x1ec] sm:$0xf]
    %v712 = vld [vmem:[%s3 + $0x1f0] sm:$0xf]
    %v713 = vld [vmem:[%s3 + $0x1f4] sm:$0xf]
    %v714 = vld [vmem:[%s3 + $0x1f8] sm:$0xf]
    %v715 = vld [vmem:[%s3 + $0x1fc] sm:$0xf]
    %v716 = vld [vmem:[%s3 + $0x200] sm:$0xf]
    %v717 = vld [vmem:[%s3 + $0x204] sm:$0xf]
    %v718 = vld [vmem:[%s3 + $0x208] sm:$0xf]
    %v719 = vld [vmem:[%s3 + $0x20c] sm:$0xf]
    %v720 = vld [vmem:[%s3 + $0x210] sm:$0xf]
    %v721 = vld [vmem:[%s3 + $0x214] sm:$0xf]
    %v722 = vld [vmem:[%s3 + $0x218] sm:$0xf]
    %v723 = vld [vmem:[%s3 + $0x21c] sm:$0xf]
    %v724 = vld [vmem:[%s3 + $0x220] sm:$0xf]
    %v725 = vld [vmem:[%s3 + $0x224] sm:$0xf]
    %v726 = vld [vmem:[%s3 + $0x228] sm:$0xf]
    %v727 = vld [vmem:[%s3 + $0x22c] sm:$0xf]
    %v728 = vld [vmem:[%s3 + $0x230] sm:$0xf]
    %v729 = vld [vmem:[%s3 + $0x234] sm:$0xf]
    %v730 = vld [vmem:[%s3 + $0x238] sm:$0xf]
    %v731 = vld [vmem:[%s3 + $0x23c] sm:$0xf]
    %v732 = vld [vmem:[%s3 + $0x240] sm:$0xf]
    %v733 = vld [vmem:[%s3 + $0x244] sm:$0xf]
    %v734 = vld [vmem:[%s3 + $0x248] sm:$0xf]
    %v735 = vld [vmem:[%s3 + $0x24c] sm:$0xf]
    %v736 = vld [vmem:[%s3 + $0x250] sm:$0xf]
    %v737 = vld [vmem:[%s3 + $0x254] sm:$0xf]
    %v738 = vld [vmem:[%s3 + $0x258] sm:$0xf]
    %v739 = vld [vmem:[%s3 + $0x25c] sm:$0xf]
    %v740 = vld [vmem:[%s3 + $0x260] sm:$0xf]
    %v741 = vld [vmem:[%s3 + $0x264] sm:$0xf]
    %v742 = vld [vmem:[%s3 + $0x268] sm:$0xf]
    %v743 = vld [vmem:[%s3 + $0x26c] sm:$0xf]
    %v744 = vld [vmem:[%s3 + $0x270] sm:$0xf]
    %v745 = vld [vmem:[%s3 + $0x274] sm:$0xf]
    %v746 = vld [vmem:[%s3 + $0x278] sm:$0xf]
    %v747 = vld [vmem:[%s3 + $0x27c] sm:$0xf]
    %v748 = vld [vmem:[%s3 + $0x280] sm:$0xf]
    %v749 = vld [vmem:[%s3 + $0x284] sm:$0xf]
    %v750 = vld [vmem:[%s3 + $0x288] sm:$0xf]
    %v751 = vld [vmem:[%s3 + $0x28c] sm:$0xf]
    %v752 = vld [vmem:[%s3 + $0x290] sm:$0xf]
    %v753 = vld [vmem:[%s3 + $0x294] sm:$0xf]
    %v754 = vld [vmem:[%s3 + $0x298] sm:$0xf]
    %v755 = vld [vmem:[%s3 + $0x29c] sm:$0xf]
    %v756 = vld [vmem:[%s3 + $0x2a0] sm:$0xf]
    %v757 = vld [vmem:[%s3 + $0x2a4] sm:$0xf]
    %v758 = vld [vmem:[%s3 + $0x2a8] sm:$0xf]
    %v759 = vld [vmem:[%s3 + $0x2ac] sm:$0xf]
    %v760 = vld [vmem:[%s3 + $0x2b0] sm:$0xf]
    %v761 = vld [vmem:[%s3 + $0x2b4] sm:$0xf]
    %v762 = vld [vmem:[%s3 + $0x2b8] sm:$0xf]
    %v763 = vld [vmem:[%s3 + $0x2bc] sm:$0xf]
    %v764 = vld [vmem:[%s3 + $0x2c0] sm:$0xf]
    %v765 = vld [vmem:[%s3 + $0x2c4] sm:$0xf]
    %v766 = vld [vmem:[%s3 + $0x2c8] sm:$0xf]
    %v767 = vld [vmem:[%s3 + $0x2cc] sm:$0xf]
    %v768 = vld [vmem:[%s3 + $0x2d0] sm:$0xf]
    %v769 = vld [vmem:[%s3 + $0x2d4] sm:$0xf]
    %v770 = vld [vmem:[%s3 + $0x2d8] sm:$0xf]
    %v771 = vld [vmem:[%s3 + $0x2dc] sm:$0xf]
    %v772 = vld [vmem:[%s3 + $0x2e0] sm:$0xf]
    %v773 = vld [vmem:[%s3 + $0x2e4] sm:$0xf]
    %v774 = vld [vmem:[%s3 + $0x2e8] sm:$0xf]
    %v775 = vld [vmem:[%s3 + $0x2ec] sm:$0xf]
    %v776 = vld [vmem:[%s3 + $0x2f0] sm:$0xf]
    %v777 = vld [vmem:[%s3 + $0x2f4] sm:$0xf]
    %v778 = vld [vmem:[%s3 + $0x2f8] sm:$0xf]
    %v779 = vld [vmem:[%s3 + $0x2fc] sm:$0xf]
    %v780 = vld [vmem:[%s3 + $0x300] sm:$0xf]
    %v781 = vld [vmem:[%s3 + $0x304] sm:$0xf]
    %v782 = vld [vmem:[%s3 + $0x308] sm:$0xf]
    %v783 = vld [vmem:[%s3 + $0x30c] sm:$0xf]
    %v784 = vld [vmem:[%s3 + $0x310] sm:$0xf]
    %v785 = vld [vmem:[%s3 + $0x314] sm:$0xf]
    %v786 = vld [vmem:[%s3 + $0x318] sm:$0xf]
    %v787 = vld [vmem:[%s3 + $0x31c] sm:$0xf]
    %v788 = vld [vmem:[%s3 + $0x320] sm:$0xf]
    %v789 = vld [vmem:[%s3 + $0x324] sm:$0xf]
    %v790 = vld [vmem:[%s3 + $0x328] sm:$0xf]
    %v791 = vld [vmem:[%s3 + $0x32c] sm:$0xf]
    %v792 = vld [vmem:[%s3 + $0x330] sm:$0xf]
    %v793 = vld [vmem:[%s3 + $0x334] sm:$0xf]
    %v794 = vld [vmem:[%s3 + $0x338] sm:$0xf]
    %v795 = vld [vmem:[%s3 + $0x33c] sm:$0xf]
    %v796 = vld [vmem:[%s3 + $0x340] sm:$0xf]
    %v797 = vld [vmem:[%s3 + $0x344] sm:$0xf]
    %v798 = vld [vmem:[%s3 + $0x348] sm:$0xf]
    %v799 = vld [vmem:[%s3 + $0x34c] sm:$0xf]
    %v800 = vld [vmem:[%s3 + $0x350] sm:$0xf]
    %v801 = vld [vmem:[%s3 + $0x354] sm:$0xf]
    %v802 = vld [vmem:[%s3 + $0x358] sm:$0xf]
    %v803 = vld [vmem:[%s3 + $0x35c] sm:$0xf]
    %v804 = vld [vmem:[%s3 + $0x360] sm:$0xf]
    %v805 = vld [vmem:[%s3 + $0x364] sm:$0xf]
    %v806 = vld [vmem:[%s3 + $0x368] sm:$0xf]
    %v807 = vld [vmem:[%s3 + $0x36c] sm:$0xf]
    %v808 = vld [vmem:[%s3 + $0x370] sm:$0xf]
    %v809 = vld [vmem:[%s3 + $0x374] sm:$0xf]
    %v810 = vld [vmem:[%s3 + $0x378] sm:$0xf]
    %v811 = vld [vmem:[%s3 + $0x37c] sm:$0xf]
    %v812 = vld [vmem:[%s3 + $0x380] sm:$0xf]
    %v813 = vld [vmem:[%s3 + $0x384] sm:$0xf]
    %v814 = vld [vmem:[%s3 + $0x388] sm:$0xf]
    %v815 = vld [vmem:[%s3 + $0x38c] sm:$0xf]
    %v816 = vld [vmem:[%s3 + $0x390] sm:$0xf]
    %v817 = vld [vmem:[%s3 + $0x394] sm:$0xf]
    %v818 = vld [vmem:[%s3 + $0x398] sm:$0xf]
    %v819 = vld [vmem:[%s3 + $0x39c] sm:$0xf]
    %v820 = vld [vmem:[%s3 + $0x3a0] sm:$0xf]
    %v821 = vld [vmem:[%s3 + $0x3a4] sm:$0xf]
    %v822 = vld [vmem:[%s3 + $0x3a8] sm:$0xf]
    %v823 = vld [vmem:[%s3 + $0x3ac] sm:$0xf]
    %v824 = vld [vmem:[%s3 + $0x3b0] sm:$0xf]
    %v825 = vld [vmem:[%s3 + $0x3b4] sm:$0xf]
    %v826 = vld [vmem:[%s3 + $0x3b8] sm:$0xf]
    %v827 = vld [vmem:[%s3 + $0x3bc] sm:$0xf]
    %v828 = vld [vmem:[%s3 + $0x3c0] sm:$0xf]
    %v829 = vld [vmem:[%s3 + $0x3c4] sm:$0xf]
    %v830 = vld [vmem:[%s3 + $0x3c8] sm:$0xf]
    %v831 = vld [vmem:[%s3 + $0x3cc] sm:$0xf]
    %v832 = vld [vmem:[%s3 + $0x3d0] sm:$0xf]
    %v833 = vld [vmem:[%s3 + $0x3d4] sm:$0xf]
    %v834 = vld [vmem:[%s3 + $0x3d8] sm:$0xf]
    %v835 = vld [vmem:[%s3 + $0x3dc] sm:$0xf]
    %v836 = vld [vmem:[%s3 + $0x3e0] sm:$0xf]
    %v837 = vld [vmem:[%s3 + $0x3e4] sm:$0xf]
    %v838 = vld [vmem:[%s3 + $0x3e8] sm:$0xf]
    %v839 = vld [vmem:[%s3 + $0x3ec] sm:$0xf]
    %v840 = vld [vmem:[%s3 + $0x3f0] sm:$0xf]
    %v841 = vld [vmem:[%s3 + $0x3f4] sm:$0xf]
    %v842 = vld [vmem:[%s3 + $0x3f8] sm:$0xf]
    %v843 = vld [vmem:[%s3 + $0x3fc] sm:$0xf]
    %v844 = vld [vmem:[%s3 + $0x400] sm:$0xf]
    %v845 = vld [vmem:[%s3 + $0x404] sm:$0xf]
    %v846 = vld [vmem:[%s3 + $0x408] sm:$0xf]
    %v847 = vld [vmem:[%s3 + $0x40c] sm:$0xf]
    %v848 = vld [vmem:[%s3 + $0x410] sm:$0xf]
    %v849 = vld [vmem:[%s3 + $0x414] sm:$0xf]
    %v850 = vld [vmem:[%s3 + $0x418] sm:$0xf]
    %v851 = vld [vmem:[%s3 + $0x41c] sm:$0xf]
    %v852 = vld [vmem:[%s3 + $0x420] sm:$0xf]
    %v853 = vld [vmem:[%s3 + $0x424] sm:$0xf]
    %v854 = vld [vmem:[%s3 + $0x428] sm:$0xf]
    %v855 = vld [vmem:[%s3 + $0x42c] sm:$0xf]
    %v856 = vld [vmem:[%s3 + $0x430] sm:$0xf]
    %v857 = vld [vmem:[%s3 + $0x434] sm:$0xf]
    %v858 = vld [vmem:[%s3 + $0x438] sm:$0xf]
    %v859 = vld [vmem:[%s3 + $0x43c] sm:$0xf]
    %v860 = vld [vmem:[%s3 + $0x440] sm:$0xf]
    %v861 = vld [vmem:[%s3 + $0x444] sm:$0xf]
    %v862 = vld [vmem:[%s3 + $0x448] sm:$0xf]
    %v863 = vld [vmem:[%s3 + $0x44c] sm:$0xf]
    %v864 = vld [vmem:[%s3 + $0x450] sm:$0xf]
    %v865 = vld [vmem:[%s3 + $0x454] sm:$0xf]
    %v866 = vld [vmem:[%s3 + $0x458] sm:$0xf]
    %v867 = vld [vmem:[%s3 + $0x45c] sm:$0xf]
    %v868 = vld [vmem:[%s3 + $0x460] sm:$0xf]
    %v869 = vld [vmem:[%s3 + $0x464] sm:$0xf]
    %v870 = vld [vmem:[%s3 + $0x468] sm:$0xf]
    %v871 = vld [vmem:[%s3 + $0x46c] sm:$0xf]
    %v872 = vld [vmem:[%s3 + $0x470] sm:$0xf]
    %v873 = vld [vmem:[%s3 + $0x474] sm:$0xf]
    %v874 = vld [vmem:[%s3 + $0x478] sm:$0xf]
    %v875 = vld [vmem:[%s3 + $0x47c] sm:$0xf]
    %v876 = vld [vmem:[%s3 + $0x480] sm:$0xf]
    %v877 = vld [vmem:[%s3 + $0x484] sm:$0xf]
    %v878 = vld [vmem:[%s3 + $0x488] sm:$0xf]
    %v879 = vld [vmem:[%s3 + $0x48c] sm:$0xf]
    %v880 = vld [vmem:[%s3 + $0x490] sm:$0xf]
    %v881 = vld [vmem:[%s3 + $0x494] sm:$0xf]
    %v882 = vld [vmem:[%s3 + $0x498] sm:$0xf]
    %v883 = vld [vmem:[%s3 + $0x49c] sm:$0xf]
    %v884 = vld [vmem:[%s3 + $0x4a0] sm:$0xf]
    %v885 = vld [vmem:[%s3 + $0x4a4] sm:$0xf]
    %v886 = vld [vmem:[%s3 + $0x4a8] sm:$0xf]
    %v887 = vld [vmem:[%s3 + $0x4ac] sm:$0xf]
    %v888 = vld [vmem:[%s3 + $0x4b0] sm:$0xf]
    %v889 = vld [vmem:[%s3 + $0x4b4] sm:$0xf]
    %v890 = vld [vmem:[%s3 + $0x4b8] sm:$0xf]
    %v891 = vld [vmem:[%s3 + $0x4bc] sm:$0xf]
    %v892 = vld [vmem:[%s3 + $0x4c0] sm:$0xf]
    %v893 = vld [vmem:[%s3 + $0x4c4] sm:$0xf]
    %v894 = vld [vmem:[%s3 + $0x4c8] sm:$0xf]
    %v895 = vld [vmem:[%s3 + $0x4cc] sm:$0xf]
    %v896 = vld [vmem:[%s3 + $0x4d0] sm:$0xf]
    %v897 = vld [vmem:[%s3 + $0x4d4] sm:$0xf]
    %v898 = vld [vmem:[%s3 + $0x4d8] sm:$0xf]
    %v899 = vld [vmem:[%s3 + $0x4dc] sm:$0xf]
    %v900 = vld [vmem:[%s3 + $0x4e0] sm:$0xf]
    %v901 = vld [vmem:[%s3 + $0x4e4] sm:$0xf]
    %v902 = vld [vmem:[%s3 + $0x4e8] sm:$0xf]
    %v903 = vld [vmem:[%s3 + $0x4ec] sm:$0xf]
    %v904 = vld [vmem:[%s3 + $0x4f0] sm:$0xf]
    %v905 = vld [vmem:[%s3 + $0x4f4] sm:$0xf]
    %v906 = vld [vmem:[%s3 + $0x4f8] sm:$0xf]
    %v907 = vld [vmem:[%s3 + $0x4fc] sm:$0xf]
    %v908 = vld [vmem:[%s3 + $0x500] sm:$0xf]
    %v909 = vld [vmem:[%s3 + $0x504] sm:$0xf]
    %v910 = vld [vmem:[%s3 + $0x508] sm:$0xf]
    %v911 = vld [vmem:[%s3 + $0x50c] sm:$0xf]
    %v912 = vld [vmem:[%s3 + $0x510] sm:$0xf]
    %v913 = vld [vmem:[%s3 + $0x514] sm:$0xf]
    %v914 = vld [vmem:[%s3 + $0x518] sm:$0xf]
    %v915 = vld [vmem:[%s3 + $0x51c] sm:$0xf]
    %v916 = vld [vmem:[%s3 + $0x520] sm:$0xf]
    %v917 = vld [vmem:[%s3 + $0x524] sm:$0xf]
    %v918 = vld [vmem:[%s3 + $0x528] sm:$0xf]
    %v919 = vld [vmem:[%s3 + $0x52c] sm:$0xf]
    %v920 = vld [vmem:[%s3 + $0x530] sm:$0xf]
    %v921 = vld [vmem:[%s3 + $0x534] sm:$0xf]
    %v922 = vld [vmem:[%s3 + $0x538] sm:$0xf]
    %v923 = vld [vmem:[%s3 + $0x53c] sm:$0xf]
    %v924 = vld [vmem:[%s3 + $0x540] sm:$0xf]
    %v925 = vld [vmem:[%s3 + $0x544] sm:$0xf]
    %v926 = vld [vmem:[%s3 + $0x548] sm:$0xf]
    %v927 = vld [vmem:[%s3 + $0x54c] sm:$0xf]
    %v928 = vld [vmem:[%s3 + $0x550] sm:$0xf]
    %v929 = vld [vmem:[%s3 + $0x554] sm:$0xf]
    %v930 = vld [vmem:[%s3 + $0x558] sm:$0xf]
    %v931 = vld [vmem:[%s3 + $0x55c] sm:$0xf]
    %v932 = vld [vmem:[%s3 + $0x560] sm:$0xf]
    %v933 = vld [vmem:[%s3 + $0x564] sm:$0xf]
    %v934 = vld [vmem:[%s3 + $0x568] sm:$0xf]
    %v935 = vld [vmem:[%s3 + $0x56c] sm:$0xf]
    %v936 = vld [vmem:[%s3 + $0x570] sm:$0xf]
    %v937 = vld [vmem:[%s3 + $0x574] sm:$0xf]
    %v938 = vld [vmem:[%s3 + $0x578] sm:$0xf]
    %v939 = vld [vmem:[%s3 + $0x57c] sm:$0xf]
    %v940 = vld [vmem:[%s3 + $0x580] sm:$0xf]
    %v941 = vld [vmem:[%s3 + $0x584] sm:$0xf]
    %v942 = vld [vmem:[%s3 + $0x588] sm:$0xf]
    %v943 = vld [vmem:[%s3 + $0x58c] sm:$0xf]
    %v944 = vld [vmem:[%s3 + $0x590] sm:$0xf]
    %v945 = vld [vmem:[%s3 + $0x594] sm:$0xf]
    %v946 = vld [vmem:[%s3 + $0x598] sm:$0xf]
    %v947 = vld [vmem:[%s3 + $0x59c] sm:$0xf]
    %v948 = vld [vmem:[%s3 + $0x5a0] sm:$0xf]
    %v949 = vld [vmem:[%s3 + $0x5a4] sm:$0xf]
    %v950 = vld [vmem:[%s3 + $0x5a8] sm:$0xf]
    %v951 = vld [vmem:[%s3 + $0x5ac] sm:$0xf]
    %v952 = vld [vmem:[%s3 + $0x5b0] sm:$0xf]
    %v953 = vld [vmem:[%s3 + $0x5b4] sm:$0xf]
    %v954 = vld [vmem:[%s3 + $0x5b8] sm:$0xf]
    %v955 = vld [vmem:[%s3 + $0x5bc] sm:$0xf]
    %v956 = vld [vmem:[%s3 + $0x5c0] sm:$0xf]
    %v957 = vld [vmem:[%s3 + $0x5c4] sm:$0xf]
    %v958 = vld [vmem:[%s3 + $0x5c8] sm:$0xf]
    %v959 = vld [vmem:[%s3 + $0x5cc] sm:$0xf]
    %v960 = vld [vmem:[%s3 + $0x5d0] sm:$0xf]
    %v961 = vld [vmem:[%s3 + $0x5d4] sm:$0xf]
    %v962 = vld [vmem:[%s3 + $0x5d8] sm:$0xf]
    %v963 = vld [vmem:[%s3 + $0x5dc] sm:$0xf]
    %v964 = vld [vmem:[%s3 + $0x5e0] sm:$0xf]
    %v965 = vld [vmem:[%s3 + $0x5e4] sm:$0xf]
    %v966 = vld [vmem:[%s3 + $0x5e8] sm:$0xf]
    %v967 = vld [vmem:[%s3 + $0x5ec] sm:$0xf]
    %v968 = vld [vmem:[%s3 + $0x5f0] sm:$0xf]
    %v969 = vld [vmem:[%s3 + $0x5f4] sm:$0xf]
    %v970 = vld [vmem:[%s3 + $0x5f8] sm:$0xf]
    %v971 = vld [vmem:[%s3 + $0x5fc] sm:$0xf]
    %v972 = vld [vmem:[%s3 + $0x600] sm:$0xf]
    %v973 = vld [vmem:[%s3 + $0x604] sm:$0xf]
    %v974 = vld [vmem:[%s3 + $0x608] sm:$0xf]
    %v975 = vld [vmem:[%s3 + $0x60c] sm:$0xf]
    %v976 = vld [vmem:[%s3 + $0x610] sm:$0xf]
    %v977 = vld [vmem:[%s3 + $0x614] sm:$0xf]
    %v978 = vld [vmem:[%s3 + $0x618] sm:$0xf]
    %v979 = vld [vmem:[%s3 + $0x61c] sm:$0xf]
    %v980 = vld [vmem:[%s3 + $0x620] sm:$0xf]
    %v981 = vld [vmem:[%s3 + $0x624] sm:$0xf]
    %v982 = vld [vmem:[%s3 + $0x628] sm:$0xf]
    %v983 = vld [vmem:[%s3 + $0x62c] sm:$0xf]
    %v984 = vld [vmem:[%s3 + $0x630] sm:$0xf]
    %v985 = vld [vmem:[%s3 + $0x634] sm:$0xf]
    %v986 = vld [vmem:[%s3 + $0x638] sm:$0xf]
    %v987 = vld [vmem:[%s3 + $0x63c] sm:$0xf]
    %v988 = vld [vmem:[%s4] sm:$0x1]
    %v990 = vlaneseq
    %v991 = vshrl.u32 %v990, 7
    %v992 = vsub.s32 0, %v991
    %v993 = vrot.slane %v988, %v992
    %v1395 = vunpack.c.l.b16 %v588
    %v1396 = vunpack.c.l.b16 %v589
    %v1397 = vunpack.c.l.b16 %v590
    %v1398 = vunpack.c.l.b16 %v591
    %v1399 = vunpack.c.l.b16 %v592
    %v1400 = vunpack.c.l.b16 %v593
    %v1401 = vunpack.c.l.b16 %v594
    %v1402 = vunpack.c.l.b16 %v595
    %v1403 = vunpack.c.l.b16 %v596
    %v1404 = vunpack.c.l.b16 %v597
    %v1405 = vunpack.c.l.b16 %v598
    %v1406 = vunpack.c.l.b16 %v599
    %v1407 = vunpack.c.l.b16 %v600
    %v1408 = vunpack.c.l.b16 %v601
    %v1409 = vunpack.c.l.b16 %v602
    %v1410 = vunpack.c.l.b16 %v603
    %v1411 = vunpack.c.l.b16 %v604
    %v1412 = vunpack.c.l.b16 %v605
    %v1413 = vunpack.c.l.b16 %v606
    %v1414 = vunpack.c.l.b16 %v607
    %v1415 = vunpack.c.l.b16 %v608
    %v1416 = vunpack.c.l.b16 %v609
    %v1417 = vunpack.c.l.b16 %v610
    %v1418 = vunpack.c.l.b16 %v611
    %v1419 = vunpack.c.l.b16 %v612
    %v1420 = vunpack.c.l.b16 %v613
    %v1421 = vunpack.c.l.b16 %v614
    %v1422 = vunpack.c.l.b16 %v615
    %v1423 = vunpack.c.l.b16 %v616
    %v1424 = vunpack.c.l.b16 %v617
    %v1425 = vunpack.c.l.b16 %v618
    %v1426 = vunpack.c.l.b16 %v619
    %v1427 = vunpack.c.l.b16 %v620
    %v1428 = vunpack.c.l.b16 %v621
    %v1429 = vunpack.c.l.b16 %v622
    %v1430 = vunpack.c.l.b16 %v623
    %v1431 = vunpack.c.l.b16 %v624
    %v1432 = vunpack.c.l.b16 %v625
    %v1433 = vunpack.c.l.b16 %v626
    %v1434 = vunpack.c.l.b16 %v627
    %v1435 = vunpack.c.l.b16 %v628
    %v1436 = vunpack.c.l.b16 %v629
    %v1437 = vunpack.c.l.b16 %v630
    %v1438 = vunpack.c.l.b16 %v631
    %v1439 = vunpack.c.l.b16 %v632
    %v1440 = vunpack.c.l.b16 %v633
    %v1441 = vunpack.c.l.b16 %v634
    %v1442 = vunpack.c.l.b16 %v635
    %v1443 = vunpack.c.l.b16 %v636
    %v1444 = vunpack.c.l.b16 %v637
    %v1445 = vunpack.c.l.b16 %v638
    %v1446 = vunpack.c.l.b16 %v639
    %v1447 = vunpack.c.l.b16 %v640
    %v1448 = vunpack.c.l.b16 %v641
    %v1449 = vunpack.c.l.b16 %v642
    %v1450 = vunpack.c.l.b16 %v643
    %v1451 = vunpack.c.l.b16 %v644
    %v1452 = vunpack.c.l.b16 %v645
    %v1453 = vunpack.c.l.b16 %v646
    %v1454 = vunpack.c.l.b16 %v647
    %v1455 = vunpack.c.l.b16 %v648
    %v1456 = vunpack.c.l.b16 %v649
    %v1457 = vunpack.c.l.b16 %v650
    %v1458 = vunpack.c.l.b16 %v651
    %v1459 = vunpack.c.l.b16 %v652
    %v1460 = vunpack.c.l.b16 %v653
    %v1461 = vunpack.c.l.b16 %v654
    %v1462 = vunpack.c.l.b16 %v655
    %v1463 = vunpack.c.l.b16 %v656
    %v1464 = vunpack.c.l.b16 %v657
    %v1465 = vunpack.c.l.b16 %v658
    %v1466 = vunpack.c.l.b16 %v659
    %v1467 = vunpack.c.l.b16 %v660
    %v1468 = vunpack.c.l.b16 %v661
    %v1469 = vunpack.c.l.b16 %v662
    %v1470 = vunpack.c.l.b16 %v663
    %v1471 = vunpack.c.l.b16 %v664
    %v1472 = vunpack.c.l.b16 %v665
    %v1473 = vunpack.c.l.b16 %v666
    %v1474 = vunpack.c.l.b16 %v667
    %v1475 = vunpack.c.l.b16 %v668
    %v1476 = vunpack.c.l.b16 %v669
    %v1477 = vunpack.c.l.b16 %v670
    %v1478 = vunpack.c.l.b16 %v671
    %v1479 = vunpack.c.l.b16 %v672
    %v1480 = vunpack.c.l.b16 %v673
    %v1481 = vunpack.c.l.b16 %v674
    %v1482 = vunpack.c.l.b16 %v675
    %v1483 = vunpack.c.l.b16 %v676
    %v1484 = vunpack.c.l.b16 %v677
    %v1485 = vunpack.c.l.b16 %v678
    %v1486 = vunpack.c.l.b16 %v679
    %v1487 = vunpack.c.l.b16 %v680
    %v1488 = vunpack.c.l.b16 %v681
    %v1489 = vunpack.c.l.b16 %v682
    %v1490 = vunpack.c.l.b16 %v683
    %v1491 = vunpack.c.l.b16 %v684
    %v1492 = vunpack.c.l.b16 %v685
    %v1493 = vunpack.c.l.b16 %v686
    %v1494 = vunpack.c.l.b16 %v687
    %v1495 = vunpack.c.l.b16 %v688
    %v1496 = vunpack.c.l.b16 %v689
    %v1497 = vunpack.c.l.b16 %v690
    %v1498 = vunpack.c.l.b16 %v691
    %v1499 = vunpack.c.l.b16 %v692
    %v1500 = vunpack.c.l.b16 %v693
    %v1501 = vunpack.c.l.b16 %v694
    %v1502 = vunpack.c.l.b16 %v695
    %v1503 = vunpack.c.l.b16 %v696
    %v1504 = vunpack.c.l.b16 %v697
    %v1505 = vunpack.c.l.b16 %v698
    %v1506 = vunpack.c.l.b16 %v699
    %v1507 = vunpack.c.l.b16 %v700
    %v1508 = vunpack.c.l.b16 %v701
    %v1509 = vunpack.c.l.b16 %v702
    %v1510 = vunpack.c.l.b16 %v703
    %v1511 = vunpack.c.l.b16 %v704
    %v1512 = vunpack.c.l.b16 %v705
    %v1513 = vunpack.c.l.b16 %v706
    %v1514 = vunpack.c.l.b16 %v707
    %v1515 = vunpack.c.l.b16 %v708
    %v1516 = vunpack.c.l.b16 %v709
    %v1517 = vunpack.c.l.b16 %v710
    %v1518 = vunpack.c.l.b16 %v711
    %v1519 = vunpack.c.l.b16 %v712
    %v1520 = vunpack.c.l.b16 %v713
    %v1521 = vunpack.c.l.b16 %v714
    %v1522 = vunpack.c.l.b16 %v715
    %v1523 = vunpack.c.l.b16 %v716
    %v1524 = vunpack.c.l.b16 %v717
    %v1525 = vunpack.c.l.b16 %v718
    %v1526 = vunpack.c.l.b16 %v719
    %v1527 = vunpack.c.l.b16 %v720
    %v1528 = vunpack.c.l.b16 %v721
    %v1529 = vunpack.c.l.b16 %v722
    %v1530 = vunpack.c.l.b16 %v723
    %v1531 = vunpack.c.l.b16 %v724
    %v1532 = vunpack.c.l.b16 %v725
    %v1533 = vunpack.c.l.b16 %v726
    %v1534 = vunpack.c.l.b16 %v727
    %v1535 = vunpack.c.l.b16 %v728
    %v1536 = vunpack.c.l.b16 %v729
    %v1537 = vunpack.c.l.b16 %v730
    %v1538 = vunpack.c.l.b16 %v731
    %v1539 = vunpack.c.l.b16 %v732
    %v1540 = vunpack.c.l.b16 %v733
    %v1541 = vunpack.c.l.b16 %v734
    %v1542 = vunpack.c.l.b16 %v735
    %v1543 = vunpack.c.l.b16 %v736
    %v1544 = vunpack.c.l.b16 %v737
    %v1545 = vunpack.c.l.b16 %v738
    %v1546 = vunpack.c.l.b16 %v739
    %v1547 = vunpack.c.l.b16 %v740
    %v1548 = vunpack.c.l.b16 %v741
    %v1549 = vunpack.c.l.b16 %v742
    %v1550 = vunpack.c.l.b16 %v743
    %v1551 = vunpack.c.l.b16 %v744
    %v1552 = vunpack.c.l.b16 %v745
    %v1553 = vunpack.c.l.b16 %v746
    %v1554 = vunpack.c.l.b16 %v747
    %v1555 = vunpack.c.l.b16 %v748
    %v1556 = vunpack.c.l.b16 %v749
    %v1557 = vunpack.c.l.b16 %v750
    %v1558 = vunpack.c.l.b16 %v751
    %v1559 = vunpack.c.l.b16 %v752
    %v1560 = vunpack.c.l.b16 %v753
    %v1561 = vunpack.c.l.b16 %v754
    %v1562 = vunpack.c.l.b16 %v755
    %v1563 = vunpack.c.l.b16 %v756
    %v1564 = vunpack.c.l.b16 %v757
    %v1565 = vunpack.c.l.b16 %v758
    %v1566 = vunpack.c.l.b16 %v759
    %v1567 = vunpack.c.l.b16 %v760
    %v1568 = vunpack.c.l.b16 %v761
    %v1569 = vunpack.c.l.b16 %v762
    %v1570 = vunpack.c.l.b16 %v763
    %v1571 = vunpack.c.l.b16 %v764
    %v1572 = vunpack.c.l.b16 %v765
    %v1573 = vunpack.c.l.b16 %v766
    %v1574 = vunpack.c.l.b16 %v767
    %v1575 = vunpack.c.l.b16 %v768
    %v1576 = vunpack.c.l.b16 %v769
    %v1577 = vunpack.c.l.b16 %v770
    %v1578 = vunpack.c.l.b16 %v771
    %v1579 = vunpack.c.l.b16 %v772
    %v1580 = vunpack.c.l.b16 %v773
    %v1581 = vunpack.c.l.b16 %v774
    %v1582 = vunpack.c.l.b16 %v775
    %v1583 = vunpack.c.l.b16 %v776
    %v1584 = vunpack.c.l.b16 %v777
    %v1585 = vunpack.c.l.b16 %v778
    %v1586 = vunpack.c.l.b16 %v779
    %v1587 = vunpack.c.l.b16 %v780
    %v1588 = vunpack.c.l.b16 %v781
    %v1589 = vunpack.c.l.b16 %v782
    %v1590 = vunpack.c.l.b16 %v783
    %v1591 = vunpack.c.l.b16 %v784
    %v1592 = vunpack.c.l.b16 %v785
    %v1593 = vunpack.c.l.b16 %v786
    %v1594 = vunpack.c.l.b16 %v787
    %v1595 = vunpack.c.l.b16 %v788
    %v1596 = vunpack.c.l.b16 %v789
    %v1597 = vunpack.c.l.b16 %v790
    %v1598 = vunpack.c.l.b16 %v791
    %v1599 = vunpack.c.l.b16 %v792
    %v1600 = vunpack.c.l.b16 %v793
    %v1601 = vunpack.c.l.b16 %v794
    %v1602 = vunpack.c.l.b16 %v795
    %v1603 = vunpack.c.l.b16 %v796
    %v1604 = vunpack.c.l.b16 %v797
    %v1605 = vunpack.c.l.b16 %v798
    %v1606 = vunpack.c.l.b16 %v799
    %v1607 = vunpack.c.l.b16 %v800
    %v1608 = vunpack.c.l.b16 %v801
    %v1609 = vunpack.c.l.b16 %v802
    %v1610 = vunpack.c.l.b16 %v803
    %v1611 = vunpack.c.l.b16 %v804
    %v1612 = vunpack.c.l.b16 %v805
    %v1613 = vunpack.c.l.b16 %v806
    %v1614 = vunpack.c.l.b16 %v807
    %v1615 = vunpack.c.l.b16 %v808
    %v1616 = vunpack.c.l.b16 %v809
    %v1617 = vunpack.c.l.b16 %v810
    %v1618 = vunpack.c.l.b16 %v811
    %v1619 = vunpack.c.l.b16 %v812
    %v1620 = vunpack.c.l.b16 %v813
    %v1621 = vunpack.c.l.b16 %v814
    %v1622 = vunpack.c.l.b16 %v815
    %v1623 = vunpack.c.l.b16 %v816
    %v1624 = vunpack.c.l.b16 %v817
    %v1625 = vunpack.c.l.b16 %v818
    %v1626 = vunpack.c.l.b16 %v819
    %v1627 = vunpack.c.l.b16 %v820
    %v1628 = vunpack.c.l.b16 %v821
    %v1629 = vunpack.c.l.b16 %v822
    %v1630 = vunpack.c.l.b16 %v823
    %v1631 = vunpack.c.l.b16 %v824
    %v1632 = vunpack.c.l.b16 %v825
    %v1633 = vunpack.c.l.b16 %v826
    %v1634 = vunpack.c.l.b16 %v827
    %v1635 = vunpack.c.l.b16 %v828
    %v1636 = vunpack.c.l.b16 %v829
    %v1637 = vunpack.c.l.b16 %v830
    %v1638 = vunpack.c.l.b16 %v831
    %v1639 = vunpack.c.l.b16 %v832
    %v1640 = vunpack.c.l.b16 %v833
    %v1641 = vunpack.c.l.b16 %v834
    %v1642 = vunpack.c.l.b16 %v835
    %v1643 = vunpack.c.l.b16 %v836
    %v1644 = vunpack.c.l.b16 %v837
    %v1645 = vunpack.c.l.b16 %v838
    %v1646 = vunpack.c.l.b16 %v839
    %v1647 = vunpack.c.l.b16 %v840
    %v1648 = vunpack.c.l.b16 %v841
    %v1649 = vunpack.c.l.b16 %v842
    %v1650 = vunpack.c.l.b16 %v843
    %v1651 = vunpack.c.l.b16 %v844
    %v1652 = vunpack.c.l.b16 %v845
    %v1653 = vunpack.c.l.b16 %v846
    %v1654 = vunpack.c.l.b16 %v847
    %v1655 = vunpack.c.l.b16 %v848
    %v1656 = vunpack.c.l.b16 %v849
    %v1657 = vunpack.c.l.b16 %v850
    %v1658 = vunpack.c.l.b16 %v851
    %v1659 = vunpack.c.l.b16 %v852
    %v1660 = vunpack.c.l.b16 %v853
    %v1661 = vunpack.c.l.b16 %v854
    %v1662 = vunpack.c.l.b16 %v855
    %v1663 = vunpack.c.l.b16 %v856
    %v1664 = vunpack.c.l.b16 %v857
    %v1665 = vunpack.c.l.b16 %v858
    %v1666 = vunpack.c.l.b16 %v859
    %v1667 = vunpack.c.l.b16 %v860
    %v1668 = vunpack.c.l.b16 %v861
    %v1669 = vunpack.c.l.b16 %v862
    %v1670 = vunpack.c.l.b16 %v863
    %v1671 = vunpack.c.l.b16 %v864
    %v1672 = vunpack.c.l.b16 %v865
    %v1673 = vunpack.c.l.b16 %v866
    %v1674 = vunpack.c.l.b16 %v867
    %v1675 = vunpack.c.l.b16 %v868
    %v1676 = vunpack.c.l.b16 %v869
    %v1677 = vunpack.c.l.b16 %v870
    %v1678 = vunpack.c.l.b16 %v871
    %v1679 = vunpack.c.l.b16 %v872
    %v1680 = vunpack.c.l.b16 %v873
    %v1681 = vunpack.c.l.b16 %v874
    %v1682 = vunpack.c.l.b16 %v875
    %v1683 = vunpack.c.l.b16 %v876
    %v1684 = vunpack.c.l.b16 %v877
    %v1685 = vunpack.c.l.b16 %v878
    %v1686 = vunpack.c.l.b16 %v879
    %v1687 = vunpack.c.l.b16 %v880
    %v1688 = vunpack.c.l.b16 %v881
    %v1689 = vunpack.c.l.b16 %v882
    %v1690 = vunpack.c.l.b16 %v883
    %v1691 = vunpack.c.l.b16 %v884
    %v1692 = vunpack.c.l.b16 %v885
    %v1693 = vunpack.c.l.b16 %v886
    %v1694 = vunpack.c.l.b16 %v887
    %v1695 = vunpack.c.l.b16 %v888
    %v1696 = vunpack.c.l.b16 %v889
    %v1697 = vunpack.c.l.b16 %v890
    %v1698 = vunpack.c.l.b16 %v891
    %v1699 = vunpack.c.l.b16 %v892
    %v1700 = vunpack.c.l.b16 %v893
    %v1701 = vunpack.c.l.b16 %v894
    %v1702 = vunpack.c.l.b16 %v895
    %v1703 = vunpack.c.l.b16 %v896
    %v1704 = vunpack.c.l.b16 %v897
    %v1705 = vunpack.c.l.b16 %v898
    %v1706 = vunpack.c.l.b16 %v899
    %v1707 = vunpack.c.l.b16 %v900
    %v1708 = vunpack.c.l.b16 %v901
    %v1709 = vunpack.c.l.b16 %v902
    %v1710 = vunpack.c.l.b16 %v903
    %v1711 = vunpack.c.l.b16 %v904
    %v1712 = vunpack.c.l.b16 %v905
    %v1713 = vunpack.c.l.b16 %v906
    %v1714 = vunpack.c.l.b16 %v907
    %v1715 = vunpack.c.l.b16 %v908
    %v1716 = vunpack.c.l.b16 %v909
    %v1717 = vunpack.c.l.b16 %v910
    %v1718 = vunpack.c.l.b16 %v911
    %v1719 = vunpack.c.l.b16 %v912
    %v1720 = vunpack.c.l.b16 %v913
    %v1721 = vunpack.c.l.b16 %v914
    %v1722 = vunpack.c.l.b16 %v915
    %v1723 = vunpack.c.l.b16 %v916
    %v1724 = vunpack.c.l.b16 %v917
    %v1725 = vunpack.c.l.b16 %v918
    %v1726 = vunpack.c.l.b16 %v919
    %v1727 = vunpack.c.l.b16 %v920
    %v1728 = vunpack.c.l.b16 %v921
    %v1729 = vunpack.c.l.b16 %v922
    %v1730 = vunpack.c.l.b16 %v923
    %v1731 = vunpack.c.l.b16 %v924
    %v1732 = vunpack.c.l.b16 %v925
    %v1733 = vunpack.c.l.b16 %v926
    %v1734 = vunpack.c.l.b16 %v927
    %v1735 = vunpack.c.l.b16 %v928
    %v1736 = vunpack.c.l.b16 %v929
    %v1737 = vunpack.c.l.b16 %v930
    %v1738 = vunpack.c.l.b16 %v931
    %v1739 = vunpack.c.l.b16 %v932
    %v1740 = vunpack.c.l.b16 %v933
    %v1741 = vunpack.c.l.b16 %v934
    %v1742 = vunpack.c.l.b16 %v935
    %v1743 = vunpack.c.l.b16 %v936
    %v1744 = vunpack.c.l.b16 %v937
    %v1745 = vunpack.c.l.b16 %v938
    %v1746 = vunpack.c.l.b16 %v939
    %v1747 = vunpack.c.l.b16 %v940
    %v1748 = vunpack.c.l.b16 %v941
    %v1749 = vunpack.c.l.b16 %v942
    %v1750 = vunpack.c.l.b16 %v943
    %v1751 = vunpack.c.l.b16 %v944
    %v1752 = vunpack.c.l.b16 %v945
    %v1753 = vunpack.c.l.b16 %v946
    %v1754 = vunpack.c.l.b16 %v947
    %v1755 = vunpack.c.l.b16 %v948
    %v1756 = vunpack.c.l.b16 %v949
    %v1757 = vunpack.c.l.b16 %v950
    %v1758 = vunpack.c.l.b16 %v951
    %v1759 = vunpack.c.l.b16 %v952
    %v1760 = vunpack.c.l.b16 %v953
    %v1761 = vunpack.c.l.b16 %v954
    %v1762 = vunpack.c.l.b16 %v955
    %v1763 = vunpack.c.l.b16 %v956
    %v1764 = vunpack.c.l.b16 %v957
    %v1765 = vunpack.c.l.b16 %v958
    %v1766 = vunpack.c.l.b16 %v959
    %v1767 = vunpack.c.l.b16 %v960
    %v1768 = vunpack.c.l.b16 %v961
    %v1769 = vunpack.c.l.b16 %v962
    %v1770 = vunpack.c.l.b16 %v963
    %v1771 = vunpack.c.l.b16 %v964
    %v1772 = vunpack.c.l.b16 %v965
    %v1773 = vunpack.c.l.b16 %v966
    %v1774 = vunpack.c.l.b16 %v967
    %v1775 = vunpack.c.l.b16 %v968
    %v1776 = vunpack.c.l.b16 %v969
    %v1777 = vunpack.c.l.b16 %v970
    %v1778 = vunpack.c.l.b16 %v971
    %v1779 = vunpack.c.l.b16 %v972
    %v1780 = vunpack.c.l.b16 %v973
    %v1781 = vunpack.c.l.b16 %v974
    %v1782 = vunpack.c.l.b16 %v975
    %v1783 = vunpack.c.l.b16 %v976
    %v1784 = vunpack.c.l.b16 %v977
    %v1785 = vunpack.c.l.b16 %v978
    %v1786 = vunpack.c.l.b16 %v979
    %v1787 = vunpack.c.l.b16 %v980
    %v1788 = vunpack.c.l.b16 %v981
    %v1789 = vunpack.c.l.b16 %v982
    %v1790 = vunpack.c.l.b16 %v983
    %v1791 = vunpack.c.l.b16 %v984
    %v1792 = vunpack.c.l.b16 %v985
    %v1793 = vunpack.c.l.b16 %v986
    %v1794 = vunpack.c.l.b16 %v987
    %v1795 = vpack.c.b16 %v1396, %v1395
    %v1796 = vpack.c.b16 %v1398, %v1397
    %v1797 = vpack.c.b16 %v1400, %v1399
    %v1798 = vpack.c.b16 %v1402, %v1401
    %v1799 = vpack.c.b16 %v1404, %v1403
    %v1800 = vpack.c.b16 %v1406, %v1405
    %v1801 = vpack.c.b16 %v1408, %v1407
    %v1802 = vpack.c.b16 %v1410, %v1409
    %v1803 = vpack.c.b16 %v1412, %v1411
    %v1804 = vpack.c.b16 %v1414, %v1413
    %v1805 = vpack.c.b16 %v1416, %v1415
    %v1806 = vpack.c.b16 %v1418, %v1417
    %v1807 = vpack.c.b16 %v1420, %v1419
    %v1808 = vpack.c.b16 %v1422, %v1421
    %v1809 = vpack.c.b16 %v1424, %v1423
    %v1810 = vpack.c.b16 %v1426, %v1425
    %v1811 = vpack.c.b16 %v1428, %v1427
    %v1812 = vpack.c.b16 %v1430, %v1429
    %v1813 = vpack.c.b16 %v1432, %v1431
    %v1814 = vpack.c.b16 %v1434, %v1433
    %v1815 = vpack.c.b16 %v1436, %v1435
    %v1816 = vpack.c.b16 %v1438, %v1437
    %v1817 = vpack.c.b16 %v1440, %v1439
    %v1818 = vpack.c.b16 %v1442, %v1441
    %v1819 = vpack.c.b16 %v1444, %v1443
    %v1820 = vpack.c.b16 %v1446, %v1445
    %v1821 = vpack.c.b16 %v1448, %v1447
    %v1822 = vpack.c.b16 %v1450, %v1449
    %v1823 = vpack.c.b16 %v1452, %v1451
    %v1824 = vpack.c.b16 %v1454, %v1453
    %v1825 = vpack.c.b16 %v1456, %v1455
    %v1826 = vpack.c.b16 %v1458, %v1457
    %v1827 = vpack.c.b16 %v1460, %v1459
    %v1828 = vpack.c.b16 %v1462, %v1461
    %v1829 = vpack.c.b16 %v1464, %v1463
    %v1830 = vpack.c.b16 %v1466, %v1465
    %v1831 = vpack.c.b16 %v1468, %v1467
    %v1832 = vpack.c.b16 %v1470, %v1469
    %v1833 = vpack.c.b16 %v1472, %v1471
    %v1834 = vpack.c.b16 %v1474, %v1473
    %v1835 = vpack.c.b16 %v1476, %v1475
    %v1836 = vpack.c.b16 %v1478, %v1477
    %v1837 = vpack.c.b16 %v1480, %v1479
    %v1838 = vpack.c.b16 %v1482, %v1481
    %v1839 = vpack.c.b16 %v1484, %v1483
    %v1840 = vpack.c.b16 %v1486, %v1485
    %v1841 = vpack.c.b16 %v1488, %v1487
    %v1842 = vpack.c.b16 %v1490, %v1489
    %v1843 = vpack.c.b16 %v1492, %v1491
    %v1844 = vpack.c.b16 %v1494, %v1493
    %v1845 = vpack.c.b16 %v1496, %v1495
    %v1846 = vpack.c.b16 %v1498, %v1497
    %v1847 = vpack.c.b16 %v1500, %v1499
    %v1848 = vpack.c.b16 %v1502, %v1501
    %v1849 = vpack.c.b16 %v1504, %v1503
    %v1850 = vpack.c.b16 %v1506, %v1505
    %v1851 = vpack.c.b16 %v1508, %v1507
    %v1852 = vpack.c.b16 %v1510, %v1509
    %v1853 = vpack.c.b16 %v1512, %v1511
    %v1854 = vpack.c.b16 %v1514, %v1513
    %v1855 = vpack.c.b16 %v1516, %v1515
    %v1856 = vpack.c.b16 %v1518, %v1517
    %v1857 = vpack.c.b16 %v1520, %v1519
    %v1858 = vpack.c.b16 %v1522, %v1521
    %v1859 = vpack.c.b16 %v1524, %v1523
    %v1860 = vpack.c.b16 %v1526, %v1525
    %v1861 = vpack.c.b16 %v1528, %v1527
    %v1862 = vpack.c.b16 %v1530, %v1529
    %v1863 = vpack.c.b16 %v1532, %v1531
    %v1864 = vpack.c.b16 %v1534, %v1533
    %v1865 = vpack.c.b16 %v1536, %v1535
    %v1866 = vpack.c.b16 %v1538, %v1537
    %v1867 = vpack.c.b16 %v1540, %v1539
    %v1868 = vpack.c.b16 %v1542, %v1541
    %v1869 = vpack.c.b16 %v1544, %v1543
    %v1870 = vpack.c.b16 %v1546, %v1545
    %v1871 = vpack.c.b16 %v1548, %v1547
    %v1872 = vpack.c.b16 %v1550, %v1549
    %v1873 = vpack.c.b16 %v1552, %v1551
    %v1874 = vpack.c.b16 %v1554, %v1553
    %v1875 = vpack.c.b16 %v1556, %v1555
    %v1876 = vpack.c.b16 %v1558, %v1557
    %v1877 = vpack.c.b16 %v1560, %v1559
    %v1878 = vpack.c.b16 %v1562, %v1561
    %v1879 = vpack.c.b16 %v1564, %v1563
    %v1880 = vpack.c.b16 %v1566, %v1565
    %v1881 = vpack.c.b16 %v1568, %v1567
    %v1882 = vpack.c.b16 %v1570, %v1569
    %v1883 = vpack.c.b16 %v1572, %v1571
    %v1884 = vpack.c.b16 %v1574, %v1573
    %v1885 = vpack.c.b16 %v1576, %v1575
    %v1886 = vpack.c.b16 %v1578, %v1577
    %v1887 = vpack.c.b16 %v1580, %v1579
    %v1888 = vpack.c.b16 %v1582, %v1581
    %v1889 = vpack.c.b16 %v1584, %v1583
    %v1890 = vpack.c.b16 %v1586, %v1585
    %v1891 = vpack.c.b16 %v1588, %v1587
    %v1892 = vpack.c.b16 %v1590, %v1589
    %v1893 = vpack.c.b16 %v1592, %v1591
    %v1894 = vpack.c.b16 %v1594, %v1593
    %v1895 = vpack.c.b16 %v1596, %v1595
    %v1896 = vpack.c.b16 %v1598, %v1597
    %v1897 = vpack.c.b16 %v1600, %v1599
    %v1898 = vpack.c.b16 %v1602, %v1601
    %v1899 = vpack.c.b16 %v1604, %v1603
    %v1900 = vpack.c.b16 %v1606, %v1605
    %v1901 = vpack.c.b16 %v1608, %v1607
    %v1902 = vpack.c.b16 %v1610, %v1609
    %v1903 = vpack.c.b16 %v1612, %v1611
    %v1904 = vpack.c.b16 %v1614, %v1613
    %v1905 = vpack.c.b16 %v1616, %v1615
    %v1906 = vpack.c.b16 %v1618, %v1617
    %v1907 = vpack.c.b16 %v1620, %v1619
    %v1908 = vpack.c.b16 %v1622, %v1621
    %v1909 = vpack.c.b16 %v1624, %v1623
    %v1910 = vpack.c.b16 %v1626, %v1625
    %v1911 = vpack.c.b16 %v1628, %v1627
    %v1912 = vpack.c.b16 %v1630, %v1629
    %v1913 = vpack.c.b16 %v1632, %v1631
    %v1914 = vpack.c.b16 %v1634, %v1633
    %v1915 = vpack.c.b16 %v1636, %v1635
    %v1916 = vpack.c.b16 %v1638, %v1637
    %v1917 = vpack.c.b16 %v1640, %v1639
    %v1918 = vpack.c.b16 %v1642, %v1641
    %v1919 = vpack.c.b16 %v1644, %v1643
    %v1920 = vpack.c.b16 %v1646, %v1645
    %v1921 = vpack.c.b16 %v1648, %v1647
    %v1922 = vpack.c.b16 %v1650, %v1649
    %v1923 = vpack.c.b16 %v1652, %v1651
    %v1924 = vpack.c.b16 %v1654, %v1653
    %v1925 = vpack.c.b16 %v1656, %v1655
    %v1926 = vpack.c.b16 %v1658, %v1657
    %v1927 = vpack.c.b16 %v1660, %v1659
    %v1928 = vpack.c.b16 %v1662, %v1661
    %v1929 = vpack.c.b16 %v1664, %v1663
    %v1930 = vpack.c.b16 %v1666, %v1665
    %v1931 = vpack.c.b16 %v1668, %v1667
    %v1932 = vpack.c.b16 %v1670, %v1669
    %v1933 = vpack.c.b16 %v1672, %v1671
    %v1934 = vpack.c.b16 %v1674, %v1673
    %v1935 = vpack.c.b16 %v1676, %v1675
    %v1936 = vpack.c.b16 %v1678, %v1677
    %v1937 = vpack.c.b16 %v1680, %v1679
    %v1938 = vpack.c.b16 %v1682, %v1681
    %v1939 = vpack.c.b16 %v1684, %v1683
    %v1940 = vpack.c.b16 %v1686, %v1685
    %v1941 = vpack.c.b16 %v1688, %v1687
    %v1942 = vpack.c.b16 %v1690, %v1689
    %v1943 = vpack.c.b16 %v1692, %v1691
    %v1944 = vpack.c.b16 %v1694, %v1693
    %v1945 = vpack.c.b16 %v1696, %v1695
    %v1946 = vpack.c.b16 %v1698, %v1697
    %v1947 = vpack.c.b16 %v1700, %v1699
    %v1948 = vpack.c.b16 %v1702, %v1701
    %v1949 = vpack.c.b16 %v1704, %v1703
    %v1950 = vpack.c.b16 %v1706, %v1705
    %v1951 = vpack.c.b16 %v1708, %v1707
    %v1952 = vpack.c.b16 %v1710, %v1709
    %v1953 = vpack.c.b16 %v1712, %v1711
    %v1954 = vpack.c.b16 %v1714, %v1713
    %v1955 = vpack.c.b16 %v1716, %v1715
    %v1956 = vpack.c.b16 %v1718, %v1717
    %v1957 = vpack.c.b16 %v1720, %v1719
    %v1958 = vpack.c.b16 %v1722, %v1721
    %v1959 = vpack.c.b16 %v1724, %v1723
    %v1960 = vpack.c.b16 %v1726, %v1725
    %v1961 = vpack.c.b16 %v1728, %v1727
    %v1962 = vpack.c.b16 %v1730, %v1729
    %v1963 = vpack.c.b16 %v1732, %v1731
    %v1964 = vpack.c.b16 %v1734, %v1733
    %v1965 = vpack.c.b16 %v1736, %v1735
    %v1966 = vpack.c.b16 %v1738, %v1737
    %v1967 = vpack.c.b16 %v1740, %v1739
    %v1968 = vpack.c.b16 %v1742, %v1741
    %v1969 = vpack.c.b16 %v1744, %v1743
    %v1970 = vpack.c.b16 %v1746, %v1745
    %v1971 = vpack.c.b16 %v1748, %v1747
    %v1972 = vpack.c.b16 %v1750, %v1749
    %v1973 = vpack.c.b16 %v1752, %v1751
    %v1974 = vpack.c.b16 %v1754, %v1753
    %v1975 = vpack.c.b16 %v1756, %v1755
    %v1976 = vpack.c.b16 %v1758, %v1757
    %v1977 = vpack.c.b16 %v1760, %v1759
    %v1978 = vpack.c.b16 %v1762, %v1761
    %v1979 = vpack.c.b16 %v1764, %v1763
    %v1980 = vpack.c.b16 %v1766, %v1765
    %v1981 = vpack.c.b16 %v1768, %v1767
    %v1982 = vpack.c.b16 %v1770, %v1769
    %v1983 = vpack.c.b16 %v1772, %v1771
    %v1984 = vpack.c.b16 %v1774, %v1773
    %v1985 = vpack.c.b16 %v1776, %v1775
    %v1986 = vpack.c.b16 %v1778, %v1777
    %v1987 = vpack.c.b16 %v1780, %v1779
    %v1988 = vpack.c.b16 %v1782, %v1781
    %v1989 = vpack.c.b16 %v1784, %v1783
    %v1990 = vpack.c.b16 %v1786, %v1785
    %v1991 = vpack.c.b16 %v1788, %v1787
    %v1992 = vpack.c.b16 %v1790, %v1789
    %v1993 = vpack.c.b16 %v1792, %v1791
    %v1994 = vpack.c.b16 %v1794, %v1793
    %2195 = vmatprep.subr.bf16.mxu0 0
    %2196 = vmatpush1.bf16.msra.mxu0 %v1795
    %2197 = vmatprep.subr.bf16.mxu0 0
    %2198 = vmatpush1.bf16.msra.mxu0 %v1796
    %2199 = vmatprep.subr.bf16.mxu0 0
    %2200 = vmatpush1.bf16.msra.mxu0 %v1797
    %2201 = vmatprep.subr.bf16.mxu0 0
    %2202 = vmatpush1.bf16.msra.mxu0 %v1798
    %2203 = vmatprep.subr.bf16.mxu0 0
    %2204 = vmatpush1.bf16.msra.mxu0 %v1799
    %2205 = vmatprep.subr.bf16.mxu0 0
    %2206 = vmatpush1.bf16.msra.mxu0 %v1800
    %2207 = vmatprep.subr.bf16.mxu0 0
    %2208 = vmatpush1.bf16.msra.mxu0 %v1801
    %2209 = vmatprep.subr.bf16.mxu0 0
    %2210 = vmatpush1.bf16.msra.mxu0 %v1802
    %2211 = vmatprep.subr.bf16.mxu0 0
    %2212 = vmatpush1.bf16.msra.mxu0 %v1803
    %2213 = vmatprep.subr.bf16.mxu0 0
    %2214 = vmatpush1.bf16.msra.mxu0 %v1804
    %2215 = vmatprep.subr.bf16.mxu0 0
    %2216 = vmatpush1.bf16.msra.mxu0 %v1805
    %2217 = vmatprep.subr.bf16.mxu0 0
    %2218 = vmatpush1.bf16.msra.mxu0 %v1806
    %2219 = vmatprep.subr.bf16.mxu0 0
    %2220 = vmatpush1.bf16.msra.mxu0 %v1807
    %2221 = vmatprep.subr.bf16.mxu0 0
    %2222 = vmatpush1.bf16.msra.mxu0 %v1808
    %2223 = vmatprep.subr.bf16.mxu0 0
    %2224 = vmatpush1.bf16.msra.mxu0 %v1809
    %2225 = vmatprep.subr.bf16.mxu0 0
    %2226 = vmatpush1.bf16.msra.mxu0 %v1810
    %2227 = vmatprep.mubr.bf16.mxu0 %v564
    %2228 = vmatmul.mubr.bf16.gmra.mrb[0].mxu0 %v563
    %v2229 = vpop.f32.mrb[0].mxu0
    %v2230 = vadd.f32 %v993, %v2229
    %v2231 = vpop.f32.mrb[0].mxu0
    %v2232 = vpop.f32.mrb[0].mxu0
    %v2233 = vpop.f32.mrb[0].mxu0
    %2234 = vdwg.mxu0
    %2235 = vmatprep.subr.bf16.mxu0 0
    %2236 = vmatpush1.bf16.msra.mxu0 %v1811
    %2237 = vmatprep.subr.bf16.mxu0 0
    %2238 = vmatpush1.bf16.msra.mxu0 %v1812
    %2239 = vmatprep.subr.bf16.mxu0 0
    %2240 = vmatpush1.bf16.msra.mxu0 %v1813
    %2241 = vmatprep.subr.bf16.mxu0 0
    %2242 = vmatpush1.bf16.msra.mxu0 %v1814
    %2243 = vmatprep.subr.bf16.mxu0 0
    %2244 = vmatpush1.bf16.msra.mxu0 %v1815
    %2245 = vmatprep.subr.bf16.mxu0 0
    %2246 = vmatpush1.bf16.msra.mxu0 %v1816
    %2247 = vmatprep.subr.bf16.mxu0 0
    %2248 = vmatpush1.bf16.msra.mxu0 %v1817
    %2249 = vmatprep.subr.bf16.mxu0 0
    %2250 = vmatpush1.bf16.msra.mxu0 %v1818
    %2251 = vmatprep.subr.bf16.mxu0 0
    %2252 = vmatpush1.bf16.msra.mxu0 %v1819
    %2253 = vmatprep.subr.bf16.mxu0 0
    %2254 = vmatpush1.bf16.msra.mxu0 %v1820
    %2255 = vmatprep.subr.bf16.mxu0 0
    %2256 = vmatpush1.bf16.msra.mxu0 %v1821
    %2257 = vmatprep.subr.bf16.mxu0 0
    %2258 = vmatpush1.bf16.msra.mxu0 %v1822
    %2259 = vmatprep.subr.bf16.mxu0 0
    %2260 = vmatpush1.bf16.msra.mxu0 %v1823
    %2261 = vmatprep.subr.bf16.mxu0 0
    %2262 = vmatpush1.bf16.msra.mxu0 %v1824
    %2263 = vmatprep.subr.bf16.mxu0 0
    %2264 = vmatpush1.bf16.msra.mxu0 %v1825
    %2265 = vmatprep.subr.bf16.mxu0 0
    %2266 = vmatpush1.bf16.msra.mxu0 %v1826
    %2267 = vmatprep.mubr.bf16.mxu0 %v566
    %2268 = vmatmul.mubr.bf16.gmra.mrb[0].mxu0 %v565
    %v2269 = vpop.f32.mrb[0].mxu0
    %v2270 = vadd.f32 %v2230, %v2269
    %v2271 = vpop.f32.mrb[0].mxu0
    %v2272 = vpop.f32.mrb[0].mxu0
    %v2273 = vpop.f32.mrb[0].mxu0
    %2274 = vdwg.mxu0
    %2275 = vmatprep.subr.bf16.mxu0 0
    %2276 = vmatpush1.bf16.msra.mxu0 %v1827
    %2277 = vmatprep.subr.bf16.mxu0 0
    %2278 = vmatpush1.bf16.msra.mxu0 %v1828
    %2279 = vmatprep.subr.bf16.mxu0 0
    %2280 = vmatpush1.bf16.msra.mxu0 %v1829
    %2281 = vmatprep.subr.bf16.mxu0 0
    %2282 = vmatpush1.bf16.msra.mxu0 %v1830
    %2283 = vmatprep.subr.bf16.mxu0 0
    %2284 = vmatpush1.bf16.msra.mxu0 %v1831
    %2285 = vmatprep.subr.bf16.mxu0 0
    %2286 = vmatpush1.bf16.msra.mxu0 %v1832
    %2287 = vmatprep.subr.bf16.mxu0 0
    %2288 = vmatpush1.bf16.msra.mxu0 %v1833
    %2289 = vmatprep.subr.bf16.mxu0 0
    %2290 = vmatpush1.bf16.msra.mxu0 %v1834
    %2291 = vmatprep.subr.bf16.mxu0 0
    %2292 = vmatpush1.bf16.msra.mxu0 %v1835
    %2293 = vmatprep.subr.bf16.mxu0 0
    %2294 = vmatpush1.bf16.msra.mxu0 %v1836
    %2295 = vmatprep.subr.bf16.mxu0 0
    %2296 = vmatpush1.bf16.msra.mxu0 %v1837
    %2297 = vmatprep.subr.bf16.mxu0 0
    %2298 = vmatpush1.bf16.msra.mxu0 %v1838
    %2299 = vmatprep.subr.bf16.mxu0 0
    %2300 = vmatpush1.bf16.msra.mxu0 %v1839
    %2301 = vmatprep.subr.bf16.mxu0 0
    %2302 = vmatpush1.bf16.msra.mxu0 %v1840
    %2303 = vmatprep.subr.bf16.mxu0 0
    %2304 = vmatpush1.bf16.msra.mxu0 %v1841
    %2305 = vmatprep.subr.bf16.mxu0 0
    %2306 = vmatpush1.bf16.msra.mxu0 %v1842
    %2307 = vmatprep.mubr.bf16.mxu0 %v568
    %2308 = vmatmul.mubr.bf16.gmra.mrb[0].mxu0 %v567
    %v2309 = vpop.f32.mrb[0].mxu0
    %v2310 = vadd.f32 %v2270, %v2309
    %v2311 = vpop.f32.mrb[0].mxu0
    %v2312 = vpop.f32.mrb[0].mxu0
    %v2313 = vpop.f32.mrb[0].mxu0
    %2314 = vdwg.mxu0
    %2315 = vmatprep.subr.bf16.mxu0 0
    %2316 = vmatpush1.bf16.msra.mxu0 %v1843
    %2317 = vmatprep.subr.bf16.mxu0 0
    %2318 = vmatpush1.bf16.msra.mxu0 %v1844
    %2319 = vmatprep.subr.bf16.mxu0 0
    %2320 = vmatpush1.bf16.msra.mxu0 %v1845
    %2321 = vmatprep.subr.bf16.mxu0 0
    %2322 = vmatpush1.bf16.msra.mxu0 %v1846
    %2323 = vmatprep.subr.bf16.mxu0 0
    %2324 = vmatpush1.bf16.msra.mxu0 %v1847
    %2325 = vmatprep.subr.bf16.mxu0 0
    %2326 = vmatpush1.bf16.msra.mxu0 %v1848
    %2327 = vmatprep.subr.bf16.mxu0 0
    %2328 = vmatpush1.bf16.msra.mxu0 %v1849
    %2329 = vmatprep.subr.bf16.mxu0 0
    %2330 = vmatpush1.bf16.msra.mxu0 %v1850
    %2331 = vmatprep.subr.bf16.mxu0 0
    %2332 = vmatpush1.bf16.msra.mxu0 %v1851
    %2333 = vmatprep.subr.bf16.mxu0 0
    %2334 = vmatpush1.bf16.msra.mxu0 %v1852
    %2335 = vmatprep.subr.bf16.mxu0 0
    %2336 = vmatpush1.bf16.msra.mxu0 %v1853
    %2337 = vmatprep.subr.bf16.mxu0 0
    %2338 = vmatpush1.bf16.msra.mxu0 %v1854
    %2339 = vmatprep.subr.bf16.mxu0 0
    %2340 = vmatpush1.bf16.msra.mxu0 %v1855
    %2341 = vmatprep.subr.bf16.mxu0 0
    %2342 = vmatpush1.bf16.msra.mxu0 %v1856
    %2343 = vmatprep.subr.bf16.mxu0 0
    %2344 = vmatpush1.bf16.msra.mxu0 %v1857
    %2345 = vmatprep.subr.bf16.mxu0 0
    %2346 = vmatpush1.bf16.msra.mxu0 %v1858
    %2347 = vmatprep.mubr.bf16.mxu0 %v570
    %2348 = vmatmul.mubr.bf16.gmra.mrb[0].mxu0 %v569
    %v2349 = vpop.f32.mrb[0].mxu0
    %v2350 = vadd.f32 %v2310, %v2349
    %v2351 = vpop.f32.mrb[0].mxu0
    %v2352 = vpop.f32.mrb[0].mxu0
    %v2353 = vpop.f32.mrb[0].mxu0
    %2354 = vdwg.mxu0
    %2355 = vmatprep.subr.bf16.mxu0 0
    %2356 = vmatpush1.bf16.msra.mxu0 %v1859
    %2357 = vmatprep.subr.bf16.mxu0 0
    %2358 = vmatpush1.bf16.msra.mxu0 %v1860
    %2359 = vmatprep.subr.bf16.mxu0 0
    %2360 = vmatpush1.bf16.msra.mxu0 %v1861
    %2361 = vmatprep.subr.bf16.mxu0 0
    %2362 = vmatpush1.bf16.msra.mxu0 %v1862
    %2363 = vmatprep.subr.bf16.mxu0 0
    %2364 = vmatpush1.bf16.msra.mxu0 %v1863
    %2365 = vmatprep.subr.bf16.mxu0 0
    %2366 = vmatpush1.bf16.msra.mxu0 %v1864
    %2367 = vmatprep.subr.bf16.mxu0 0
    %2368 = vmatpush1.bf16.msra.mxu0 %v1865
    %2369 = vmatprep.subr.bf16.mxu0 0
    %2370 = vmatpush1.bf16.msra.mxu0 %v1866
    %2371 = vmatprep.subr.bf16.mxu0 0
    %2372 = vmatpush1.bf16.msra.mxu0 %v1867
    %2373 = vmatprep.subr.bf16.mxu0 0
    %2374 = vmatpush1.bf16.msra.mxu0 %v1868
    %2375 = vmatprep.subr.bf16.mxu0 0
    %2376 = vmatpush1.bf16.msra.mxu0 %v1869
    %2377 = vmatprep.subr.bf16.mxu0 0
    %2378 = vmatpush1.bf16.msra.mxu0 %v1870
    %2379 = vmatprep.subr.bf16.mxu0 0
    %2380 = vmatpush1.bf16.msra.mxu0 %v1871
    %2381 = vmatprep.subr.bf16.mxu0 0
    %2382 = vmatpush1.bf16.msra.mxu0 %v1872
    %2383 = vmatprep.subr.bf16.mxu0 0
    %2384 = vmatpush1.bf16.msra.mxu0 %v1873
    %2385 = vmatprep.subr.bf16.mxu0 0
    %2386 = vmatpush1.bf16.msra.mxu0 %v1874
    %2387 = vmatprep.mubr.bf16.mxu0 %v572
    %2388 = vmatmul.mubr.bf16.gmra.mrb[0].mxu0 %v571
    %v2389 = vpop.f32.mrb[0].mxu0
    %v2390 = vadd.f32 %v2350, %v2389
    %v2391 = vpop.f32.mrb[0].mxu0
    %v2392 = vpop.f32.mrb[0].mxu0
    %v2393 = vpop.f32.mrb[0].mxu0
    %2394 = vdwg.mxu0
    %2395 = vmatprep.subr.bf16.mxu0 0
    %2396 = vmatpush1.bf16.msra.mxu0 %v1875
    %2397 = vmatprep.subr.bf16.mxu0 0
    %2398 = vmatpush1.bf16.msra.mxu0 %v1876
    %2399 = vmatprep.subr.bf16.mxu0 0
    %2400 = vmatpush1.bf16.msra.mxu0 %v1877
    %2401 = vmatprep.subr.bf16.mxu0 0
    %2402 = vmatpush1.bf16.msra.mxu0 %v1878
    %2403 = vmatprep.subr.bf16.mxu0 0
    %2404 = vmatpush1.bf16.msra.mxu0 %v1879
    %2405 = vmatprep.subr.bf16.mxu0 0
    %2406 = vmatpush1.bf16.msra.mxu0 %v1880
    %2407 = vmatprep.subr.bf16.mxu0 0
    %2408 = vmatpush1.bf16.msra.mxu0 %v1881
    %2409 = vmatprep.subr.bf16.mxu0 0
    %2410 = vmatpush1.bf16.msra.mxu0 %v1882
    %2411 = vmatprep.subr.bf16.mxu0 0
    %2412 = vmatpush1.bf16.msra.mxu0 %v1883
    %2413 = vmatprep.subr.bf16.mxu0 0
    %2414 = vmatpush1.bf16.msra.mxu0 %v1884
    %2415 = vmatprep.subr.bf16.mxu0 0
    %2416 = vmatpush1.bf16.msra.mxu0 %v1885
    %2417 = vmatprep.subr.bf16.mxu0 0
    %2418 = vmatpush1.bf16.msra.mxu0 %v1886
    %2419 = vmatprep.subr.bf16.mxu0 0
    %2420 = vmatpush1.bf16.msra.mxu0 %v1887
    %2421 = vmatprep.subr.bf16.mxu0 0
    %2422 = vmatpush1.bf16.msra.mxu0 %v1888
    %2423 = vmatprep.subr.bf16.mxu0 0
    %2424 = vmatpush1.bf16.msra.mxu0 %v1889
    %2425 = vmatprep.subr.bf16.mxu0 0
    %2426 = vmatpush1.bf16.msra.mxu0 %v1890
    %2427 = vmatprep.mubr.bf16.mxu0 %v574
    %2428 = vmatmul.mubr.bf16.gmra.mrb[0].mxu0 %v573
    %v2429 = vpop.f32.mrb[0].mxu0
    %v2430 = vadd.f32 %v2390, %v2429
    %v2431 = vpop.f32.mrb[0].mxu0
    %v2432 = vpop.f32.mrb[0].mxu0
    %v2433 = vpop.f32.mrb[0].mxu0
    %2434 = vdwg.mxu0
    %2435 = vmatprep.subr.bf16.mxu0 0
    %2436 = vmatpush1.bf16.msra.mxu0 %v1891
    %2437 = vmatprep.subr.bf16.mxu0 0
    %2438 = vmatpush1.bf16.msra.mxu0 %v1892
    %2439 = vmatprep.subr.bf16.mxu0 0
    %2440 = vmatpush1.bf16.msra.mxu0 %v1893
    %2441 = vmatprep.subr.bf16.mxu0 0
    %2442 = vmatpush1.bf16.msra.mxu0 %v1894
    %2443 = vmatprep.subr.bf16.mxu0 0
    %2444 = vmatpush1.bf16.msra.mxu0 %v1895
    %2445 = vmatprep.subr.bf16.mxu0 0
    %2446 = vmatpush1.bf16.msra.mxu0 %v1896
    %2447 = vmatprep.subr.bf16.mxu0 0
    %2448 = vmatpush1.bf16.msra.mxu0 %v1897
    %2449 = vmatprep.subr.bf16.mxu0 0
    %2450 = vmatpush1.bf16.msra.mxu0 %v1898
    %2451 = vmatprep.subr.bf16.mxu0 0
    %2452 = vmatpush1.bf16.msra.mxu0 %v1899
    %2453 = vmatprep.subr.bf16.mxu0 0
    %2454 = vmatpush1.bf16.msra.mxu0 %v1900
    %2455 = vmatprep.subr.bf16.mxu0 0
    %2456 = vmatpush1.bf16.msra.mxu0 %v1901
    %2457 = vmatprep.subr.bf16.mxu0 0
    %2458 = vmatpush1.bf16.msra.mxu0 %v1902
    %2459 = vmatprep.subr.bf16.mxu0 0
    %2460 = vmatpush1.bf16.msra.mxu0 %v1903
    %2461 = vmatprep.subr.bf16.mxu0 0
    %2462 = vmatpush1.bf16.msra.mxu0 %v1904
    %2463 = vmatprep.subr.bf16.mxu0 0
    %2464 = vmatpush1.bf16.msra.mxu0 %v1905
    %2465 = vmatprep.subr.bf16.mxu0 0
    %2466 = vmatpush1.bf16.msra.mxu0 %v1906
    %2467 = vmatprep.mubr.bf16.mxu0 %v576
    %2468 = vmatmul.mubr.bf16.gmra.mrb[0].mxu0 %v575
    %v2469 = vpop.f32.mrb[0].mxu0
    %v2470 = vadd.f32 %v2430, %v2469
    %v2471 = vpop.f32.mrb[0].mxu0
    %v2472 = vpop.f32.mrb[0].mxu0
    %v2473 = vpop.f32.mrb[0].mxu0
    %2474 = vdwg.mxu0
    %2475 = vmatprep.subr.bf16.mxu0 0
    %2476 = vmatpush1.bf16.msra.mxu0 %v1907
    %2477 = vmatprep.subr.bf16.mxu0 0
    %2478 = vmatpush1.bf16.msra.mxu0 %v1908
    %2479 = vmatprep.subr.bf16.mxu0 0
    %2480 = vmatpush1.bf16.msra.mxu0 %v1909
    %2481 = vmatprep.subr.bf16.mxu0 0
    %2482 = vmatpush1.bf16.msra.mxu0 %v1910
    %2483 = vmatprep.subr.bf16.mxu0 0
    %2484 = vmatpush1.bf16.msra.mxu0 %v1911
    %2485 = vmatprep.subr.bf16.mxu0 0
    %2486 = vmatpush1.bf16.msra.mxu0 %v1912
    %2487 = vmatprep.subr.bf16.mxu0 0
    %2488 = vmatpush1.bf16.msra.mxu0 %v1913
    %2489 = vmatprep.subr.bf16.mxu0 0
    %2490 = vmatpush1.bf16.msra.mxu0 %v1914
    %2491 = vmatprep.subr.bf16.mxu0 0
    %2492 = vmatpush1.bf16.msra.mxu0 %v1915
    %2493 = vmatprep.subr.bf16.mxu0 0
    %2494 = vmatpush1.bf16.msra.mxu0 %v1916
    %2495 = vmatprep.subr.bf16.mxu0 0
    %2496 = vmatpush1.bf16.msra.mxu0 %v1917
    %2497 = vmatprep.subr.bf16.mxu0 0
    %2498 = vmatpush1.bf16.msra.mxu0 %v1918
    %2499 = vmatprep.subr.bf16.mxu0 0
    %2500 = vmatpush1.bf16.msra.mxu0 %v1919
    %2501 = vmatprep.subr.bf16.mxu0 0
    %2502 = vmatpush1.bf16.msra.mxu0 %v1920
    %2503 = vmatprep.subr.bf16.mxu0 0
    %2504 = vmatpush1.bf16.msra.mxu0 %v1921
    %2505 = vmatprep.subr.bf16.mxu0 0
    %2506 = vmatpush1.bf16.msra.mxu0 %v1922
    %2507 = vmatprep.mubr.bf16.mxu0 %v578
    %2508 = vmatmul.mubr.bf16.gmra.mrb[0].mxu0 %v577
    %v2509 = vpop.f32.mrb[0].mxu0
    %v2510 = vadd.f32 %v2470, %v2509
    %v2511 = vpop.f32.mrb[0].mxu0
    %v2512 = vpop.f32.mrb[0].mxu0
    %v2513 = vpop.f32.mrb[0].mxu0
    %2514 = vdwg.mxu0
    %2515 = vmatprep.subr.bf16.mxu0 0
    %2516 = vmatpush1.bf16.msra.mxu0 %v1923
    %2517 = vmatprep.subr.bf16.mxu0 0
    %2518 = vmatpush1.bf16.msra.mxu0 %v1924
    %2519 = vmatprep.subr.bf16.mxu0 0
    %2520 = vmatpush1.bf16.msra.mxu0 %v1925
    %2521 = vmatprep.subr.bf16.mxu0 0
    %2522 = vmatpush1.bf16.msra.mxu0 %v1926
    %2523 = vmatprep.subr.bf16.mxu0 0
    %2524 = vmatpush1.bf16.msra.mxu0 %v1927
    %2525 = vmatprep.subr.bf16.mxu0 0
    %2526 = vmatpush1.bf16.msra.mxu0 %v1928
    %2527 = vmatprep.subr.bf16.mxu0 0
    %2528 = vmatpush1.bf16.msra.mxu0 %v1929
    %2529 = vmatprep.subr.bf16.mxu0 0
    %2530 = vmatpush1.bf16.msra.mxu0 %v1930
    %2531 = vmatprep.subr.bf16.mxu0 0
    %2532 = vmatpush1.bf16.msra.mxu0 %v1931
    %2533 = vmatprep.subr.bf16.mxu0 0
    %2534 = vmatpush1.bf16.msra.mxu0 %v1932
    %2535 = vmatprep.subr.bf16.mxu0 0
    %2536 = vmatpush1.bf16.msra.mxu0 %v1933
    %2537 = vmatprep.subr.bf16.mxu0 0
    %2538 = vmatpush1.bf16.msra.mxu0 %v1934
    %2539 = vmatprep.subr.bf16.mxu0 0
    %2540 = vmatpush1.bf16.msra.mxu0 %v1935
    %2541 = vmatprep.subr.bf16.mxu0 0
    %2542 = vmatpush1.bf16.msra.mxu0 %v1936
    %2543 = vmatprep.subr.bf16.mxu0 0
    %2544 = vmatpush1.bf16.msra.mxu0 %v1937
    %2545 = vmatprep.subr.bf16.mxu0 0
    %2546 = vmatpush1.bf16.msra.mxu0 %v1938
    %2547 = vmatprep.mubr.bf16.mxu0 %v580
    %2548 = vmatmul.mubr.bf16.gmra.mrb[0].mxu0 %v579
    %v2549 = vpop.f32.mrb[0].mxu0
    %v2550 = vadd.f32 %v2510, %v2549
    %v2551 = vpop.f32.mrb[0].mxu0
    %v2552 = vpop.f32.mrb[0].mxu0
    %v2553 = vpop.f32.mrb[0].mxu0
    %2554 = vdwg.mxu0
    %2555 = vmatprep.subr.bf16.mxu0 0
    %2556 = vmatpush1.bf16.msra.mxu0 %v1939
    %2557 = vmatprep.subr.bf16.mxu0 0
    %2558 = vmatpush1.bf16.msra.mxu0 %v1940
    %2559 = vmatprep.subr.bf16.mxu0 0
    %2560 = vmatpush1.bf16.msra.mxu0 %v1941
    %2561 = vmatprep.subr.bf16.mxu0 0
    %2562 = vmatpush1.bf16.msra.mxu0 %v1942
    %2563 = vmatprep.subr.bf16.mxu0 0
    %2564 = vmatpush1.bf16.msra.mxu0 %v1943
    %2565 = vmatprep.subr.bf16.mxu0 0
    %2566 = vmatpush1.bf16.msra.mxu0 %v1944
    %2567 = vmatprep.subr.bf16.mxu0 0
    %2568 = vmatpush1.bf16.msra.mxu0 %v1945
    %2569 = vmatprep.subr.bf16.mxu0 0
    %2570 = vmatpush1.bf16.msra.mxu0 %v1946
    %2571 = vmatprep.subr.bf16.mxu0 0
    %2572 = vmatpush1.bf16.msra.mxu0 %v1947
    %2573 = vmatprep.subr.bf16.mxu0 0
    %2574 = vmatpush1.bf16.msra.mxu0 %v1948
    %2575 = vmatprep.subr.bf16.mxu0 0
    %2576 = vmatpush1.bf16.msra.mxu0 %v1949
    %2577 = vmatprep.subr.bf16.mxu0 0
    %2578 = vmatpush1.bf16.msra.mxu0 %v1950
    %2579 = vmatprep.subr.bf16.mxu0 0
    %2580 = vmatpush1.bf16.msra.mxu0 %v1951
    %2581 = vmatprep.subr.bf16.mxu0 0
    %2582 = vmatpush1.bf16.msra.mxu0 %v1952
    %2583 = vmatprep.subr.bf16.mxu0 0
    %2584 = vmatpush1.bf16.msra.mxu0 %v1953
    %2585 = vmatprep.subr.bf16.mxu0 0
    %2586 = vmatpush1.bf16.msra.mxu0 %v1954
    %2587 = vmatprep.mubr.bf16.mxu0 %v582
    %2588 = vmatmul.mubr.bf16.gmra.mrb[0].mxu0 %v581
    %v2589 = vpop.f32.mrb[0].mxu0
    %v2590 = vadd.f32 %v2550, %v2589
    %v2591 = vpop.f32.mrb[0].mxu0
    %v2592 = vpop.f32.mrb[0].mxu0
    %v2593 = vpop.f32.mrb[0].mxu0
    %2594 = vdwg.mxu0
    %2595 = vmatprep.subr.bf16.mxu0 0
    %2596 = vmatpush1.bf16.msra.mxu0 %v1955
    %2597 = vmatprep.subr.bf16.mxu0 0
    %2598 = vmatpush1.bf16.msra.mxu0 %v1956
    %2599 = vmatprep.subr.bf16.mxu0 0
    %2600 = vmatpush1.bf16.msra.mxu0 %v1957
    %2601 = vmatprep.subr.bf16.mxu0 0
    %2602 = vmatpush1.bf16.msra.mxu0 %v1958
    %2603 = vmatprep.subr.bf16.mxu0 0
    %2604 = vmatpush1.bf16.msra.mxu0 %v1959
    %2605 = vmatprep.subr.bf16.mxu0 0
    %2606 = vmatpush1.bf16.msra.mxu0 %v1960
    %2607 = vmatprep.subr.bf16.mxu0 0
    %2608 = vmatpush1.bf16.msra.mxu0 %v1961
    %2609 = vmatprep.subr.bf16.mxu0 0
    %2610 = vmatpush1.bf16.msra.mxu0 %v1962
    %2611 = vmatprep.subr.bf16.mxu0 0
    %2612 = vmatpush1.bf16.msra.mxu0 %v1963
    %2613 = vmatprep.subr.bf16.mxu0 0
    %2614 = vmatpush1.bf16.msra.mxu0 %v1964
    %2615 = vmatprep.subr.bf16.mxu0 0
    %2616 = vmatpush1.bf16.msra.mxu0 %v1965
    %2617 = vmatprep.subr.bf16.mxu0 0
    %2618 = vmatpush1.bf16.msra.mxu0 %v1966
    %2619 = vmatprep.subr.bf16.mxu0 0
    %2620 = vmatpush1.bf16.msra.mxu0 %v1967
    %2621 = vmatprep.subr.bf16.mxu0 0
    %2622 = vmatpush1.bf16.msra.mxu0 %v1968
    %2623 = vmatprep.subr.bf16.mxu0 0
    %2624 = vmatpush1.bf16.msra.mxu0 %v1969
    %2625 = vmatprep.subr.bf16.mxu0 0
    %2626 = vmatpush1.bf16.msra.mxu0 %v1970
    %2627 = vmatprep.mubr.bf16.mxu0 %v584
    %2628 = vmatmul.mubr.bf16.gmra.mrb[0].mxu0 %v583
    %v2629 = vpop.f32.mrb[0].mxu0
    %v2630 = vadd.f32 %v2590, %v2629
    %v2631 = vpop.f32.mrb[0].mxu0
    %v2632 = vpop.f32.mrb[0].mxu0
    %v2633 = vpop.f32.mrb[0].mxu0
    %2634 = vdwg.mxu0
    %2635 = vmatprep.subr.bf16.mxu0 0
    %2636 = vmatpush1.bf16.msra.mxu0 %v1971
    %2637 = vmatprep.subr.bf16.mxu0 0
    %2638 = vmatpush1.bf16.msra.mxu0 %v1972
    %2639 = vmatprep.subr.bf16.mxu0 0
    %2640 = vmatpush1.bf16.msra.mxu0 %v1973
    %2641 = vmatprep.subr.bf16.mxu0 0
    %2642 = vmatpush1.bf16.msra.mxu0 %v1974
    %2643 = vmatprep.subr.bf16.mxu0 0
    %2644 = vmatpush1.bf16.msra.mxu0 %v1975
    %2645 = vmatprep.subr.bf16.mxu0 0
    %2646 = vmatpush1.bf16.msra.mxu0 %v1976
    %2647 = vmatprep.subr.bf16.mxu0 0
    %2648 = vmatpush1.bf16.msra.mxu0 %v1977
    %2649 = vmatprep.subr.bf16.mxu0 0
    %2650 = vmatpush1.bf16.msra.mxu0 %v1978
    %2651 = vmatprep.subr.bf16.mxu0 0
    %2652 = vmatpush1.bf16.msra.mxu0 %v1979
    %2653 = vmatprep.subr.bf16.mxu0 0
    %2654 = vmatpush1.bf16.msra.mxu0 %v1980
    %2655 = vmatprep.subr.bf16.mxu0 0
    %2656 = vmatpush1.bf16.msra.mxu0 %v1981
    %2657 = vmatprep.subr.bf16.mxu0 0
    %2658 = vmatpush1.bf16.msra.mxu0 %v1982
    %2659 = vmatprep.subr.bf16.mxu0 0
    %2660 = vmatpush1.bf16.msra.mxu0 %v1983
    %2661 = vmatprep.subr.bf16.mxu0 0
    %2662 = vmatpush1.bf16.msra.mxu0 %v1984
    %2663 = vmatprep.subr.bf16.mxu0 0
    %2664 = vmatpush1.bf16.msra.mxu0 %v1985
    %2665 = vmatprep.subr.bf16.mxu0 0
    %2666 = vmatpush1.bf16.msra.mxu0 %v1986
    %2667 = vmatprep.mubr.bf16.mxu0 %v586
    %2668 = vmatmul.mubr.bf16.gmra.mrb[0].mxu0 %v585
    %v2669 = vpop.f32.mrb[0].mxu0
    %v2670 = vadd.f32 %v2630, %v2669
    %v2671 = vpop.f32.mrb[0].mxu0
    %v2672 = vpop.f32.mrb[0].mxu0
    %v2673 = vpop.f32.mrb[0].mxu0
    %2674 = vdwg.mxu0
    %2675 = vmatprep.subr.bf16.mxu0 0
    %2676 = vmatpush1.bf16.msra.mxu0 %v1987
    %2677 = vmatprep.subr.bf16.mxu0 0
    %2678 = vmatpush1.bf16.msra.mxu0 %v1988
    %2679 = vmatprep.subr.bf16.mxu0 0
    %2680 = vmatpush1.bf16.msra.mxu0 %v1989
    %2681 = vmatprep.subr.bf16.mxu0 0
    %2682 = vmatpush1.bf16.msra.mxu0 %v1990
    %2683 = vmatprep.subr.bf16.mxu0 0
    %2684 = vmatpush1.bf16.msra.mxu0 %v1991
    %2685 = vmatprep.subr.bf16.mxu0 0
    %2686 = vmatpush1.bf16.msra.mxu0 %v1992
    %2687 = vmatprep.subr.bf16.mxu0 0
    %2688 = vmatpush1.bf16.msra.mxu0 %v1993
    %2689 = vmatprep.subr.bf16.mxu0 0
    %2690 = vmatpush1.bf16.msra.mxu0 %v1994
    %2691 = vmatprep.subr.bf16.mxu0 0
    %2692 = vmatpush1.bf16.msra.mxu0 0
    %2693 = vmatprep.subr.bf16.mxu0 0
    %2694 = vmatpush1.bf16.msra.mxu0 0
    %2695 = vmatprep.subr.bf16.mxu0 0
    %2696 = vmatpush1.bf16.msra.mxu0 0
    %2697 = vmatprep.subr.bf16.mxu0 0
    %2698 = vmatpush1.bf16.msra.mxu0 0
    %2699 = vmatprep.subr.bf16.mxu0 0
    %2700 = vmatpush1.bf16.msra.mxu0 0
    %2701 = vmatprep.subr.bf16.mxu0 0
    %2702 = vmatpush1.bf16.msra.mxu0 0
    %2703 = vmatprep.subr.bf16.mxu0 0
    %2704 = vmatpush1.bf16.msra.mxu0 0
    %2705 = vmatprep.subr.bf16.mxu0 0
    %2706 = vmatpush1.bf16.msra.mxu0 0
    %2707 = vmatprep.mubr.bf16.mxu0 0
    %2708 = vmatmul.mubr.bf16.gmra.mrb[0].mxu0 %v587
    %v2709 = vpop.f32.mrb[0].mxu0
    %v2710 = vadd.f32 %v2670, %v2709
    %v2711 = vpop.f32.mrb[0].mxu0
    %v2712 = vpop.f32.mrb[0].mxu0
    %v2713 = vpop.f32.mrb[0].mxu0
    %2714 = vdwg.mxu0
    %v2715 = vmax.f32 %v2710, 0.0
    %v2716 = vpack.c.bf16 %v2715, %v2715
    %v2717 = vld [vmem:[%s5] sm:$0xf]
    %v2718 = vld [vmem:[%s5 + $0x4] sm:$0xf]
    %v2719 = vld [vmem:[%s5 + $0x8] sm:$0xf]
    %v2720 = vld [vmem:[%s5 + $0xc] sm:$0xf]
    %v2721 = vld [vmem:[%s5 + $0x10] sm:$0xf]
    %v2722 = vld [vmem:[%s5 + $0x14] sm:$0xf]
    %v2723 = vld [vmem:[%s5 + $0x18] sm:$0xf]
    %v2724 = vld [vmem:[%s5 + $0x1c] sm:$0xf]
    %v2725 = vld [vmem:[%s5 + $0x20] sm:$0xf]
    %v2726 = vld [vmem:[%s5 + $0x24] sm:$0xf]
    %v2727 = vld [vmem:[%s5 + $0x28] sm:$0xf]
    %v2728 = vld [vmem:[%s5 + $0x2c] sm:$0xf]
    %v2729 = vld [vmem:[%s5 + $0x30] sm:$0xf]
    %v2730 = vld [vmem:[%s5 + $0x34] sm:$0xf]
    %v2731 = vld [vmem:[%s5 + $0x38] sm:$0xf]
    %v2732 = vld [vmem:[%s5 + $0x3c] sm:$0xf]
    %v2733 = vld [vmem:[%s6] sm:$0x1]
    %v2735 = vlaneseq
    %v2736 = vshrl.u32 %v2735, 7
    %v2737 = vsub.s32 0, %v2736
    %v2738 = vrot.slane %v2733, %v2737
    %v2756 = vunpack.c.l.b16 %v2717
    %v2757 = vunpack.c.l.b16 %v2718
    %v2758 = vunpack.c.l.b16 %v2719
    %v2759 = vunpack.c.l.b16 %v2720
    %v2760 = vunpack.c.l.b16 %v2721
    %v2761 = vunpack.c.l.b16 %v2722
    %v2762 = vunpack.c.l.b16 %v2723
    %v2763 = vunpack.c.l.b16 %v2724
    %v2764 = vunpack.c.l.b16 %v2725
    %v2765 = vunpack.c.l.b16 %v2726
    %v2766 = vunpack.c.l.b16 %v2727
    %v2767 = vunpack.c.l.b16 %v2728
    %v2768 = vunpack.c.l.b16 %v2729
    %v2769 = vunpack.c.l.b16 %v2730
    %v2770 = vunpack.c.l.b16 %v2731
    %v2771 = vunpack.c.l.b16 %v2732
    %v2772 = vpack.c.b16 %v2757, %v2756
    %v2773 = vpack.c.b16 %v2759, %v2758
    %v2774 = vpack.c.b16 %v2761, %v2760
    %v2775 = vpack.c.b16 %v2763, %v2762
    %v2776 = vpack.c.b16 %v2765, %v2764
    %v2777 = vpack.c.b16 %v2767, %v2766
    %v2778 = vpack.c.b16 %v2769, %v2768
    %v2779 = vpack.c.b16 %v2771, %v2770
    %2788 = vmatprep.subr.bf16.mxu0 0
    %2789 = vmatpush1.bf16.msra.mxu0 %v2772
    %2790 = vmatprep.subr.bf16.mxu0 0
    %2791 = vmatpush1.bf16.msra.mxu0 %v2773
    %2792 = vmatprep.subr.bf16.mxu0 0
    %2793 = vmatpush1.bf16.msra.mxu0 %v2774
    %2794 = vmatprep.subr.bf16.mxu0 0
    %2795 = vmatpush1.bf16.msra.mxu0 %v2775
    %2796 = vmatprep.subr.bf16.mxu0 0
    %2797 = vmatpush1.bf16.msra.mxu0 %v2776
    %2798 = vmatprep.subr.bf16.mxu0 0
    %2799 = vmatpush1.bf16.msra.mxu0 %v2777
    %2800 = vmatprep.subr.bf16.mxu0 0
    %2801 = vmatpush1.bf16.msra.mxu0 %v2778
    %2802 = vmatprep.subr.bf16.mxu0 0
    %2803 = vmatpush1.bf16.msra.mxu0 %v2779
    %2804 = vmatprep.subr.bf16.mxu0 0
    %2805 = vmatpush1.bf16.msra.mxu0 0
    %2806 = vmatprep.subr.bf16.mxu0 0
    %2807 = vmatpush1.bf16.msra.mxu0 0
    %2808 = vmatprep.subr.bf16.mxu0 0
    %2809 = vmatpush1.bf16.msra.mxu0 0
    %2810 = vmatprep.subr.bf16.mxu0 0
    %2811 = vmatpush1.bf16.msra.mxu0 0
    %2812 = vmatprep.subr.bf16.mxu0 0
    %2813 = vmatpush1.bf16.msra.mxu0 0
    %2814 = vmatprep.subr.bf16.mxu0 0
    %2815 = vmatpush1.bf16.msra.mxu0 0
    %2816 = vmatprep.subr.bf16.mxu0 0
    %2817 = vmatpush1.bf16.msra.mxu0 0
    %2818 = vmatprep.subr.bf16.mxu0 0
    %2819 = vmatpush1.bf16.msra.mxu0 0
    %2820 = vmatprep.mubr.bf16.mxu0 0
    %2821 = vmatmul.mubr.bf16.gmra.mrb[0].mxu0 %v2716
    %v2822 = vpop.f32.mrb[0].mxu0
    %v2823 = vadd.f32 %v2738, %v2822
    %v2824 = vpop.f32.mrb[0].mxu0
    %v2825 = vpop.f32.mrb[0].mxu0
    %v2826 = vpop.f32.mrb[0].mxu0
    %2827 = vdwg.mxu0
    %v2828 = vmax.f32 %v2823, 0.0
    %v2829 = vpack.c.bf16 %v2828, %v2828
    %v2830 = vld [vmem:[%s7] sm:$0xf]
    %v2831 = vld [vmem:[%s7 + $0x4] sm:$0xf]
    %v2832 = vld [vmem:[%s7 + $0x8] sm:$0xf]
    %v2833 = vld [vmem:[%s7 + $0xc] sm:$0xf]
    %v2834 = vld [vmem:[%s7 + $0x10] sm:$0xf]
    %v2835 = vld [vmem:[%s7 + $0x14] sm:$0xf]
    %v2836 = vld [vmem:[%s7 + $0x18] sm:$0xf]
    %v2837 = vld [vmem:[%s7 + $0x1c] sm:$0xf]
    %v2838 = vld [vmem:[%s7 + $0x20] sm:$0xf]
    %v2839 = vld [vmem:[%s7 + $0x24] sm:$0xf]
    %v2840 = vld [vmem:[%s7 + $0x28] sm:$0xf]
    %v2841 = vld [vmem:[%s7 + $0x2c] sm:$0xf]
    %v2842 = vld [vmem:[%s7 + $0x30] sm:$0xf]
    %v2843 = vld [vmem:[%s7 + $0x34] sm:$0xf]
    %v2844 = vld [vmem:[%s7 + $0x38] sm:$0xf]
    %v2845 = vld [vmem:[%s7 + $0x3c] sm:$0xf]
    %v2846 = vld [vmem:[%s8] sm:$0x1]
    %v2848 = vlaneseq
    %v2849 = vshrl.u32 %v2848, 7
    %v2850 = vsub.s32 0, %v2849
    %v2851 = vrot.slane %v2846, %v2850
    %v2869 = vunpack.c.l.b16 %v2830
    %v2870 = vunpack.c.l.b16 %v2831
    %v2871 = vunpack.c.l.b16 %v2832
    %v2872 = vunpack.c.l.b16 %v2833
    %v2873 = vunpack.c.l.b16 %v2834
    %v2874 = vunpack.c.l.b16 %v2835
    %v2875 = vunpack.c.l.b16 %v2836
    %v2876 = vunpack.c.l.b16 %v2837
    %v2877 = vunpack.c.l.b16 %v2838
    %v2878 = vunpack.c.l.b16 %v2839
    %v2879 = vunpack.c.l.b16 %v2840
    %v2880 = vunpack.c.l.b16 %v2841
    %v2881 = vunpack.c.l.b16 %v2842
    %v2882 = vunpack.c.l.b16 %v2843
    %v2883 = vunpack.c.l.b16 %v2844
    %v2884 = vunpack.c.l.b16 %v2845
    %v2885 = vpack.c.b16 %v2870, %v2869
    %v2886 = vpack.c.b16 %v2872, %v2871
    %v2887 = vpack.c.b16 %v2874, %v2873
    %v2888 = vpack.c.b16 %v2876, %v2875
    %v2889 = vpack.c.b16 %v2878, %v2877
    %v2890 = vpack.c.b16 %v2880, %v2879
    %v2891 = vpack.c.b16 %v2882, %v2881
    %v2892 = vpack.c.b16 %v2884, %v2883
    %2901 = vmatprep.subr.bf16.mxu0 0
    %2902 = vmatpush1.bf16.msra.mxu0 %v2885
    %2903 = vmatprep.subr.bf16.mxu0 0
    %2904 = vmatpush1.bf16.msra.mxu0 %v2886
    %2905 = vmatprep.subr.bf16.mxu0 0
    %2906 = vmatpush1.bf16.msra.mxu0 %v2887
    %2907 = vmatprep.subr.bf16.mxu0 0
    %2908 = vmatpush1.bf16.msra.mxu0 %v2888
    %2909 = vmatprep.subr.bf16.mxu0 0
    %2910 = vmatpush1.bf16.msra.mxu0 %v2889
    %2911 = vmatprep.subr.bf16.mxu0 0
    %2912 = vmatpush1.bf16.msra.mxu0 %v2890
    %2913 = vmatprep.subr.bf16.mxu0 0
    %2914 = vmatpush1.bf16.msra.mxu0 %v2891
    %2915 = vmatprep.subr.bf16.mxu0 0
    %2916 = vmatpush1.bf16.msra.mxu0 %v2892
    %2917 = vmatprep.subr.bf16.mxu0 0
    %2918 = vmatpush1.bf16.msra.mxu0 0
    %2919 = vmatprep.subr.bf16.mxu0 0
    %2920 = vmatpush1.bf16.msra.mxu0 0
    %2921 = vmatprep.subr.bf16.mxu0 0
    %2922 = vmatpush1.bf16.msra.mxu0 0
    %2923 = vmatprep.subr.bf16.mxu0 0
    %2924 = vmatpush1.bf16.msra.mxu0 0
    %2925 = vmatprep.subr.bf16.mxu0 0
    %2926 = vmatpush1.bf16.msra.mxu0 0
    %2927 = vmatprep.subr.bf16.mxu0 0
    %2928 = vmatpush1.bf16.msra.mxu0 0
    %2929 = vmatprep.subr.bf16.mxu0 0
    %2930 = vmatpush1.bf16.msra.mxu0 0
    %2931 = vmatprep.subr.bf16.mxu0 0
    %2932 = vmatpush1.bf16.msra.mxu0 0
    %2933 = vmatprep.mubr.bf16.mxu0 0
    %2934 = vmatmul.mubr.bf16.gmra.mrb[0].mxu0 %v2829
    %v2935 = vpop.f32.mrb[0].mxu0
    %v2936 = vadd.f32 %v2851, %v2935
    %v2937 = vpop.f32.mrb[0].mxu0
    %v2938 = vpop.f32.mrb[0].mxu0
    %v2939 = vpop.f32.mrb[0].mxu0
    %2940 = vdwg.mxu0
    %vm2941 = vcmask 1041408
    %v2942 = vsel %vm2941, %v2936, -inf
    %2943 = vmax.xlane.f32.xlu0 %v2942
    %v2944 = vpop.xlane.xlu0 %2943
    %v2945 = vsub.f32 %v2936, %v2944
    %v2946 = vmul.f32 %v2945, 1.442695
    %v2947 = vpow.pop %v2946
    %v2948 = vsel %vm2941, %v2947, 0.0
    %2949 = vadd.xlane.f32.xlu0 %v2948
    %v2950 = vpop.xlane.xlu0 %2949
    %v2951 = vlog2.pop %v2950
    %v2952 = vmul.f32 %v2951, 0.6931472
    %v2953 = vsub.f32 %v2945, %v2952
    %2954 = vst [vmem:[#allocation3] sm:$0x3] %v2953
    // Predicated region
    $region38: #{cnn_cifar_forward.3} parent=1 // pred_check
      _
    $region39: #{cnn_cifar_forward.3} parent=1 // pred_check_branch
      %2956 = sbr.rel (0) target = $region41
    $region40: #{cnn_cifar_forward.3} parent=1 // pred_region
      %s2958 = ssub.s32 32, 32
      %2959 = vsyncadd [#allocation4], %s2958
      %s2961 = sshll.u32 [#allocation3], 4
      %s2962 = int_to_ptr.vmem [resolvable:$true] %s2961
      %2964 = dma.vmem_to_hbm [thread:$0]  %s2962, 32, %s9, [#allocation4]
    $region41: #{cnn_cifar_forward.3} parent=1 // pred_fallthru
      _
    // Predicated region
    $region42: #{cnn_cifar_forward.3} parent=1 // pred_check
      _
    $region43: #{cnn_cifar_forward.3} parent=1 // pred_check_branch
      %2966 = sbr.rel (0) target = $region45
    $region44: #{cnn_cifar_forward.3} parent=1 // pred_region
      %2967 = dma.done [#allocation4], 32
    $region45: #{cnn_cifar_forward.3} parent=1 // pred_fallthru
      _
    %2968 = vsyncpa [#allocation4], 1

</llo_original>
